<compile_context>
chip_gen: v6e
topology: v6e:2x2x1
jax: 0.10.0
libtpu: 0.0.40
codegen_flags: <defaults>
</compile_context>

<pallas_src>
import jax
import jax.numpy as jnp
from jax.experimental import pallas as pl
from jax.experimental.pallas import tpu as pltpu

BN_EPS = 1e-5


def _round_up(x, m):
    return ((x + m - 1) // m) * m


def value_head_kernel(x_ref, wk_ref, w1_ref, b1_ref, w2_ref, sc_ref, o_ref):
    # x_ref : (TB, C*HW) f32/bf16 VMEM  (one batch tile, NCHW flattened per row)
    # wk_ref: (C*HW, HW) bf16 VMEM      (BN/bias-folded 1x1 conv, block-diagonal)
    # w1_ref: (HW, 32)   f32  VMEM
    # b1_ref: (1, 32)    f32  VMEM
    # w2_ref: (1, 32)    f32  VMEM      (fc2 weight as a row)
    # sc_ref: (2,)       f32  SMEM      [folded conv/BN bias, fc2 bias]
    # o_ref : (TB, 1)    f32  VMEM
    x = x_ref[...].astype(jnp.bfloat16)          # in-VMEM cast (VPU), hidden under DMA

    # 1x1 conv (128->1) + BatchNorm (folded) as a single bf16 MXU contraction
    # with f32 accumulation, then ReLU.
    v = jnp.dot(x, wk_ref[...], preferred_element_type=jnp.float32) + sc_ref[0]
    v = jnp.maximum(v, 0.0)                                   # (TB, HW) f32

    # fc1 (HW -> 32) + ReLU  (tiny f32 MXU matmul)
    h = jnp.dot(v, w1_ref[...], preferred_element_type=jnp.float32) + b1_ref[...]
    h = jnp.maximum(h, 0.0)                                   # (TB, 32)

    # fc2 (32 -> 1) + tanh: VPU multiply + lane reduce (+ EUP tanh).
    out = jnp.tanh(jnp.sum(h * w2_ref[...], axis=-1, keepdims=True) + sc_ref[1])
    o_ref[...] = out                                          # (TB, 1)


def value_head(x_nchw, params, *, block_b=256):
    """x_nchw: (B, 128, H, W) f32 (or bf16). Returns (B, 1) f32.

    block_b: batch tile.  256 fits comfortably on all generations (double-
    buffered f32 x tiles = 16 MiB); v6e (128 MiB VMEM) can raise it to 512+.
    """
    B, C, H, W = x_nchw.shape
    HW = H * W
    CHW = C * HW

    # ---- Fold BN (inference) + conv bias into the 1x1-conv weights at trace time.
    gamma, beta, mean, var = params["bn"]
    scale = gamma * jax.lax.rsqrt(var + BN_EPS)
    w_fold = params["conv_w"].reshape(C).astype(jnp.float32) * scale      # (C,)
    b_fold = (params["conv_b"][0] - mean) * scale + beta                  # scalar

    # Block-diagonal weight: Wk[c*HW + p, q] = w_fold[c] * (p == q), shipped bf16.
    wk = (w_fold[:, None, None] *
          jnp.eye(HW, dtype=jnp.float32)[None, :, :]).reshape(CHW, HW)
    wk = wk.astype(jnp.bfloat16)                                          # (CHW, HW)

    w1 = params["fc1_w"].astype(jnp.float32)                              # (HW, 32)
    b1 = params["fc1_b"].reshape(1, 32).astype(jnp.float32)
    w2_row = params["fc2_w"].reshape(1, 32).astype(jnp.float32)
    scalars = jnp.stack([b_fold, params["fc2_b"][0]]).astype(jnp.float32)  # (2,)

    # ---- Flatten NCHW -> (B, C*H*W): pure reshape, no extra HBM pass.
    #      Keep the caller's dtype (bf16 input halves the dominant DMA cost).
    x = x_nchw.reshape(B, CHW)

    # ---- Batch tiling, ragged grid (no jnp.pad / no padded HBM copy).
    if B >= block_b:
        tb = block_b
    else:
        # Small batches: split into >=2 grid steps (when B > 8) so the
        # "parallel" batch axis can span both v7x TensorCores.
        tb = _round_up(pl.cdiv(B, 2), 8)
    grid = (pl.cdiv(B, tb),)

    # VMEM budget: double-buffered x tiles dominate; bf16 Wk is ~1 MiB.
    x_tile_bytes = tb * CHW * x.dtype.itemsize
    wk_bytes = wk.size * wk.dtype.itemsize
    vmem_limit = 2 * x_tile_bytes + 2 * wk_bytes + (8 << 20)   # + margin
    vmem_limit = int(min(max(vmem_limit, 32 << 20), 100 << 20))
    # (On v7x keep block_b <= ~512: per-TC VMEM is 64 MiB.)

    out = pl.pallas_call(
        value_head_kernel,
        out_shape=jax.ShapeDtypeStruct((B, 1), jnp.float32),
        grid=grid,
        in_specs=[
            pl.BlockSpec((tb, CHW), lambda i: (i, 0)),          # x: tiled over batch
            pl.BlockSpec((CHW, HW), lambda i: (0, 0)),          # wk: grid-invariant
            pl.BlockSpec((HW, 32), lambda i: (0, 0)),           # fc1_w
            pl.BlockSpec((1, 32), lambda i: (0, 0)),            # fc1_b
            pl.BlockSpec((1, 32), lambda i: (0, 0)),            # fc2_w row
            pl.BlockSpec(memory_space=pltpu.MemorySpace.SMEM),  # scalar biases
        ],
        out_specs=pl.BlockSpec((tb, 1), lambda i: (i, 0)),
        compiler_params=pltpu.CompilerParams(
            dimension_semantics=("parallel",),                  # shard batch across TCs
            vmem_limit_bytes=vmem_limit,
        ),
    )(x, wk, w1, b1, w2_row, scalars)
    return out


def value_head_ref(x_nchw, params):
    """Pure-JAX f32 reference for correctness checking (mirrors PyTorch forward)."""
    B, C, H, W = x_nchw.shape
    x = jnp.transpose(x_nchw, (0, 2, 3, 1)).reshape(B, H * W, C)
    conv = jnp.sum(x * params["conv_w"], axis=-1) + params["conv_b"][0]
    g, b, m, var = params["bn"]
    v = (conv - m) * jax.lax.rsqrt(var + BN_EPS) * g + b
    v = jnp.maximum(v, 0.0)
    h = jnp.maximum(v @ params["fc1_w"] + params["fc1_b"], 0.0)
    return jnp.tanh(h @ params["fc2_w"] + params["fc2_b"][0])


def init_params(key, C, HW):
    k0, k1, k2, k3 = jax.random.split(key, 4)
    return {
        "conv_w": 0.05 * jax.random.normal(k0, (1, C), jnp.float32),
        "conv_b": jnp.array([0.01], jnp.float32),
        # [gamma, beta, running_mean, running_var] (inference-mode BN)
        "bn": jnp.array([1.2, 0.1, 0.05, 0.9], jnp.float32),
        "fc1_w": 0.05 * jax.random.normal(k1, (HW, 32), jnp.float32),
        "fc1_b": 0.01 * jax.random.normal(k2, (1, 32), jnp.float32),
        "fc2_w": 0.05 * jax.random.normal(k3, (32, 1), jnp.float32),
        "fc2_b": jnp.array([0.02], jnp.float32),
    }


if __name__ == "__main__":
    C, H, W = 128, 8, 8          # conv in_channels fixed at 128; board_dim = (8, 8)
    key = jax.random.PRNGKey(0)
    kx, kx2, kx3, kp = jax.random.split(key, 4)
    params = init_params(kp, C, H * W)

    # bf16 conv contraction (128 non-zero terms, f32 accumulate) => ~1e-3 abs
    # error through the head; 1e-2 tolerance is comfortable.
    TOL = dict(atol=1e-2, rtol=1e-2)

    # Small case (single ragged tile, tb=8 covering 2 rows).
    B = 2
    x = jax.random.normal(kx, (B, C, H, W), jnp.float32)
    out = jax.block_until_ready(value_head(x, params))
    ref = value_head_ref(x, params)
    assert out.shape == (B, 1)
    assert jnp.allclose(out, ref, **TOL), (out, ref)

    # Mid case: B < block_b, exercises the 2-tile small-batch split (tb=24).
    B3 = 48
    x3 = jax.random.normal(kx3, (B3, C, H, W), jnp.float32)
    out3 = jax.block_until_ready(value_head(x3, params))
    ref3 = value_head_ref(x3, params)
    assert out3.shape == (B3, 1)
    assert jnp.allclose(out3, ref3, **TOL)

    # Larger case: 2 grid steps with a ragged final block (260 = 256 + 4),
    # no padded HBM copy of x.
    B2 = 260
    x2 = jax.random.normal(kx2, (B2, C, H, W), jnp.float32)
    out2 = jax.block_until_ready(value_head(x2, params))
    ref2 = value_head_ref(x2, params)
    assert out2.shape == (B2, 1)
    assert jnp.allclose(out2, ref2, **TOL)

    print("KERNEL_OK")
</pallas_src>

<mosaic_0001>
module attributes {stable_mosaic.version = 11 : i64} {
  func.func @value_head_kernel(%arg0: i32, %arg1: memref<8x8192xf32, #tpu.memory_space<vmem>>, %arg2: memref<8192x64xbf16, #tpu.memory_space<vmem>>, %arg3: memref<64x32xf32, #tpu.memory_space<vmem>>, %arg4: memref<1x32xf32, #tpu.memory_space<vmem>>, %arg5: memref<1x32xf32, #tpu.memory_space<vmem>>, %arg6: memref<2xf32, #tpu.memory_space<smem>>, %arg7: memref<8x1xf32, #tpu.memory_space<vmem>>) attributes {dimension_semantics = [#tpu.dimension_semantics<parallel>], iteration_bounds = array<i64: 1>, scalar_prefetch = 0 : i64, scratch_operands = 0 : i64, tpu.core_type = #tpu.core_type<tc>, window_params = [{transform_indices = @transform_0, window_bounds = array<i64: 8, 8192>}, {pipeline_mode = #tpu.pipeline_mode<synchronous>, transform_indices = @transform_1, window_bounds = array<i64: 8192, 64>}, {pipeline_mode = #tpu.pipeline_mode<synchronous>, transform_indices = @transform_2, window_bounds = array<i64: 64, 32>}, {pipeline_mode = #tpu.pipeline_mode<synchronous>, transform_indices = @transform_3, window_bounds = array<i64: 1, 32>}, {pipeline_mode = #tpu.pipeline_mode<synchronous>, transform_indices = @transform_4, window_bounds = array<i64: 1, 32>}, {transform_indices = @transform_5, window_bounds = array<i64: 2>}, {transform_indices = @transform_6, window_bounds = array<i64: 8, 1>}]} {
    %c0 = arith.constant 0 : index
    %c0_0 = arith.constant 0 : index
    %0 = vector.load %arg1[%c0, %c0_0] : memref<8x8192xf32, #tpu.memory_space<vmem>>, vector<8x8192xf32>
    %1 = arith.truncf %0 : vector<8x8192xf32> to vector<8x8192xbf16>
    %c0_1 = arith.constant 0 : index
    %c0_2 = arith.constant 0 : index
    %2 = vector.load %arg2[%c0_1, %c0_2] : memref<8192x64xbf16, #tpu.memory_space<vmem>>, vector<8192x64xbf16>
    %cst = arith.constant dense<0.000000e+00> : vector<8x64xf32>
    %3 = tpu.matmul %1, %2, %cst {dimension_numbers = #tpu.dot_dimension_numbers<[1], [0], [0], [1], [0, 0, 1, 1], [], []>} : vector<8x8192xbf16>, vector<8192x64xbf16>, vector<8x64xf32> -> vector<8x64xf32>
    %c0_3 = arith.constant 0 : index
    %4 = memref.load %arg6[%c0_3] : memref<2xf32, #tpu.memory_space<smem>>
    %5 = vector.broadcast %4 : f32 to vector<8x64xf32>
    %6 = arith.addf %3, %5 : vector<8x64xf32>
    %cst_4 = arith.constant 0.000000e+00 : f32
    %7 = vector.broadcast %cst_4 : f32 to vector<8x64xf32>
    %8 = arith.maximumf %6, %7 : vector<8x64xf32>
    %c0_5 = arith.constant 0 : index
    %c0_6 = arith.constant 0 : index
    %9 = vector.load %arg3[%c0_5, %c0_6] : memref<64x32xf32, #tpu.memory_space<vmem>>, vector<64x32xf32>
    %cst_7 = arith.constant dense<0.000000e+00> : vector<8x32xf32>
    %10 = tpu.matmul %8, %9, %cst_7 {dimension_numbers = #tpu.dot_dimension_numbers<[1], [0], [0], [1], [0, 0, 1, 1], [], []>} : vector<8x64xf32>, vector<64x32xf32>, vector<8x32xf32> -> vector<8x32xf32>
    %c0_8 = arith.constant 0 : index
    %c0_9 = arith.constant 0 : index
    %11 = vector.load %arg4[%c0_8, %c0_9] : memref<1x32xf32, #tpu.memory_space<vmem>>, vector<1x32xf32>
    %12 = vector.broadcast %11 : vector<1x32xf32> to vector<8x32xf32>
    %13 = arith.addf %10, %12 : vector<8x32xf32>
    %cst_10 = arith.constant 0.000000e+00 : f32
    %14 = vector.broadcast %cst_10 : f32 to vector<8x32xf32>
    %15 = arith.maximumf %13, %14 : vector<8x32xf32>
    %c0_11 = arith.constant 0 : index
    %c0_12 = arith.constant 0 : index
    %16 = vector.load %arg5[%c0_11, %c0_12] : memref<1x32xf32, #tpu.memory_space<vmem>>, vector<1x32xf32>
    %17 = vector.broadcast %16 : vector<1x32xf32> to vector<8x32xf32>
    %18 = arith.mulf %15, %17 : vector<8x32xf32>
    %cst_13 = arith.constant dense<0.000000e+00> : vector<8xf32>
    %19 = vector.multi_reduction <add>, %18, %cst_13 [1] : vector<8x32xf32> to vector<8xf32>
    %20 = vector.shape_cast %19 : vector<8xf32> to vector<8x1xf32>
    %c1 = arith.constant 1 : index
    %21 = memref.load %arg6[%c1] : memref<2xf32, #tpu.memory_space<smem>>
    %22 = vector.broadcast %21 : f32 to vector<8x1xf32>
    %23 = arith.addf %20, %22 : vector<8x1xf32>
    %24 = math.tanh %23 : vector<8x1xf32>
    %c0_14 = arith.constant 0 : index
    %c0_15 = arith.constant 0 : index
    %25 = vector.load %arg7[%c0_14, %c0_15] : memref<8x1xf32, #tpu.memory_space<vmem>>, vector<8x1xf32>
    tpu.vector_store %arg7[%c0_14, %c0_15], %24 {strides = array<i32>} : memref<8x1xf32, #tpu.memory_space<vmem>>, vector<8x1xf32>,
    return
  }
  func.func @transform_0(%arg0: i32) -> (i32, i32) {
    %c0_i32 = arith.constant 0 : i32
    %c0_i32_0 = arith.constant 0 : i32
    return %arg0, %c0_i32 : i32, i32
  }
  func.func @transform_1(%arg0: i32) -> (i32, i32) {
    %c0_i32 = arith.constant 0 : i32
    %c0_i32_0 = arith.constant 0 : i32
    %c0_i32_1 = arith.constant 0 : i32
    return %c0_i32, %c0_i32_0 : i32, i32
  }
  func.func @transform_2(%arg0: i32) -> (i32, i32) {
    %c0_i32 = arith.constant 0 : i32
    %c0_i32_0 = arith.constant 0 : i32
    %c0_i32_1 = arith.constant 0 : i32
    return %c0_i32, %c0_i32_0 : i32, i32
  }
  func.func @transform_3(%arg0: i32) -> (i32, i32) {
    %c0_i32 = arith.constant 0 : i32
    %c0_i32_0 = arith.constant 0 : i32
    %c0_i32_1 = arith.constant 0 : i32
    return %c0_i32, %c0_i32_0 : i32, i32
  }
  func.func @transform_4(%arg0: i32) -> (i32, i32) {
    %c0_i32 = arith.constant 0 : i32
    %c0_i32_0 = arith.constant 0 : i32
    %c0_i32_1 = arith.constant 0 : i32
    return %c0_i32, %c0_i32_0 : i32, i32
  }
  func.func @transform_5(%arg0: i32) -> i32 {
    %c0_i32 = arith.constant 0 : i32
    %c0_i32_0 = arith.constant 0 : i32
    return %c0_i32 : i32
  }
  func.func @transform_6(%arg0: i32) -> (i32, i32) {
    %c0_i32 = arith.constant 0 : i32
    %c0_i32_0 = arith.constant 0 : i32
    return %arg0, %c0_i32 : i32, i32
  }
}

</mosaic_0001>

<llo_original>
// kernel: tpu_custom_call.1
$region0: #{tpu_custom_call.1}
  #allocation0 [shape = 'u32[]', space=smem, size = 0x4, offset = 0x4, fixed_abs, tag = 'smem constant byte address 0x4 - core index']
  #allocation1 [shape = 'u32[144,128]{1,0:T(1,128)}', space=vmem, size = 0x12000, scoped, tag = 'internal scratch']
  %s0 = inlined_call_operand.vmem [shape: f32[2,8192], index: 0, kind: input, shape index: {}]
  %s1 = inlined_call_operand.vmem [shape: bf16[8192,64], index: 1, kind: input, shape index: {}]
  %s2 = inlined_call_operand.vmem [shape: f32[64,32], index: 2, kind: input, shape index: {}]
  %s3 = inlined_call_operand.vmem [shape: f32[1,32], index: 3, kind: input, shape index: {}]
  %s4 = inlined_call_operand.vmem [shape: f32[1,32], index: 4, kind: input, shape index: {}]
  %s5 = inlined_call_operand.vmem [shape: f32[2], index: 5, kind: input, shape index: {}]
  %s6 = inlined_call_operand.vmem [shape: f32[2,1], index: 6, kind: output, shape index: {}]
  %s7 = sld [smem:[#allocation0]]
  $region68: #{tpu_custom_call.1} parent=0
    _
  %s9 = ssub.s32 1, %s7
  %s10 = scalar_select 0, %s9, %s7
  $region1: #{tpu_custom_call.1} parent=0
    #allocation2 [shape = 'u8[512]{0}', space=smem, size = 0x200, scoped, tag = 'input window, operand 5, single buffered']
    #allocation3 [shape = 's32[1]{0}', space=sflag, size = 0x4, scoped, tag = 'scoped memory for tpu_custom_call.1']
    #allocation4 [shape = 'u8[4096]{0}', space=vmem, size = 0x1000, scoped, tag = 'output window, operand 0, single buffered']
    %11 = vsyncpa [#allocation3], 0
    // Predicated region
    $region2: #{tpu_custom_call.1} parent=1 // pred_check
      _
    $region3: #{tpu_custom_call.1} parent=1 // pred_check_branch
      %13 = sbr.rel (0) target = $region5
    $region4: #{tpu_custom_call.1} parent=1 // pred_region
      _
    $region5: #{tpu_custom_call.1} parent=1 // pred_fallthru
      _
    // Predicated region
    $region6: #{tpu_custom_call.1} parent=1 // pred_check
      _
    $region7: #{tpu_custom_call.1} parent=1 // pred_check_branch
      %15 = sbr.rel (0) target = $region9
    $region8: #{tpu_custom_call.1} parent=1 // pred_region
      _
    $region9: #{tpu_custom_call.1} parent=1 // pred_fallthru
      _
    // Predicated region
    $region10: #{tpu_custom_call.1} parent=1 // pred_check
      _
    $region11: #{tpu_custom_call.1} parent=1 // pred_check_branch
      %17 = sbr.rel (0) target = $region13
    $region12: #{tpu_custom_call.1} parent=1 // pred_region
      _
    $region13: #{tpu_custom_call.1} parent=1 // pred_fallthru
      _
    // Predicated region
    $region14: #{tpu_custom_call.1} parent=1 // pred_check
      _
    $region15: #{tpu_custom_call.1} parent=1 // pred_check_branch
      %19 = sbr.rel (0) target = $region17
    $region16: #{tpu_custom_call.1} parent=1 // pred_region
      _
    $region17: #{tpu_custom_call.1} parent=1 // pred_fallthru
      _
    // Predicated region
    $region18: #{tpu_custom_call.1} parent=1 // pred_check
      _
    $region19: #{tpu_custom_call.1} parent=1 // pred_check_branch
      %21 = sbr.rel (0) target = $region21
    $region20: #{tpu_custom_call.1} parent=1 // pred_region
      _
    $region21: #{tpu_custom_call.1} parent=1 // pred_fallthru
      _
    // Predicated region
    $region22: #{tpu_custom_call.1} parent=1 // pred_check
      _
    $region23: #{tpu_custom_call.1} parent=1 // pred_check_branch
      %23 = sbr.rel (0) target = $region25
    $region24: #{tpu_custom_call.1} parent=1 // pred_region
      %s25 = ssub.s32 16, 16
      %26 = vsyncadd [#allocation3], %s25
      %s28 = sshll.u32 %s5, 4
      %s29 = int_to_ptr.vmem [resolvable:$true] %s28
      %31 = dma.vmem_to_smem %s29, 16, [#allocation2], [#allocation3]
    $region25: #{tpu_custom_call.1} parent=1 // pred_fallthru
      _
    // Predicated region
    $region26: #{tpu_custom_call.1} parent=1 // pred_check
      _
    $region27: #{tpu_custom_call.1} parent=1 // pred_check_branch
      %33 = sbr.rel (0) target = $region29
    $region28: #{tpu_custom_call.1} parent=1 // pred_region
      %34 = dma.done [#allocation3], 16
    $region29: #{tpu_custom_call.1} parent=1 // pred_fallthru
      _
    %35 = sfence
    %v37 = vld [vmem:[%s0] sm:$0xff]
    %v38 = vld [vmem:[%s0 + $0x8] sm:$0xff]
    %v39 = vld [vmem:[%s0 + $0x10] sm:$0xff]
    %v40 = vld [vmem:[%s0 + $0x18] sm:$0xff]
    %v41 = vld [vmem:[%s0 + $0x20] sm:$0xff]
    %v42 = vld [vmem:[%s0 + $0x28] sm:$0xff]
    %v43 = vld [vmem:[%s0 + $0x30] sm:$0xff]
    %v44 = vld [vmem:[%s0 + $0x38] sm:$0xff]
    %v45 = vld [vmem:[%s0 + $0x40] sm:$0xff]
    %v46 = vld [vmem:[%s0 + $0x48] sm:$0xff]
    %v47 = vld [vmem:[%s0 + $0x50] sm:$0xff]
    %v48 = vld [vmem:[%s0 + $0x58] sm:$0xff]
    %v49 = vld [vmem:[%s0 + $0x60] sm:$0xff]
    %v50 = vld [vmem:[%s0 + $0x68] sm:$0xff]
    %v51 = vld [vmem:[%s0 + $0x70] sm:$0xff]
    %v52 = vld [vmem:[%s0 + $0x78] sm:$0xff]
    %v53 = vld [vmem:[%s0 + $0x80] sm:$0xff]
    %v54 = vld [vmem:[%s0 + $0x88] sm:$0xff]
    %v55 = vld [vmem:[%s0 + $0x90] sm:$0xff]
    %v56 = vld [vmem:[%s0 + $0x98] sm:$0xff]
    %v57 = vld [vmem:[%s0 + $0xa0] sm:$0xff]
    %v58 = vld [vmem:[%s0 + $0xa8] sm:$0xff]
    %v59 = vld [vmem:[%s0 + $0xb0] sm:$0xff]
    %v60 = vld [vmem:[%s0 + $0xb8] sm:$0xff]
    %v61 = vld [vmem:[%s0 + $0xc0] sm:$0xff]
    %v62 = vld [vmem:[%s0 + $0xc8] sm:$0xff]
    %v63 = vld [vmem:[%s0 + $0xd0] sm:$0xff]
    %v64 = vld [vmem:[%s0 + $0xd8] sm:$0xff]
    %v65 = vld [vmem:[%s0 + $0xe0] sm:$0xff]
    %v66 = vld [vmem:[%s0 + $0xe8] sm:$0xff]
    %v67 = vld [vmem:[%s0 + $0xf0] sm:$0xff]
    %v68 = vld [vmem:[%s0 + $0xf8] sm:$0xff]
    %v69 = vld [vmem:[%s0 + $0x100] sm:$0xff]
    %v70 = vld [vmem:[%s0 + $0x108] sm:$0xff]
    %v71 = vld [vmem:[%s0 + $0x110] sm:$0xff]
    %v72 = vld [vmem:[%s0 + $0x118] sm:$0xff]
    %v73 = vld [vmem:[%s0 + $0x120] sm:$0xff]
    %v74 = vld [vmem:[%s0 + $0x128] sm:$0xff]
    %v75 = vld [vmem:[%s0 + $0x130] sm:$0xff]
    %v76 = vld [vmem:[%s0 + $0x138] sm:$0xff]
    %v77 = vld [vmem:[%s0 + $0x140] sm:$0xff]
    %v78 = vld [vmem:[%s0 + $0x148] sm:$0xff]
    %v79 = vld [vmem:[%s0 + $0x150] sm:$0xff]
    %v80 = vld [vmem:[%s0 + $0x158] sm:$0xff]
    %v81 = vld [vmem:[%s0 + $0x160] sm:$0xff]
    %v82 = vld [vmem:[%s0 + $0x168] sm:$0xff]
    %v83 = vld [vmem:[%s0 + $0x170] sm:$0xff]
    %v84 = vld [vmem:[%s0 + $0x178] sm:$0xff]
    %v85 = vld [vmem:[%s0 + $0x180] sm:$0xff]
    %v86 = vld [vmem:[%s0 + $0x188] sm:$0xff]
    %v87 = vld [vmem:[%s0 + $0x190] sm:$0xff]
    %v88 = vld [vmem:[%s0 + $0x198] sm:$0xff]
    %v89 = vld [vmem:[%s0 + $0x1a0] sm:$0xff]
    %v90 = vld [vmem:[%s0 + $0x1a8] sm:$0xff]
    %v91 = vld [vmem:[%s0 + $0x1b0] sm:$0xff]
    %v92 = vld [vmem:[%s0 + $0x1b8] sm:$0xff]
    %v93 = vld [vmem:[%s0 + $0x1c0] sm:$0xff]
    %v94 = vld [vmem:[%s0 + $0x1c8] sm:$0xff]
    %v95 = vld [vmem:[%s0 + $0x1d0] sm:$0xff]
    %v96 = vld [vmem:[%s0 + $0x1d8] sm:$0xff]
    %v97 = vld [vmem:[%s0 + $0x1e0] sm:$0xff]
    %v98 = vld [vmem:[%s0 + $0x1e8] sm:$0xff]
    %v99 = vld [vmem:[%s0 + $0x1f0] sm:$0xff]
    %v100 = vld [vmem:[%s0 + $0x1f8] sm:$0xff]
    %v165 = vcombine.low %v37, %v53
    %v166 = vcombine.high %v37, %v53
    %v167 = vcombine.low %v69, %v85
    %v168 = vcombine.high %v69, %v85
    %v170 = vunpack.c.l.s4 1983009808
    %v171 = vunpack.c.0.s8 %v170
    %v172 = vlaneseq
    %v173 = vshrl.u32 %v172, 7
    %v174 = vsub.s32 %v171, %v173
    %v175 = vrot.slane %v165, %v174
    %v177 = vunpack.c.l.s4 1983009808
    %v178 = vunpack.c.0.s8 %v177
    %v179 = vlaneseq
    %v180 = vshrl.u32 %v179, 7
    %v181 = vsub.s32 %v178, %v180
    %v182 = vrot.slane %v166, %v181
    %v184 = vunpack.c.l.s4 1983009808
    %v185 = vunpack.c.0.s8 %v184
    %v186 = vlaneseq
    %v187 = vshrl.u32 %v186, 7
    %v188 = vsub.s32 %v185, %v187
    %v189 = vrot.slane %v167, %v188
    %v191 = vunpack.c.l.s4 1983009808
    %v192 = vunpack.c.0.s8 %v191
    %v193 = vlaneseq
    %v194 = vshrl.u32 %v193, 7
    %v195 = vsub.s32 %v192, %v194
    %v196 = vrot.slane %v168, %v195
    %v197 = vcombine.low %v175, %v189
    %v198 = vcombine.high %v175, %v189
    %v199 = vcombine.low %v182, %v196
    %v200 = vcombine.high %v182, %v196
    %v201 = vcombine.low %v38, %v54
    %v202 = vcombine.high %v38, %v54
    %v203 = vcombine.low %v70, %v86
    %v204 = vcombine.high %v70, %v86
    %v206 = vunpack.c.l.s4 1983009808
    %v207 = vunpack.c.0.s8 %v206
    %v208 = vlaneseq
    %v209 = vshrl.u32 %v208, 7
    %v210 = vsub.s32 %v207, %v209
    %v211 = vrot.slane %v201, %v210
    %v213 = vunpack.c.l.s4 1983009808
    %v214 = vunpack.c.0.s8 %v213
    %v215 = vlaneseq
    %v216 = vshrl.u32 %v215, 7
    %v217 = vsub.s32 %v214, %v216
    %v218 = vrot.slane %v202, %v217
    %v220 = vunpack.c.l.s4 1983009808
    %v221 = vunpack.c.0.s8 %v220
    %v222 = vlaneseq
    %v223 = vshrl.u32 %v222, 7
    %v224 = vsub.s32 %v221, %v223
    %v225 = vrot.slane %v203, %v224
    %v227 = vunpack.c.l.s4 1983009808
    %v228 = vunpack.c.0.s8 %v227
    %v229 = vlaneseq
    %v230 = vshrl.u32 %v229, 7
    %v231 = vsub.s32 %v228, %v230
    %v232 = vrot.slane %v204, %v231
    %v233 = vcombine.low %v211, %v225
    %v234 = vcombine.high %v211, %v225
    %v235 = vcombine.low %v218, %v232
    %v236 = vcombine.high %v218, %v232
    %v237 = vcombine.low %v39, %v55
    %v238 = vcombine.high %v39, %v55
    %v239 = vcombine.low %v71, %v87
    %v240 = vcombine.high %v71, %v87
    %v242 = vunpack.c.l.s4 1983009808
    %v243 = vunpack.c.0.s8 %v242
    %v244 = vlaneseq
    %v245 = vshrl.u32 %v244, 7
    %v246 = vsub.s32 %v243, %v245
    %v247 = vrot.slane %v237, %v246
    %v249 = vunpack.c.l.s4 1983009808
    %v250 = vunpack.c.0.s8 %v249
    %v251 = vlaneseq
    %v252 = vshrl.u32 %v251, 7
    %v253 = vsub.s32 %v250, %v252
    %v254 = vrot.slane %v238, %v253
    %v256 = vunpack.c.l.s4 1983009808
    %v257 = vunpack.c.0.s8 %v256
    %v258 = vlaneseq
    %v259 = vshrl.u32 %v258, 7
    %v260 = vsub.s32 %v257, %v259
    %v261 = vrot.slane %v239, %v260
    %v263 = vunpack.c.l.s4 1983009808
    %v264 = vunpack.c.0.s8 %v263
    %v265 = vlaneseq
    %v266 = vshrl.u32 %v265, 7
    %v267 = vsub.s32 %v264, %v266
    %v268 = vrot.slane %v240, %v267
    %v269 = vcombine.low %v247, %v261
    %v270 = vcombine.high %v247, %v261
    %v271 = vcombine.low %v254, %v268
    %v272 = vcombine.high %v254, %v268
    %v273 = vcombine.low %v40, %v56
    %v274 = vcombine.high %v40, %v56
    %v275 = vcombine.low %v72, %v88
    %v276 = vcombine.high %v72, %v88
    %v278 = vunpack.c.l.s4 1983009808
    %v279 = vunpack.c.0.s8 %v278
    %v280 = vlaneseq
    %v281 = vshrl.u32 %v280, 7
    %v282 = vsub.s32 %v279, %v281
    %v283 = vrot.slane %v273, %v282
    %v285 = vunpack.c.l.s4 1983009808
    %v286 = vunpack.c.0.s8 %v285
    %v287 = vlaneseq
    %v288 = vshrl.u32 %v287, 7
    %v289 = vsub.s32 %v286, %v288
    %v290 = vrot.slane %v274, %v289
    %v292 = vunpack.c.l.s4 1983009808
    %v293 = vunpack.c.0.s8 %v292
    %v294 = vlaneseq
    %v295 = vshrl.u32 %v294, 7
    %v296 = vsub.s32 %v293, %v295
    %v297 = vrot.slane %v275, %v296
    %v299 = vunpack.c.l.s4 1983009808
    %v300 = vunpack.c.0.s8 %v299
    %v301 = vlaneseq
    %v302 = vshrl.u32 %v301, 7
    %v303 = vsub.s32 %v300, %v302
    %v304 = vrot.slane %v276, %v303
    %v305 = vcombine.low %v283, %v297
    %v306 = vcombine.high %v283, %v297
    %v307 = vcombine.low %v290, %v304
    %v308 = vcombine.high %v290, %v304
    %v309 = vcombine.low %v41, %v57
    %v310 = vcombine.high %v41, %v57
    %v311 = vcombine.low %v73, %v89
    %v312 = vcombine.high %v73, %v89
    %v314 = vunpack.c.l.s4 1983009808
    %v315 = vunpack.c.0.s8 %v314
    %v316 = vlaneseq
    %v317 = vshrl.u32 %v316, 7
    %v318 = vsub.s32 %v315, %v317
    %v319 = vrot.slane %v309, %v318
    %v321 = vunpack.c.l.s4 1983009808
    %v322 = vunpack.c.0.s8 %v321
    %v323 = vlaneseq
    %v324 = vshrl.u32 %v323, 7
    %v325 = vsub.s32 %v322, %v324
    %v326 = vrot.slane %v310, %v325
    %v328 = vunpack.c.l.s4 1983009808
    %v329 = vunpack.c.0.s8 %v328
    %v330 = vlaneseq
    %v331 = vshrl.u32 %v330, 7
    %v332 = vsub.s32 %v329, %v331
    %v333 = vrot.slane %v311, %v332
    %v335 = vunpack.c.l.s4 1983009808
    %v336 = vunpack.c.0.s8 %v335
    %v337 = vlaneseq
    %v338 = vshrl.u32 %v337, 7
    %v339 = vsub.s32 %v336, %v338
    %v340 = vrot.slane %v312, %v339
    %v341 = vcombine.low %v319, %v333
    %v342 = vcombine.high %v319, %v333
    %v343 = vcombine.low %v326, %v340
    %v344 = vcombine.high %v326, %v340
    %v345 = vcombine.low %v42, %v58
    %v346 = vcombine.high %v42, %v58
    %v347 = vcombine.low %v74, %v90
    %v348 = vcombine.high %v74, %v90
    %v350 = vunpack.c.l.s4 1983009808
    %v351 = vunpack.c.0.s8 %v350
    %v352 = vlaneseq
    %v353 = vshrl.u32 %v352, 7
    %v354 = vsub.s32 %v351, %v353
    %v355 = vrot.slane %v345, %v354
    %v357 = vunpack.c.l.s4 1983009808
    %v358 = vunpack.c.0.s8 %v357
    %v359 = vlaneseq
    %v360 = vshrl.u32 %v359, 7
    %v361 = vsub.s32 %v358, %v360
    %v362 = vrot.slane %v346, %v361
    %v364 = vunpack.c.l.s4 1983009808
    %v365 = vunpack.c.0.s8 %v364
    %v366 = vlaneseq
    %v367 = vshrl.u32 %v366, 7
    %v368 = vsub.s32 %v365, %v367
    %v369 = vrot.slane %v347, %v368
    %v371 = vunpack.c.l.s4 1983009808
    %v372 = vunpack.c.0.s8 %v371
    %v373 = vlaneseq
    %v374 = vshrl.u32 %v373, 7
    %v375 = vsub.s32 %v372, %v374
    %v376 = vrot.slane %v348, %v375
    %v377 = vcombine.low %v355, %v369
    %v378 = vcombine.high %v355, %v369
    %v379 = vcombine.low %v362, %v376
    %v380 = vcombine.high %v362, %v376
    %v381 = vcombine.low %v43, %v59
    %v382 = vcombine.high %v43, %v59
    %v383 = vcombine.low %v75, %v91
    %v384 = vcombine.high %v75, %v91
    %v386 = vunpack.c.l.s4 1983009808
    %v387 = vunpack.c.0.s8 %v386
    %v388 = vlaneseq
    %v389 = vshrl.u32 %v388, 7
    %v390 = vsub.s32 %v387, %v389
    %v391 = vrot.slane %v381, %v390
    %v393 = vunpack.c.l.s4 1983009808
    %v394 = vunpack.c.0.s8 %v393
    %v395 = vlaneseq
    %v396 = vshrl.u32 %v395, 7
    %v397 = vsub.s32 %v394, %v396
    %v398 = vrot.slane %v382, %v397
    %v400 = vunpack.c.l.s4 1983009808
    %v401 = vunpack.c.0.s8 %v400
    %v402 = vlaneseq
    %v403 = vshrl.u32 %v402, 7
    %v404 = vsub.s32 %v401, %v403
    %v405 = vrot.slane %v383, %v404
    %v407 = vunpack.c.l.s4 1983009808
    %v408 = vunpack.c.0.s8 %v407
    %v409 = vlaneseq
    %v410 = vshrl.u32 %v409, 7
    %v411 = vsub.s32 %v408, %v410
    %v412 = vrot.slane %v384, %v411
    %v413 = vcombine.low %v391, %v405
    %v414 = vcombine.high %v391, %v405
    %v415 = vcombine.low %v398, %v412
    %v416 = vcombine.high %v398, %v412
    %v417 = vcombine.low %v44, %v60
    %v418 = vcombine.high %v44, %v60
    %v419 = vcombine.low %v76, %v92
    %v420 = vcombine.high %v76, %v92
    %v422 = vunpack.c.l.s4 1983009808
    %v423 = vunpack.c.0.s8 %v422
    %v424 = vlaneseq
    %v425 = vshrl.u32 %v424, 7
    %v426 = vsub.s32 %v423, %v425
    %v427 = vrot.slane %v417, %v426
    %v429 = vunpack.c.l.s4 1983009808
    %v430 = vunpack.c.0.s8 %v429
    %v431 = vlaneseq
    %v432 = vshrl.u32 %v431, 7
    %v433 = vsub.s32 %v430, %v432
    %v434 = vrot.slane %v418, %v433
    %v436 = vunpack.c.l.s4 1983009808
    %v437 = vunpack.c.0.s8 %v436
    %v438 = vlaneseq
    %v439 = vshrl.u32 %v438, 7
    %v440 = vsub.s32 %v437, %v439
    %v441 = vrot.slane %v419, %v440
    %v443 = vunpack.c.l.s4 1983009808
    %v444 = vunpack.c.0.s8 %v443
    %v445 = vlaneseq
    %v446 = vshrl.u32 %v445, 7
    %v447 = vsub.s32 %v444, %v446
    %v448 = vrot.slane %v420, %v447
    %v449 = vcombine.low %v427, %v441
    %v450 = vcombine.high %v427, %v441
    %v451 = vcombine.low %v434, %v448
    %v452 = vcombine.high %v434, %v448
    %v453 = vcombine.low %v45, %v61
    %v454 = vcombine.high %v45, %v61
    %v455 = vcombine.low %v77, %v93
    %v456 = vcombine.high %v77, %v93
    %v458 = vunpack.c.l.s4 1983009808
    %v459 = vunpack.c.0.s8 %v458
    %v460 = vlaneseq
    %v461 = vshrl.u32 %v460, 7
    %v462 = vsub.s32 %v459, %v461
    %v463 = vrot.slane %v453, %v462
    %v465 = vunpack.c.l.s4 1983009808
    %v466 = vunpack.c.0.s8 %v465
    %v467 = vlaneseq
    %v468 = vshrl.u32 %v467, 7
    %v469 = vsub.s32 %v466, %v468
    %v470 = vrot.slane %v454, %v469
    %v472 = vunpack.c.l.s4 1983009808
    %v473 = vunpack.c.0.s8 %v472
    %v474 = vlaneseq
    %v475 = vshrl.u32 %v474, 7
    %v476 = vsub.s32 %v473, %v475
    %v477 = vrot.slane %v455, %v476
    %v479 = vunpack.c.l.s4 1983009808
    %v480 = vunpack.c.0.s8 %v479
    %v481 = vlaneseq
    %v482 = vshrl.u32 %v481, 7
    %v483 = vsub.s32 %v480, %v482
    %v484 = vrot.slane %v456, %v483
    %v485 = vcombine.low %v463, %v477
    %v486 = vcombine.high %v463, %v477
    %v487 = vcombine.low %v470, %v484
    %v488 = vcombine.high %v470, %v484
    %v489 = vcombine.low %v46, %v62
    %v490 = vcombine.high %v46, %v62
    %v491 = vcombine.low %v78, %v94
    %v492 = vcombine.high %v78, %v94
    %v494 = vunpack.c.l.s4 1983009808
    %v495 = vunpack.c.0.s8 %v494
    %v496 = vlaneseq
    %v497 = vshrl.u32 %v496, 7
    %v498 = vsub.s32 %v495, %v497
    %v499 = vrot.slane %v489, %v498
    %v501 = vunpack.c.l.s4 1983009808
    %v502 = vunpack.c.0.s8 %v501
    %v503 = vlaneseq
    %v504 = vshrl.u32 %v503, 7
    %v505 = vsub.s32 %v502, %v504
    %v506 = vrot.slane %v490, %v505
    %v508 = vunpack.c.l.s4 1983009808
    %v509 = vunpack.c.0.s8 %v508
    %v510 = vlaneseq
    %v511 = vshrl.u32 %v510, 7
    %v512 = vsub.s32 %v509, %v511
    %v513 = vrot.slane %v491, %v512
    %v515 = vunpack.c.l.s4 1983009808
    %v516 = vunpack.c.0.s8 %v515
    %v517 = vlaneseq
    %v518 = vshrl.u32 %v517, 7
    %v519 = vsub.s32 %v516, %v518
    %v520 = vrot.slane %v492, %v519
    %v521 = vcombine.low %v499, %v513
    %v522 = vcombine.high %v499, %v513
    %v523 = vcombine.low %v506, %v520
    %v524 = vcombine.high %v506, %v520
    %v525 = vcombine.low %v47, %v63
    %v526 = vcombine.high %v47, %v63
    %v527 = vcombine.low %v79, %v95
    %v528 = vcombine.high %v79, %v95
    %v530 = vunpack.c.l.s4 1983009808
    %v531 = vunpack.c.0.s8 %v530
    %v532 = vlaneseq
    %v533 = vshrl.u32 %v532, 7
    %v534 = vsub.s32 %v531, %v533
    %v535 = vrot.slane %v525, %v534
    %v537 = vunpack.c.l.s4 1983009808
    %v538 = vunpack.c.0.s8 %v537
    %v539 = vlaneseq
    %v540 = vshrl.u32 %v539, 7
    %v541 = vsub.s32 %v538, %v540
    %v542 = vrot.slane %v526, %v541
    %v544 = vunpack.c.l.s4 1983009808
    %v545 = vunpack.c.0.s8 %v544
    %v546 = vlaneseq
    %v547 = vshrl.u32 %v546, 7
    %v548 = vsub.s32 %v545, %v547
    %v549 = vrot.slane %v527, %v548
    %v551 = vunpack.c.l.s4 1983009808
    %v552 = vunpack.c.0.s8 %v551
    %v553 = vlaneseq
    %v554 = vshrl.u32 %v553, 7
    %v555 = vsub.s32 %v552, %v554
    %v556 = vrot.slane %v528, %v555
    %v557 = vcombine.low %v535, %v549
    %v558 = vcombine.high %v535, %v549
    %v559 = vcombine.low %v542, %v556
    %v560 = vcombine.high %v542, %v556
    %v561 = vcombine.low %v48, %v64
    %v562 = vcombine.high %v48, %v64
    %v563 = vcombine.low %v80, %v96
    %v564 = vcombine.high %v80, %v96
    %v566 = vunpack.c.l.s4 1983009808
    %v567 = vunpack.c.0.s8 %v566
    %v568 = vlaneseq
    %v569 = vshrl.u32 %v568, 7
    %v570 = vsub.s32 %v567, %v569
    %v571 = vrot.slane %v561, %v570
    %v573 = vunpack.c.l.s4 1983009808
    %v574 = vunpack.c.0.s8 %v573
    %v575 = vlaneseq
    %v576 = vshrl.u32 %v575, 7
    %v577 = vsub.s32 %v574, %v576
    %v578 = vrot.slane %v562, %v577
    %v580 = vunpack.c.l.s4 1983009808
    %v581 = vunpack.c.0.s8 %v580
    %v582 = vlaneseq
    %v583 = vshrl.u32 %v582, 7
    %v584 = vsub.s32 %v581, %v583
    %v585 = vrot.slane %v563, %v584
    %v587 = vunpack.c.l.s4 1983009808
    %v588 = vunpack.c.0.s8 %v587
    %v589 = vlaneseq
    %v590 = vshrl.u32 %v589, 7
    %v591 = vsub.s32 %v588, %v590
    %v592 = vrot.slane %v564, %v591
    %v593 = vcombine.low %v571, %v585
    %v594 = vcombine.high %v571, %v585
    %v595 = vcombine.low %v578, %v592
    %v596 = vcombine.high %v578, %v592
    %v597 = vcombine.low %v49, %v65
    %v598 = vcombine.high %v49, %v65
    %v599 = vcombine.low %v81, %v97
    %v600 = vcombine.high %v81, %v97
    %v602 = vunpack.c.l.s4 1983009808
    %v603 = vunpack.c.0.s8 %v602
    %v604 = vlaneseq
    %v605 = vshrl.u32 %v604, 7
    %v606 = vsub.s32 %v603, %v605
    %v607 = vrot.slane %v597, %v606
    %v609 = vunpack.c.l.s4 1983009808
    %v610 = vunpack.c.0.s8 %v609
    %v611 = vlaneseq
    %v612 = vshrl.u32 %v611, 7
    %v613 = vsub.s32 %v610, %v612
    %v614 = vrot.slane %v598, %v613
    %v616 = vunpack.c.l.s4 1983009808
    %v617 = vunpack.c.0.s8 %v616
    %v618 = vlaneseq
    %v619 = vshrl.u32 %v618, 7
    %v620 = vsub.s32 %v617, %v619
    %v621 = vrot.slane %v599, %v620
    %v623 = vunpack.c.l.s4 1983009808
    %v624 = vunpack.c.0.s8 %v623
    %v625 = vlaneseq
    %v626 = vshrl.u32 %v625, 7
    %v627 = vsub.s32 %v624, %v626
    %v628 = vrot.slane %v600, %v627
    %v629 = vcombine.low %v607, %v621
    %v630 = vcombine.high %v607, %v621
    %v631 = vcombine.low %v614, %v628
    %v632 = vcombine.high %v614, %v628
    %v633 = vcombine.low %v50, %v66
    %v634 = vcombine.high %v50, %v66
    %v635 = vcombine.low %v82, %v98
    %v636 = vcombine.high %v82, %v98
    %v638 = vunpack.c.l.s4 1983009808
    %v639 = vunpack.c.0.s8 %v638
    %v640 = vlaneseq
    %v641 = vshrl.u32 %v640, 7
    %v642 = vsub.s32 %v639, %v641
    %v643 = vrot.slane %v633, %v642
    %v645 = vunpack.c.l.s4 1983009808
    %v646 = vunpack.c.0.s8 %v645
    %v647 = vlaneseq
    %v648 = vshrl.u32 %v647, 7
    %v649 = vsub.s32 %v646, %v648
    %v650 = vrot.slane %v634, %v649
    %v652 = vunpack.c.l.s4 1983009808
    %v653 = vunpack.c.0.s8 %v652
    %v654 = vlaneseq
    %v655 = vshrl.u32 %v654, 7
    %v656 = vsub.s32 %v653, %v655
    %v657 = vrot.slane %v635, %v656
    %v659 = vunpack.c.l.s4 1983009808
    %v660 = vunpack.c.0.s8 %v659
    %v661 = vlaneseq
    %v662 = vshrl.u32 %v661, 7
    %v663 = vsub.s32 %v660, %v662
    %v664 = vrot.slane %v636, %v663
    %v665 = vcombine.low %v643, %v657
    %v666 = vcombine.high %v643, %v657
    %v667 = vcombine.low %v650, %v664
    %v668 = vcombine.high %v650, %v664
    %v669 = vcombine.low %v51, %v67
    %v670 = vcombine.high %v51, %v67
    %v671 = vcombine.low %v83, %v99
    %v672 = vcombine.high %v83, %v99
    %v674 = vunpack.c.l.s4 1983009808
    %v675 = vunpack.c.0.s8 %v674
    %v676 = vlaneseq
    %v677 = vshrl.u32 %v676, 7
    %v678 = vsub.s32 %v675, %v677
    %v679 = vrot.slane %v669, %v678
    %v681 = vunpack.c.l.s4 1983009808
    %v682 = vunpack.c.0.s8 %v681
    %v683 = vlaneseq
    %v684 = vshrl.u32 %v683, 7
    %v685 = vsub.s32 %v682, %v684
    %v686 = vrot.slane %v670, %v685
    %v688 = vunpack.c.l.s4 1983009808
    %v689 = vunpack.c.0.s8 %v688
    %v690 = vlaneseq
    %v691 = vshrl.u32 %v690, 7
    %v692 = vsub.s32 %v689, %v691
    %v693 = vrot.slane %v671, %v692
    %v695 = vunpack.c.l.s4 1983009808
    %v696 = vunpack.c.0.s8 %v695
    %v697 = vlaneseq
    %v698 = vshrl.u32 %v697, 7
    %v699 = vsub.s32 %v696, %v698
    %v700 = vrot.slane %v672, %v699
    %v701 = vcombine.low %v679, %v693
    %v702 = vcombine.high %v679, %v693
    %v703 = vcombine.low %v686, %v700
    %v704 = vcombine.high %v686, %v700
    %v705 = vcombine.low %v52, %v68
    %v706 = vcombine.high %v52, %v68
    %v707 = vcombine.low %v84, %v100
    %v708 = vcombine.high %v84, %v100
    %v710 = vunpack.c.l.s4 1983009808
    %v711 = vunpack.c.0.s8 %v710
    %v712 = vlaneseq
    %v713 = vshrl.u32 %v712, 7
    %v714 = vsub.s32 %v711, %v713
    %v715 = vrot.slane %v705, %v714
    %v717 = vunpack.c.l.s4 1983009808
    %v718 = vunpack.c.0.s8 %v717
    %v719 = vlaneseq
    %v720 = vshrl.u32 %v719, 7
    %v721 = vsub.s32 %v718, %v720
    %v722 = vrot.slane %v706, %v721
    %v724 = vunpack.c.l.s4 1983009808
    %v725 = vunpack.c.0.s8 %v724
    %v726 = vlaneseq
    %v727 = vshrl.u32 %v726, 7
    %v728 = vsub.s32 %v725, %v727
    %v729 = vrot.slane %v707, %v728
    %v731 = vunpack.c.l.s4 1983009808
    %v732 = vunpack.c.0.s8 %v731
    %v733 = vlaneseq
    %v734 = vshrl.u32 %v733, 7
    %v735 = vsub.s32 %v732, %v734
    %v736 = vrot.slane %v708, %v735
    %v737 = vcombine.low %v715, %v729
    %v738 = vcombine.high %v715, %v729
    %v739 = vcombine.low %v722, %v736
    %v740 = vcombine.high %v722, %v736
    %v805 = vpack.c.bf16 %v197, %v197
    %v806 = vpack.c.bf16 %v198, %v198
    %v807 = vpack.c.bf16 %v199, %v199
    %v808 = vpack.c.bf16 %v200, %v200
    %v809 = vpack.c.bf16 %v233, %v233
    %v810 = vpack.c.bf16 %v234, %v234
    %v811 = vpack.c.bf16 %v235, %v235
    %v812 = vpack.c.bf16 %v236, %v236
    %v813 = vpack.c.bf16 %v269, %v269
    %v814 = vpack.c.bf16 %v270, %v270
    %v815 = vpack.c.bf16 %v271, %v271
    %v816 = vpack.c.bf16 %v272, %v272
    %v817 = vpack.c.bf16 %v305, %v305
    %v818 = vpack.c.bf16 %v306, %v306
    %v819 = vpack.c.bf16 %v307, %v307
    %v820 = vpack.c.bf16 %v308, %v308
    %v821 = vpack.c.bf16 %v341, %v341
    %v822 = vpack.c.bf16 %v342, %v342
    %v823 = vpack.c.bf16 %v343, %v343
    %v824 = vpack.c.bf16 %v344, %v344
    %v825 = vpack.c.bf16 %v377, %v377
    %v826 = vpack.c.bf16 %v378, %v378
    %v827 = vpack.c.bf16 %v379, %v379
    %v828 = vpack.c.bf16 %v380, %v380
    %v829 = vpack.c.bf16 %v413, %v413
    %v830 = vpack.c.bf16 %v414, %v414
    %v831 = vpack.c.bf16 %v415, %v415
    %v832 = vpack.c.bf16 %v416, %v416
    %v833 = vpack.c.bf16 %v449, %v449
    %v834 = vpack.c.bf16 %v450, %v450
    %v835 = vpack.c.bf16 %v451, %v451
    %v836 = vpack.c.bf16 %v452, %v452
    %v837 = vpack.c.bf16 %v485, %v485
    %v838 = vpack.c.bf16 %v486, %v486
    %v839 = vpack.c.bf16 %v487, %v487
    %v840 = vpack.c.bf16 %v488, %v488
    %v841 = vpack.c.bf16 %v521, %v521
    %v842 = vpack.c.bf16 %v522, %v522
    %v843 = vpack.c.bf16 %v523, %v523
    %v844 = vpack.c.bf16 %v524, %v524
    %v845 = vpack.c.bf16 %v557, %v557
    %v846 = vpack.c.bf16 %v558, %v558
    %v847 = vpack.c.bf16 %v559, %v559
    %v848 = vpack.c.bf16 %v560, %v560
    %v849 = vpack.c.bf16 %v593, %v593
    %v850 = vpack.c.bf16 %v594, %v594
    %v851 = vpack.c.bf16 %v595, %v595
    %v852 = vpack.c.bf16 %v596, %v596
    %v853 = vpack.c.bf16 %v629, %v629
    %v854 = vpack.c.bf16 %v630, %v630
    %v855 = vpack.c.bf16 %v631, %v631
    %v856 = vpack.c.bf16 %v632, %v632
    %v857 = vpack.c.bf16 %v665, %v665
    %v858 = vpack.c.bf16 %v666, %v666
    %v859 = vpack.c.bf16 %v667, %v667
    %v860 = vpack.c.bf16 %v668, %v668
    %v861 = vpack.c.bf16 %v701, %v701
    %v862 = vpack.c.bf16 %v702, %v702
    %v863 = vpack.c.bf16 %v703, %v703
    %v864 = vpack.c.bf16 %v704, %v704
    %v865 = vpack.c.bf16 %v737, %v737
    %v866 = vpack.c.bf16 %v738, %v738
    %v867 = vpack.c.bf16 %v739, %v739
    %v868 = vpack.c.bf16 %v740, %v740
    %v869 = vld [vmem:[%s1] sm:$0xf]
    %v870 = vld [vmem:[%s1 + $0x4] sm:$0xf]
    %v871 = vld [vmem:[%s1 + $0x8] sm:$0xf]
    %v872 = vld [vmem:[%s1 + $0xc] sm:$0xf]
    %v873 = vld [vmem:[%s1 + $0x10] sm:$0xf]
    %v874 = vld [vmem:[%s1 + $0x14] sm:$0xf]
    %v875 = vld [vmem:[%s1 + $0x18] sm:$0xf]
    %v876 = vld [vmem:[%s1 + $0x1c] sm:$0xf]
    %v877 = vld [vmem:[%s1 + $0x20] sm:$0xf]
    %v878 = vld [vmem:[%s1 + $0x24] sm:$0xf]
    %v879 = vld [vmem:[%s1 + $0x28] sm:$0xf]
    %v880 = vld [vmem:[%s1 + $0x2c] sm:$0xf]
    %v881 = vld [vmem:[%s1 + $0x30] sm:$0xf]
    %v882 = vld [vmem:[%s1 + $0x34] sm:$0xf]
    %v883 = vld [vmem:[%s1 + $0x38] sm:$0xf]
    %v884 = vld [vmem:[%s1 + $0x3c] sm:$0xf]
    %v885 = vld [vmem:[%s1 + $0x40] sm:$0xf]
    %v886 = vld [vmem:[%s1 + $0x44] sm:$0xf]
    %v887 = vld [vmem:[%s1 + $0x48] sm:$0xf]
    %v888 = vld [vmem:[%s1 + $0x4c] sm:$0xf]
    %v889 = vld [vmem:[%s1 + $0x50] sm:$0xf]
    %v890 = vld [vmem:[%s1 + $0x54] sm:$0xf]
    %v891 = vld [vmem:[%s1 + $0x58] sm:$0xf]
    %v892 = vld [vmem:[%s1 + $0x5c] sm:$0xf]
    %v893 = vld [vmem:[%s1 + $0x60] sm:$0xf]
    %v894 = vld [vmem:[%s1 + $0x64] sm:$0xf]
    %v895 = vld [vmem:[%s1 + $0x68] sm:$0xf]
    %v896 = vld [vmem:[%s1 + $0x6c] sm:$0xf]
    %v897 = vld [vmem:[%s1 + $0x70] sm:$0xf]
    %v898 = vld [vmem:[%s1 + $0x74] sm:$0xf]
    %v899 = vld [vmem:[%s1 + $0x78] sm:$0xf]
    %v900 = vld [vmem:[%s1 + $0x7c] sm:$0xf]
    %v901 = vld [vmem:[%s1 + $0x80] sm:$0xf]
    %v902 = vld [vmem:[%s1 + $0x84] sm:$0xf]
    %v903 = vld [vmem:[%s1 + $0x88] sm:$0xf]
    %v904 = vld [vmem:[%s1 + $0x8c] sm:$0xf]
    %v905 = vld [vmem:[%s1 + $0x90] sm:$0xf]
    %v906 = vld [vmem:[%s1 + $0x94] sm:$0xf]
    %v907 = vld [vmem:[%s1 + $0x98] sm:$0xf]
    %v908 = vld [vmem:[%s1 + $0x9c] sm:$0xf]
    %v909 = vld [vmem:[%s1 + $0xa0] sm:$0xf]
    %v910 = vld [vmem:[%s1 + $0xa4] sm:$0xf]
    %v911 = vld [vmem:[%s1 + $0xa8] sm:$0xf]
    %v912 = vld [vmem:[%s1 + $0xac] sm:$0xf]
    %v913 = vld [vmem:[%s1 + $0xb0] sm:$0xf]
    %v914 = vld [vmem:[%s1 + $0xb4] sm:$0xf]
    %v915 = vld [vmem:[%s1 + $0xb8] sm:$0xf]
    %v916 = vld [vmem:[%s1 + $0xbc] sm:$0xf]
    %v917 = vld [vmem:[%s1 + $0xc0] sm:$0xf]
    %v918 = vld [vmem:[%s1 + $0xc4] sm:$0xf]
    %v919 = vld [vmem:[%s1 + $0xc8] sm:$0xf]
    %v920 = vld [vmem:[%s1 + $0xcc] sm:$0xf]
    %v921 = vld [vmem:[%s1 + $0xd0] sm:$0xf]
    %v922 = vld [vmem:[%s1 + $0xd4] sm:$0xf]
    %v923 = vld [vmem:[%s1 + $0xd8] sm:$0xf]
    %v924 = vld [vmem:[%s1 + $0xdc] sm:$0xf]
    %v925 = vld [vmem:[%s1 + $0xe0] sm:$0xf]
    %v926 = vld [vmem:[%s1 + $0xe4] sm:$0xf]
    %v927 = vld [vmem:[%s1 + $0xe8] sm:$0xf]
    %v928 = vld [vmem:[%s1 + $0xec] sm:$0xf]
    %v929 = vld [vmem:[%s1 + $0xf0] sm:$0xf]
    %v930 = vld [vmem:[%s1 + $0xf4] sm:$0xf]
    %v931 = vld [vmem:[%s1 + $0xf8] sm:$0xf]
    %v932 = vld [vmem:[%s1 + $0xfc] sm:$0xf]
    %v933 = vld [vmem:[%s1 + $0x100] sm:$0xf]
    %v934 = vld [vmem:[%s1 + $0x104] sm:$0xf]
    %v935 = vld [vmem:[%s1 + $0x108] sm:$0xf]
    %v936 = vld [vmem:[%s1 + $0x10c] sm:$0xf]
    %v937 = vld [vmem:[%s1 + $0x110] sm:$0xf]
    %v938 = vld [vmem:[%s1 + $0x114] sm:$0xf]
    %v939 = vld [vmem:[%s1 + $0x118] sm:$0xf]
    %v940 = vld [vmem:[%s1 + $0x11c] sm:$0xf]
    %v941 = vld [vmem:[%s1 + $0x120] sm:$0xf]
    %v942 = vld [vmem:[%s1 + $0x124] sm:$0xf]
    %v943 = vld [vmem:[%s1 + $0x128] sm:$0xf]
    %v944 = vld [vmem:[%s1 + $0x12c] sm:$0xf]
    %v945 = vld [vmem:[%s1 + $0x130] sm:$0xf]
    %v946 = vld [vmem:[%s1 + $0x134] sm:$0xf]
    %v947 = vld [vmem:[%s1 + $0x138] sm:$0xf]
    %v948 = vld [vmem:[%s1 + $0x13c] sm:$0xf]
    %v949 = vld [vmem:[%s1 + $0x140] sm:$0xf]
    %v950 = vld [vmem:[%s1 + $0x144] sm:$0xf]
    %v951 = vld [vmem:[%s1 + $0x148] sm:$0xf]
    %v952 = vld [vmem:[%s1 + $0x14c] sm:$0xf]
    %v953 = vld [vmem:[%s1 + $0x150] sm:$0xf]
    %v954 = vld [vmem:[%s1 + $0x154] sm:$0xf]
    %v955 = vld [vmem:[%s1 + $0x158] sm:$0xf]
    %v956 = vld [vmem:[%s1 + $0x15c] sm:$0xf]
    %v957 = vld [vmem:[%s1 + $0x160] sm:$0xf]
    %v958 = vld [vmem:[%s1 + $0x164] sm:$0xf]
    %v959 = vld [vmem:[%s1 + $0x168] sm:$0xf]
    %v960 = vld [vmem:[%s1 + $0x16c] sm:$0xf]
    %v961 = vld [vmem:[%s1 + $0x170] sm:$0xf]
    %v962 = vld [vmem:[%s1 + $0x174] sm:$0xf]
    %v963 = vld [vmem:[%s1 + $0x178] sm:$0xf]
    %v964 = vld [vmem:[%s1 + $0x17c] sm:$0xf]
    %v965 = vld [vmem:[%s1 + $0x180] sm:$0xf]
    %v966 = vld [vmem:[%s1 + $0x184] sm:$0xf]
    %v967 = vld [vmem:[%s1 + $0x188] sm:$0xf]
    %v968 = vld [vmem:[%s1 + $0x18c] sm:$0xf]
    %v969 = vld [vmem:[%s1 + $0x190] sm:$0xf]
    %v970 = vld [vmem:[%s1 + $0x194] sm:$0xf]
    %v971 = vld [vmem:[%s1 + $0x198] sm:$0xf]
    %v972 = vld [vmem:[%s1 + $0x19c] sm:$0xf]
    %v973 = vld [vmem:[%s1 + $0x1a0] sm:$0xf]
    %v974 = vld [vmem:[%s1 + $0x1a4] sm:$0xf]
    %v975 = vld [vmem:[%s1 + $0x1a8] sm:$0xf]
    %v976 = vld [vmem:[%s1 + $0x1ac] sm:$0xf]
    %v977 = vld [vmem:[%s1 + $0x1b0] sm:$0xf]
    %v978 = vld [vmem:[%s1 + $0x1b4] sm:$0xf]
    %v979 = vld [vmem:[%s1 + $0x1b8] sm:$0xf]
    %v980 = vld [vmem:[%s1 + $0x1bc] sm:$0xf]
    %v981 = vld [vmem:[%s1 + $0x1c0] sm:$0xf]
    %v982 = vld [vmem:[%s1 + $0x1c4] sm:$0xf]
    %v983 = vld [vmem:[%s1 + $0x1c8] sm:$0xf]
    %v984 = vld [vmem:[%s1 + $0x1cc] sm:$0xf]
    %v985 = vld [vmem:[%s1 + $0x1d0] sm:$0xf]
    %v986 = vld [vmem:[%s1 + $0x1d4] sm:$0xf]
    %v987 = vld [vmem:[%s1 + $0x1d8] sm:$0xf]
    %v988 = vld [vmem:[%s1 + $0x1dc] sm:$0xf]
    %v989 = vld [vmem:[%s1 + $0x1e0] sm:$0xf]
    %v990 = vld [vmem:[%s1 + $0x1e4] sm:$0xf]
    %v991 = vld [vmem:[%s1 + $0x1e8] sm:$0xf]
    %v992 = vld [vmem:[%s1 + $0x1ec] sm:$0xf]
    %v993 = vld [vmem:[%s1 + $0x1f0] sm:$0xf]
    %v994 = vld [vmem:[%s1 + $0x1f4] sm:$0xf]
    %v995 = vld [vmem:[%s1 + $0x1f8] sm:$0xf]
    %v996 = vld [vmem:[%s1 + $0x1fc] sm:$0xf]
    %v997 = vld [vmem:[%s1 + $0x200] sm:$0xf]
    %v998 = vld [vmem:[%s1 + $0x204] sm:$0xf]
    %v999 = vld [vmem:[%s1 + $0x208] sm:$0xf]
    %v1000 = vld [vmem:[%s1 + $0x20c] sm:$0xf]
    %v1001 = vld [vmem:[%s1 + $0x210] sm:$0xf]
    %v1002 = vld [vmem:[%s1 + $0x214] sm:$0xf]
    %v1003 = vld [vmem:[%s1 + $0x218] sm:$0xf]
    %v1004 = vld [vmem:[%s1 + $0x21c] sm:$0xf]
    %v1005 = vld [vmem:[%s1 + $0x220] sm:$0xf]
    %v1006 = vld [vmem:[%s1 + $0x224] sm:$0xf]
    %v1007 = vld [vmem:[%s1 + $0x228] sm:$0xf]
    %v1008 = vld [vmem:[%s1 + $0x22c] sm:$0xf]
    %v1009 = vld [vmem:[%s1 + $0x230] sm:$0xf]
    %v1010 = vld [vmem:[%s1 + $0x234] sm:$0xf]
    %v1011 = vld [vmem:[%s1 + $0x238] sm:$0xf]
    %v1012 = vld [vmem:[%s1 + $0x23c] sm:$0xf]
    %v1013 = vld [vmem:[%s1 + $0x240] sm:$0xf]
    %v1014 = vld [vmem:[%s1 + $0x244] sm:$0xf]
    %v1015 = vld [vmem:[%s1 + $0x248] sm:$0xf]
    %v1016 = vld [vmem:[%s1 + $0x24c] sm:$0xf]
    %v1017 = vld [vmem:[%s1 + $0x250] sm:$0xf]
    %v1018 = vld [vmem:[%s1 + $0x254] sm:$0xf]
    %v1019 = vld [vmem:[%s1 + $0x258] sm:$0xf]
    %v1020 = vld [vmem:[%s1 + $0x25c] sm:$0xf]
    %v1021 = vld [vmem:[%s1 + $0x260] sm:$0xf]
    %v1022 = vld [vmem:[%s1 + $0x264] sm:$0xf]
    %v1023 = vld [vmem:[%s1 + $0x268] sm:$0xf]
    %v1024 = vld [vmem:[%s1 + $0x26c] sm:$0xf]
    %v1025 = vld [vmem:[%s1 + $0x270] sm:$0xf]
    %v1026 = vld [vmem:[%s1 + $0x274] sm:$0xf]
    %v1027 = vld [vmem:[%s1 + $0x278] sm:$0xf]
    %v1028 = vld [vmem:[%s1 + $0x27c] sm:$0xf]
    %v1029 = vld [vmem:[%s1 + $0x280] sm:$0xf]
    %v1030 = vld [vmem:[%s1 + $0x284] sm:$0xf]
    %v1031 = vld [vmem:[%s1 + $0x288] sm:$0xf]
    %v1032 = vld [vmem:[%s1 + $0x28c] sm:$0xf]
    %v1033 = vld [vmem:[%s1 + $0x290] sm:$0xf]
    %v1034 = vld [vmem:[%s1 + $0x294] sm:$0xf]
    %v1035 = vld [vmem:[%s1 + $0x298] sm:$0xf]
    %v1036 = vld [vmem:[%s1 + $0x29c] sm:$0xf]
    %v1037 = vld [vmem:[%s1 + $0x2a0] sm:$0xf]
    %v1038 = vld [vmem:[%s1 + $0x2a4] sm:$0xf]
    %v1039 = vld [vmem:[%s1 + $0x2a8] sm:$0xf]
    %v1040 = vld [vmem:[%s1 + $0x2ac] sm:$0xf]
    %v1041 = vld [vmem:[%s1 + $0x2b0] sm:$0xf]
    %v1042 = vld [vmem:[%s1 + $0x2b4] sm:$0xf]
    %v1043 = vld [vmem:[%s1 + $0x2b8] sm:$0xf]
    %v1044 = vld [vmem:[%s1 + $0x2bc] sm:$0xf]
    %v1045 = vld [vmem:[%s1 + $0x2c0] sm:$0xf]
    %v1046 = vld [vmem:[%s1 + $0x2c4] sm:$0xf]
    %v1047 = vld [vmem:[%s1 + $0x2c8] sm:$0xf]
    %v1048 = vld [vmem:[%s1 + $0x2cc] sm:$0xf]
    %v1049 = vld [vmem:[%s1 + $0x2d0] sm:$0xf]
    %v1050 = vld [vmem:[%s1 + $0x2d4] sm:$0xf]
    %v1051 = vld [vmem:[%s1 + $0x2d8] sm:$0xf]
    %v1052 = vld [vmem:[%s1 + $0x2dc] sm:$0xf]
    %v1053 = vld [vmem:[%s1 + $0x2e0] sm:$0xf]
    %v1054 = vld [vmem:[%s1 + $0x2e4] sm:$0xf]
    %v1055 = vld [vmem:[%s1 + $0x2e8] sm:$0xf]
    %v1056 = vld [vmem:[%s1 + $0x2ec] sm:$0xf]
    %v1057 = vld [vmem:[%s1 + $0x2f0] sm:$0xf]
    %v1058 = vld [vmem:[%s1 + $0x2f4] sm:$0xf]
    %v1059 = vld [vmem:[%s1 + $0x2f8] sm:$0xf]
    %v1060 = vld [vmem:[%s1 + $0x2fc] sm:$0xf]
    %v1061 = vld [vmem:[%s1 + $0x300] sm:$0xf]
    %v1062 = vld [vmem:[%s1 + $0x304] sm:$0xf]
    %v1063 = vld [vmem:[%s1 + $0x308] sm:$0xf]
    %v1064 = vld [vmem:[%s1 + $0x30c] sm:$0xf]
    %v1065 = vld [vmem:[%s1 + $0x310] sm:$0xf]
    %v1066 = vld [vmem:[%s1 + $0x314] sm:$0xf]
    %v1067 = vld [vmem:[%s1 + $0x318] sm:$0xf]
    %v1068 = vld [vmem:[%s1 + $0x31c] sm:$0xf]
    %v1069 = vld [vmem:[%s1 + $0x320] sm:$0xf]
    %v1070 = vld [vmem:[%s1 + $0x324] sm:$0xf]
    %v1071 = vld [vmem:[%s1 + $0x328] sm:$0xf]
    %v1072 = vld [vmem:[%s1 + $0x32c] sm:$0xf]
    %v1073 = vld [vmem:[%s1 + $0x330] sm:$0xf]
    %v1074 = vld [vmem:[%s1 + $0x334] sm:$0xf]
    %v1075 = vld [vmem:[%s1 + $0x338] sm:$0xf]
    %v1076 = vld [vmem:[%s1 + $0x33c] sm:$0xf]
    %v1077 = vld [vmem:[%s1 + $0x340] sm:$0xf]
    %v1078 = vld [vmem:[%s1 + $0x344] sm:$0xf]
    %v1079 = vld [vmem:[%s1 + $0x348] sm:$0xf]
    %v1080 = vld [vmem:[%s1 + $0x34c] sm:$0xf]
    %v1081 = vld [vmem:[%s1 + $0x350] sm:$0xf]
    %v1082 = vld [vmem:[%s1 + $0x354] sm:$0xf]
    %v1083 = vld [vmem:[%s1 + $0x358] sm:$0xf]
    %v1084 = vld [vmem:[%s1 + $0x35c] sm:$0xf]
    %v1085 = vld [vmem:[%s1 + $0x360] sm:$0xf]
    %v1086 = vld [vmem:[%s1 + $0x364] sm:$0xf]
    %v1087 = vld [vmem:[%s1 + $0x368] sm:$0xf]
    %v1088 = vld [vmem:[%s1 + $0x36c] sm:$0xf]
    %v1089 = vld [vmem:[%s1 + $0x370] sm:$0xf]
    %v1090 = vld [vmem:[%s1 + $0x374] sm:$0xf]
    %v1091 = vld [vmem:[%s1 + $0x378] sm:$0xf]
    %v1092 = vld [vmem:[%s1 + $0x37c] sm:$0xf]
    %v1093 = vld [vmem:[%s1 + $0x380] sm:$0xf]
    %v1094 = vld [vmem:[%s1 + $0x384] sm:$0xf]
    %v1095 = vld [vmem:[%s1 + $0x388] sm:$0xf]
    %v1096 = vld [vmem:[%s1 + $0x38c] sm:$0xf]
    %v1097 = vld [vmem:[%s1 + $0x390] sm:$0xf]
    %v1098 = vld [vmem:[%s1 + $0x394] sm:$0xf]
    %v1099 = vld [vmem:[%s1 + $0x398] sm:$0xf]
    %v1100 = vld [vmem:[%s1 + $0x39c] sm:$0xf]
    %v1101 = vld [vmem:[%s1 + $0x3a0] sm:$0xf]
    %v1102 = vld [vmem:[%s1 + $0x3a4] sm:$0xf]
    %v1103 = vld [vmem:[%s1 + $0x3a8] sm:$0xf]
    %v1104 = vld [vmem:[%s1 + $0x3ac] sm:$0xf]
    %v1105 = vld [vmem:[%s1 + $0x3b0] sm:$0xf]
    %v1106 = vld [vmem:[%s1 + $0x3b4] sm:$0xf]
    %v1107 = vld [vmem:[%s1 + $0x3b8] sm:$0xf]
    %v1108 = vld [vmem:[%s1 + $0x3bc] sm:$0xf]
    %v1109 = vld [vmem:[%s1 + $0x3c0] sm:$0xf]
    %v1110 = vld [vmem:[%s1 + $0x3c4] sm:$0xf]
    %v1111 = vld [vmem:[%s1 + $0x3c8] sm:$0xf]
    %v1112 = vld [vmem:[%s1 + $0x3cc] sm:$0xf]
    %v1113 = vld [vmem:[%s1 + $0x3d0] sm:$0xf]
    %v1114 = vld [vmem:[%s1 + $0x3d4] sm:$0xf]
    %v1115 = vld [vmem:[%s1 + $0x3d8] sm:$0xf]
    %v1116 = vld [vmem:[%s1 + $0x3dc] sm:$0xf]
    %v1117 = vld [vmem:[%s1 + $0x3e0] sm:$0xf]
    %v1118 = vld [vmem:[%s1 + $0x3e4] sm:$0xf]
    %v1119 = vld [vmem:[%s1 + $0x3e8] sm:$0xf]
    %v1120 = vld [vmem:[%s1 + $0x3ec] sm:$0xf]
    %v1121 = vld [vmem:[%s1 + $0x3f0] sm:$0xf]
    %v1122 = vld [vmem:[%s1 + $0x3f4] sm:$0xf]
    %v1123 = vld [vmem:[%s1 + $0x3f8] sm:$0xf]
    %v1124 = vld [vmem:[%s1 + $0x3fc] sm:$0xf]
    %v1125 = vld [vmem:[%s1 + $0x400] sm:$0xf]
    %v1126 = vld [vmem:[%s1 + $0x404] sm:$0xf]
    %v1127 = vld [vmem:[%s1 + $0x408] sm:$0xf]
    %v1128 = vld [vmem:[%s1 + $0x40c] sm:$0xf]
    %v1129 = vld [vmem:[%s1 + $0x410] sm:$0xf]
    %v1130 = vld [vmem:[%s1 + $0x414] sm:$0xf]
    %v1131 = vld [vmem:[%s1 + $0x418] sm:$0xf]
    %v1132 = vld [vmem:[%s1 + $0x41c] sm:$0xf]
    %v1133 = vld [vmem:[%s1 + $0x420] sm:$0xf]
    %v1134 = vld [vmem:[%s1 + $0x424] sm:$0xf]
    %v1135 = vld [vmem:[%s1 + $0x428] sm:$0xf]
    %v1136 = vld [vmem:[%s1 + $0x42c] sm:$0xf]
    %v1137 = vld [vmem:[%s1 + $0x430] sm:$0xf]
    %v1138 = vld [vmem:[%s1 + $0x434] sm:$0xf]
    %v1139 = vld [vmem:[%s1 + $0x438] sm:$0xf]
    %v1140 = vld [vmem:[%s1 + $0x43c] sm:$0xf]
    %v1141 = vld [vmem:[%s1 + $0x440] sm:$0xf]
    %v1142 = vld [vmem:[%s1 + $0x444] sm:$0xf]
    %v1143 = vld [vmem:[%s1 + $0x448] sm:$0xf]
    %v1144 = vld [vmem:[%s1 + $0x44c] sm:$0xf]
    %v1145 = vld [vmem:[%s1 + $0x450] sm:$0xf]
    %v1146 = vld [vmem:[%s1 + $0x454] sm:$0xf]
    %v1147 = vld [vmem:[%s1 + $0x458] sm:$0xf]
    %v1148 = vld [vmem:[%s1 + $0x45c] sm:$0xf]
    %v1149 = vld [vmem:[%s1 + $0x460] sm:$0xf]
    %v1150 = vld [vmem:[%s1 + $0x464] sm:$0xf]
    %v1151 = vld [vmem:[%s1 + $0x468] sm:$0xf]
    %v1152 = vld [vmem:[%s1 + $0x46c] sm:$0xf]
    %v1153 = vld [vmem:[%s1 + $0x470] sm:$0xf]
    %v1154 = vld [vmem:[%s1 + $0x474] sm:$0xf]
    %v1155 = vld [vmem:[%s1 + $0x478] sm:$0xf]
    %v1156 = vld [vmem:[%s1 + $0x47c] sm:$0xf]
    %v1157 = vld [vmem:[%s1 + $0x480] sm:$0xf]
    %v1158 = vld [vmem:[%s1 + $0x484] sm:$0xf]
    %v1159 = vld [vmem:[%s1 + $0x488] sm:$0xf]
    %v1160 = vld [vmem:[%s1 + $0x48c] sm:$0xf]
    %v1161 = vld [vmem:[%s1 + $0x490] sm:$0xf]
    %v1162 = vld [vmem:[%s1 + $0x494] sm:$0xf]
    %v1163 = vld [vmem:[%s1 + $0x498] sm:$0xf]
    %v1164 = vld [vmem:[%s1 + $0x49c] sm:$0xf]
    %v1165 = vld [vmem:[%s1 + $0x4a0] sm:$0xf]
    %v1166 = vld [vmem:[%s1 + $0x4a4] sm:$0xf]
    %v1167 = vld [vmem:[%s1 + $0x4a8] sm:$0xf]
    %v1168 = vld [vmem:[%s1 + $0x4ac] sm:$0xf]
    %v1169 = vld [vmem:[%s1 + $0x4b0] sm:$0xf]
    %v1170 = vld [vmem:[%s1 + $0x4b4] sm:$0xf]
    %v1171 = vld [vmem:[%s1 + $0x4b8] sm:$0xf]
    %v1172 = vld [vmem:[%s1 + $0x4bc] sm:$0xf]
    %v1173 = vld [vmem:[%s1 + $0x4c0] sm:$0xf]
    %v1174 = vld [vmem:[%s1 + $0x4c4] sm:$0xf]
    %v1175 = vld [vmem:[%s1 + $0x4c8] sm:$0xf]
    %v1176 = vld [vmem:[%s1 + $0x4cc] sm:$0xf]
    %v1177 = vld [vmem:[%s1 + $0x4d0] sm:$0xf]
    %v1178 = vld [vmem:[%s1 + $0x4d4] sm:$0xf]
    %v1179 = vld [vmem:[%s1 + $0x4d8] sm:$0xf]
    %v1180 = vld [vmem:[%s1 + $0x4dc] sm:$0xf]
    %v1181 = vld [vmem:[%s1 + $0x4e0] sm:$0xf]
    %v1182 = vld [vmem:[%s1 + $0x4e4] sm:$0xf]
    %v1183 = vld [vmem:[%s1 + $0x4e8] sm:$0xf]
    %v1184 = vld [vmem:[%s1 + $0x4ec] sm:$0xf]
    %v1185 = vld [vmem:[%s1 + $0x4f0] sm:$0xf]
    %v1186 = vld [vmem:[%s1 + $0x4f4] sm:$0xf]
    %v1187 = vld [vmem:[%s1 + $0x4f8] sm:$0xf]
    %v1188 = vld [vmem:[%s1 + $0x4fc] sm:$0xf]
    %v1189 = vld [vmem:[%s1 + $0x500] sm:$0xf]
    %v1190 = vld [vmem:[%s1 + $0x504] sm:$0xf]
    %v1191 = vld [vmem:[%s1 + $0x508] sm:$0xf]
    %v1192 = vld [vmem:[%s1 + $0x50c] sm:$0xf]
    %v1193 = vld [vmem:[%s1 + $0x510] sm:$0xf]
    %v1194 = vld [vmem:[%s1 + $0x514] sm:$0xf]
    %v1195 = vld [vmem:[%s1 + $0x518] sm:$0xf]
    %v1196 = vld [vmem:[%s1 + $0x51c] sm:$0xf]
    %v1197 = vld [vmem:[%s1 + $0x520] sm:$0xf]
    %v1198 = vld [vmem:[%s1 + $0x524] sm:$0xf]
    %v1199 = vld [vmem:[%s1 + $0x528] sm:$0xf]
    %v1200 = vld [vmem:[%s1 + $0x52c] sm:$0xf]
    %v1201 = vld [vmem:[%s1 + $0x530] sm:$0xf]
    %v1202 = vld [vmem:[%s1 + $0x534] sm:$0xf]
    %v1203 = vld [vmem:[%s1 + $0x538] sm:$0xf]
    %v1204 = vld [vmem:[%s1 + $0x53c] sm:$0xf]
    %v1205 = vld [vmem:[%s1 + $0x540] sm:$0xf]
    %v1206 = vld [vmem:[%s1 + $0x544] sm:$0xf]
    %v1207 = vld [vmem:[%s1 + $0x548] sm:$0xf]
    %v1208 = vld [vmem:[%s1 + $0x54c] sm:$0xf]
    %v1209 = vld [vmem:[%s1 + $0x550] sm:$0xf]
    %v1210 = vld [vmem:[%s1 + $0x554] sm:$0xf]
    %v1211 = vld [vmem:[%s1 + $0x558] sm:$0xf]
    %v1212 = vld [vmem:[%s1 + $0x55c] sm:$0xf]
    %v1213 = vld [vmem:[%s1 + $0x560] sm:$0xf]
    %v1214 = vld [vmem:[%s1 + $0x564] sm:$0xf]
    %v1215 = vld [vmem:[%s1 + $0x568] sm:$0xf]
    %v1216 = vld [vmem:[%s1 + $0x56c] sm:$0xf]
    %v1217 = vld [vmem:[%s1 + $0x570] sm:$0xf]
    %v1218 = vld [vmem:[%s1 + $0x574] sm:$0xf]
    %v1219 = vld [vmem:[%s1 + $0x578] sm:$0xf]
    %v1220 = vld [vmem:[%s1 + $0x57c] sm:$0xf]
    %v1221 = vld [vmem:[%s1 + $0x580] sm:$0xf]
    %v1222 = vld [vmem:[%s1 + $0x584] sm:$0xf]
    %v1223 = vld [vmem:[%s1 + $0x588] sm:$0xf]
    %v1224 = vld [vmem:[%s1 + $0x58c] sm:$0xf]
    %v1225 = vld [vmem:[%s1 + $0x590] sm:$0xf]
    %v1226 = vld [vmem:[%s1 + $0x594] sm:$0xf]
    %v1227 = vld [vmem:[%s1 + $0x598] sm:$0xf]
    %v1228 = vld [vmem:[%s1 + $0x59c] sm:$0xf]
    %v1229 = vld [vmem:[%s1 + $0x5a0] sm:$0xf]
    %v1230 = vld [vmem:[%s1 + $0x5a4] sm:$0xf]
    %v1231 = vld [vmem:[%s1 + $0x5a8] sm:$0xf]
    %v1232 = vld [vmem:[%s1 + $0x5ac] sm:$0xf]
    %v1233 = vld [vmem:[%s1 + $0x5b0] sm:$0xf]
    %v1234 = vld [vmem:[%s1 + $0x5b4] sm:$0xf]
    %v1235 = vld [vmem:[%s1 + $0x5b8] sm:$0xf]
    %v1236 = vld [vmem:[%s1 + $0x5bc] sm:$0xf]
    %v1237 = vld [vmem:[%s1 + $0x5c0] sm:$0xf]
    %v1238 = vld [vmem:[%s1 + $0x5c4] sm:$0xf]
    %v1239 = vld [vmem:[%s1 + $0x5c8] sm:$0xf]
    %v1240 = vld [vmem:[%s1 + $0x5cc] sm:$0xf]
    %v1241 = vld [vmem:[%s1 + $0x5d0] sm:$0xf]
    %v1242 = vld [vmem:[%s1 + $0x5d4] sm:$0xf]
    %v1243 = vld [vmem:[%s1 + $0x5d8] sm:$0xf]
    %v1244 = vld [vmem:[%s1 + $0x5dc] sm:$0xf]
    %v1245 = vld [vmem:[%s1 + $0x5e0] sm:$0xf]
    %v1246 = vld [vmem:[%s1 + $0x5e4] sm:$0xf]
    %v1247 = vld [vmem:[%s1 + $0x5e8] sm:$0xf]
    %v1248 = vld [vmem:[%s1 + $0x5ec] sm:$0xf]
    %v1249 = vld [vmem:[%s1 + $0x5f0] sm:$0xf]
    %v1250 = vld [vmem:[%s1 + $0x5f4] sm:$0xf]
    %v1251 = vld [vmem:[%s1 + $0x5f8] sm:$0xf]
    %v1252 = vld [vmem:[%s1 + $0x5fc] sm:$0xf]
    %v1253 = vld [vmem:[%s1 + $0x600] sm:$0xf]
    %v1254 = vld [vmem:[%s1 + $0x604] sm:$0xf]
    %v1255 = vld [vmem:[%s1 + $0x608] sm:$0xf]
    %v1256 = vld [vmem:[%s1 + $0x60c] sm:$0xf]
    %v1257 = vld [vmem:[%s1 + $0x610] sm:$0xf]
    %v1258 = vld [vmem:[%s1 + $0x614] sm:$0xf]
    %v1259 = vld [vmem:[%s1 + $0x618] sm:$0xf]
    %v1260 = vld [vmem:[%s1 + $0x61c] sm:$0xf]
    %v1261 = vld [vmem:[%s1 + $0x620] sm:$0xf]
    %v1262 = vld [vmem:[%s1 + $0x624] sm:$0xf]
    %v1263 = vld [vmem:[%s1 + $0x628] sm:$0xf]
    %v1264 = vld [vmem:[%s1 + $0x62c] sm:$0xf]
    %v1265 = vld [vmem:[%s1 + $0x630] sm:$0xf]
    %v1266 = vld [vmem:[%s1 + $0x634] sm:$0xf]
    %v1267 = vld [vmem:[%s1 + $0x638] sm:$0xf]
    %v1268 = vld [vmem:[%s1 + $0x63c] sm:$0xf]
    %v1269 = vld [vmem:[%s1 + $0x640] sm:$0xf]
    %v1270 = vld [vmem:[%s1 + $0x644] sm:$0xf]
    %v1271 = vld [vmem:[%s1 + $0x648] sm:$0xf]
    %v1272 = vld [vmem:[%s1 + $0x64c] sm:$0xf]
    %v1273 = vld [vmem:[%s1 + $0x650] sm:$0xf]
    %v1274 = vld [vmem:[%s1 + $0x654] sm:$0xf]
    %v1275 = vld [vmem:[%s1 + $0x658] sm:$0xf]
    %v1276 = vld [vmem:[%s1 + $0x65c] sm:$0xf]
    %v1277 = vld [vmem:[%s1 + $0x660] sm:$0xf]
    %v1278 = vld [vmem:[%s1 + $0x664] sm:$0xf]
    %v1279 = vld [vmem:[%s1 + $0x668] sm:$0xf]
    %v1280 = vld [vmem:[%s1 + $0x66c] sm:$0xf]
    %v1281 = vld [vmem:[%s1 + $0x670] sm:$0xf]
    %v1282 = vld [vmem:[%s1 + $0x674] sm:$0xf]
    %v1283 = vld [vmem:[%s1 + $0x678] sm:$0xf]
    %v1284 = vld [vmem:[%s1 + $0x67c] sm:$0xf]
    %v1285 = vld [vmem:[%s1 + $0x680] sm:$0xf]
    %v1286 = vld [vmem:[%s1 + $0x684] sm:$0xf]
    %v1287 = vld [vmem:[%s1 + $0x688] sm:$0xf]
    %v1288 = vld [vmem:[%s1 + $0x68c] sm:$0xf]
    %v1289 = vld [vmem:[%s1 + $0x690] sm:$0xf]
    %v1290 = vld [vmem:[%s1 + $0x694] sm:$0xf]
    %v1291 = vld [vmem:[%s1 + $0x698] sm:$0xf]
    %v1292 = vld [vmem:[%s1 + $0x69c] sm:$0xf]
    %v1293 = vld [vmem:[%s1 + $0x6a0] sm:$0xf]
    %v1294 = vld [vmem:[%s1 + $0x6a4] sm:$0xf]
    %v1295 = vld [vmem:[%s1 + $0x6a8] sm:$0xf]
    %v1296 = vld [vmem:[%s1 + $0x6ac] sm:$0xf]
    %v1297 = vld [vmem:[%s1 + $0x6b0] sm:$0xf]
    %v1298 = vld [vmem:[%s1 + $0x6b4] sm:$0xf]
    %v1299 = vld [vmem:[%s1 + $0x6b8] sm:$0xf]
    %v1300 = vld [vmem:[%s1 + $0x6bc] sm:$0xf]
    %v1301 = vld [vmem:[%s1 + $0x6c0] sm:$0xf]
    %v1302 = vld [vmem:[%s1 + $0x6c4] sm:$0xf]
    %v1303 = vld [vmem:[%s1 + $0x6c8] sm:$0xf]
    %v1304 = vld [vmem:[%s1 + $0x6cc] sm:$0xf]
    %v1305 = vld [vmem:[%s1 + $0x6d0] sm:$0xf]
    %v1306 = vld [vmem:[%s1 + $0x6d4] sm:$0xf]
    %v1307 = vld [vmem:[%s1 + $0x6d8] sm:$0xf]
    %v1308 = vld [vmem:[%s1 + $0x6dc] sm:$0xf]
    %v1309 = vld [vmem:[%s1 + $0x6e0] sm:$0xf]
    %v1310 = vld [vmem:[%s1 + $0x6e4] sm:$0xf]
    %v1311 = vld [vmem:[%s1 + $0x6e8] sm:$0xf]
    %v1312 = vld [vmem:[%s1 + $0x6ec] sm:$0xf]
    %v1313 = vld [vmem:[%s1 + $0x6f0] sm:$0xf]
    %v1314 = vld [vmem:[%s1 + $0x6f4] sm:$0xf]
    %v1315 = vld [vmem:[%s1 + $0x6f8] sm:$0xf]
    %v1316 = vld [vmem:[%s1 + $0x6fc] sm:$0xf]
    %v1317 = vld [vmem:[%s1 + $0x700] sm:$0xf]
    %v1318 = vld [vmem:[%s1 + $0x704] sm:$0xf]
    %v1319 = vld [vmem:[%s1 + $0x708] sm:$0xf]
    %v1320 = vld [vmem:[%s1 + $0x70c] sm:$0xf]
    %v1321 = vld [vmem:[%s1 + $0x710] sm:$0xf]
    %v1322 = vld [vmem:[%s1 + $0x714] sm:$0xf]
    %v1323 = vld [vmem:[%s1 + $0x718] sm:$0xf]
    %v1324 = vld [vmem:[%s1 + $0x71c] sm:$0xf]
    %v1325 = vld [vmem:[%s1 + $0x720] sm:$0xf]
    %v1326 = vld [vmem:[%s1 + $0x724] sm:$0xf]
    %v1327 = vld [vmem:[%s1 + $0x728] sm:$0xf]
    %v1328 = vld [vmem:[%s1 + $0x72c] sm:$0xf]
    %v1329 = vld [vmem:[%s1 + $0x730] sm:$0xf]
    %v1330 = vld [vmem:[%s1 + $0x734] sm:$0xf]
    %v1331 = vld [vmem:[%s1 + $0x738] sm:$0xf]
    %v1332 = vld [vmem:[%s1 + $0x73c] sm:$0xf]
    %v1333 = vld [vmem:[%s1 + $0x740] sm:$0xf]
    %v1334 = vld [vmem:[%s1 + $0x744] sm:$0xf]
    %v1335 = vld [vmem:[%s1 + $0x748] sm:$0xf]
    %v1336 = vld [vmem:[%s1 + $0x74c] sm:$0xf]
    %v1337 = vld [vmem:[%s1 + $0x750] sm:$0xf]
    %v1338 = vld [vmem:[%s1 + $0x754] sm:$0xf]
    %v1339 = vld [vmem:[%s1 + $0x758] sm:$0xf]
    %v1340 = vld [vmem:[%s1 + $0x75c] sm:$0xf]
    %v1341 = vld [vmem:[%s1 + $0x760] sm:$0xf]
    %v1342 = vld [vmem:[%s1 + $0x764] sm:$0xf]
    %v1343 = vld [vmem:[%s1 + $0x768] sm:$0xf]
    %v1344 = vld [vmem:[%s1 + $0x76c] sm:$0xf]
    %v1345 = vld [vmem:[%s1 + $0x770] sm:$0xf]
    %v1346 = vld [vmem:[%s1 + $0x774] sm:$0xf]
    %v1347 = vld [vmem:[%s1 + $0x778] sm:$0xf]
    %v1348 = vld [vmem:[%s1 + $0x77c] sm:$0xf]
    %v1349 = vld [vmem:[%s1 + $0x780] sm:$0xf]
    %v1350 = vld [vmem:[%s1 + $0x784] sm:$0xf]
    %v1351 = vld [vmem:[%s1 + $0x788] sm:$0xf]
    %v1352 = vld [vmem:[%s1 + $0x78c] sm:$0xf]
    %v1353 = vld [vmem:[%s1 + $0x790] sm:$0xf]
    %v1354 = vld [vmem:[%s1 + $0x794] sm:$0xf]
    %v1355 = vld [vmem:[%s1 + $0x798] sm:$0xf]
    %v1356 = vld [vmem:[%s1 + $0x79c] sm:$0xf]
    %v1357 = vld [vmem:[%s1 + $0x7a0] sm:$0xf]
    %v1358 = vld [vmem:[%s1 + $0x7a4] sm:$0xf]
    %v1359 = vld [vmem:[%s1 + $0x7a8] sm:$0xf]
    %v1360 = vld [vmem:[%s1 + $0x7ac] sm:$0xf]
    %v1361 = vld [vmem:[%s1 + $0x7b0] sm:$0xf]
    %v1362 = vld [vmem:[%s1 + $0x7b4] sm:$0xf]
    %v1363 = vld [vmem:[%s1 + $0x7b8] sm:$0xf]
    %v1364 = vld [vmem:[%s1 + $0x7bc] sm:$0xf]
    %v1365 = vld [vmem:[%s1 + $0x7c0] sm:$0xf]
    %v1366 = vld [vmem:[%s1 + $0x7c4] sm:$0xf]
    %v1367 = vld [vmem:[%s1 + $0x7c8] sm:$0xf]
    %v1368 = vld [vmem:[%s1 + $0x7cc] sm:$0xf]
    %v1369 = vld [vmem:[%s1 + $0x7d0] sm:$0xf]
    %v1370 = vld [vmem:[%s1 + $0x7d4] sm:$0xf]
    %v1371 = vld [vmem:[%s1 + $0x7d8] sm:$0xf]
    %v1372 = vld [vmem:[%s1 + $0x7dc] sm:$0xf]
    %v1373 = vld [vmem:[%s1 + $0x7e0] sm:$0xf]
    %v1374 = vld [vmem:[%s1 + $0x7e4] sm:$0xf]
    %v1375 = vld [vmem:[%s1 + $0x7e8] sm:$0xf]
    %v1376 = vld [vmem:[%s1 + $0x7ec] sm:$0xf]
    %v1377 = vld [vmem:[%s1 + $0x7f0] sm:$0xf]
    %v1378 = vld [vmem:[%s1 + $0x7f4] sm:$0xf]
    %v1379 = vld [vmem:[%s1 + $0x7f8] sm:$0xf]
    %v1380 = vld [vmem:[%s1 + $0x7fc] sm:$0xf]
    %v1381 = vld [vmem:[%s1 + $0x800] sm:$0xf]
    %v1382 = vld [vmem:[%s1 + $0x804] sm:$0xf]
    %v1383 = vld [vmem:[%s1 + $0x808] sm:$0xf]
    %v1384 = vld [vmem:[%s1 + $0x80c] sm:$0xf]
    %v1385 = vld [vmem:[%s1 + $0x810] sm:$0xf]
    %v1386 = vld [vmem:[%s1 + $0x814] sm:$0xf]
    %v1387 = vld [vmem:[%s1 + $0x818] sm:$0xf]
    %v1388 = vld [vmem:[%s1 + $0x81c] sm:$0xf]
    %v1389 = vld [vmem:[%s1 + $0x820] sm:$0xf]
    %v1390 = vld [vmem:[%s1 + $0x824] sm:$0xf]
    %v1391 = vld [vmem:[%s1 + $0x828] sm:$0xf]
    %v1392 = vld [vmem:[%s1 + $0x82c] sm:$0xf]
    %v1393 = vld [vmem:[%s1 + $0x830] sm:$0xf]
    %v1394 = vld [vmem:[%s1 + $0x834] sm:$0xf]
    %v1395 = vld [vmem:[%s1 + $0x838] sm:$0xf]
    %v1396 = vld [vmem:[%s1 + $0x83c] sm:$0xf]
    %v1397 = vld [vmem:[%s1 + $0x840] sm:$0xf]
    %v1398 = vld [vmem:[%s1 + $0x844] sm:$0xf]
    %v1399 = vld [vmem:[%s1 + $0x848] sm:$0xf]
    %v1400 = vld [vmem:[%s1 + $0x84c] sm:$0xf]
    %v1401 = vld [vmem:[%s1 + $0x850] sm:$0xf]
    %v1402 = vld [vmem:[%s1 + $0x854] sm:$0xf]
    %v1403 = vld [vmem:[%s1 + $0x858] sm:$0xf]
    %v1404 = vld [vmem:[%s1 + $0x85c] sm:$0xf]
    %v1405 = vld [vmem:[%s1 + $0x860] sm:$0xf]
    %v1406 = vld [vmem:[%s1 + $0x864] sm:$0xf]
    %v1407 = vld [vmem:[%s1 + $0x868] sm:$0xf]
    %v1408 = vld [vmem:[%s1 + $0x86c] sm:$0xf]
    %v1409 = vld [vmem:[%s1 + $0x870] sm:$0xf]
    %v1410 = vld [vmem:[%s1 + $0x874] sm:$0xf]
    %v1411 = vld [vmem:[%s1 + $0x878] sm:$0xf]
    %v1412 = vld [vmem:[%s1 + $0x87c] sm:$0xf]
    %v1413 = vld [vmem:[%s1 + $0x880] sm:$0xf]
    %v1414 = vld [vmem:[%s1 + $0x884] sm:$0xf]
    %v1415 = vld [vmem:[%s1 + $0x888] sm:$0xf]
    %v1416 = vld [vmem:[%s1 + $0x88c] sm:$0xf]
    %v1417 = vld [vmem:[%s1 + $0x890] sm:$0xf]
    %v1418 = vld [vmem:[%s1 + $0x894] sm:$0xf]
    %v1419 = vld [vmem:[%s1 + $0x898] sm:$0xf]
    %v1420 = vld [vmem:[%s1 + $0x89c] sm:$0xf]
    %v1421 = vld [vmem:[%s1 + $0x8a0] sm:$0xf]
    %v1422 = vld [vmem:[%s1 + $0x8a4] sm:$0xf]
    %v1423 = vld [vmem:[%s1 + $0x8a8] sm:$0xf]
    %v1424 = vld [vmem:[%s1 + $0x8ac] sm:$0xf]
    %v1425 = vld [vmem:[%s1 + $0x8b0] sm:$0xf]
    %v1426 = vld [vmem:[%s1 + $0x8b4] sm:$0xf]
    %v1427 = vld [vmem:[%s1 + $0x8b8] sm:$0xf]
    %v1428 = vld [vmem:[%s1 + $0x8bc] sm:$0xf]
    %v1429 = vld [vmem:[%s1 + $0x8c0] sm:$0xf]
    %v1430 = vld [vmem:[%s1 + $0x8c4] sm:$0xf]
    %v1431 = vld [vmem:[%s1 + $0x8c8] sm:$0xf]
    %v1432 = vld [vmem:[%s1 + $0x8cc] sm:$0xf]
    %v1433 = vld [vmem:[%s1 + $0x8d0] sm:$0xf]
    %v1434 = vld [vmem:[%s1 + $0x8d4] sm:$0xf]
    %v1435 = vld [vmem:[%s1 + $0x8d8] sm:$0xf]
    %v1436 = vld [vmem:[%s1 + $0x8dc] sm:$0xf]
    %v1437 = vld [vmem:[%s1 + $0x8e0] sm:$0xf]
    %v1438 = vld [vmem:[%s1 + $0x8e4] sm:$0xf]
    %v1439 = vld [vmem:[%s1 + $0x8e8] sm:$0xf]
    %v1440 = vld [vmem:[%s1 + $0x8ec] sm:$0xf]
    %v1441 = vld [vmem:[%s1 + $0x8f0] sm:$0xf]
    %v1442 = vld [vmem:[%s1 + $0x8f4] sm:$0xf]
    %v1443 = vld [vmem:[%s1 + $0x8f8] sm:$0xf]
    %v1444 = vld [vmem:[%s1 + $0x8fc] sm:$0xf]
    %v1445 = vld [vmem:[%s1 + $0x900] sm:$0xf]
    %v1446 = vld [vmem:[%s1 + $0x904] sm:$0xf]
    %v1447 = vld [vmem:[%s1 + $0x908] sm:$0xf]
    %v1448 = vld [vmem:[%s1 + $0x90c] sm:$0xf]
    %v1449 = vld [vmem:[%s1 + $0x910] sm:$0xf]
    %v1450 = vld [vmem:[%s1 + $0x914] sm:$0xf]
    %v1451 = vld [vmem:[%s1 + $0x918] sm:$0xf]
    %v1452 = vld [vmem:[%s1 + $0x91c] sm:$0xf]
    %v1453 = vld [vmem:[%s1 + $0x920] sm:$0xf]
    %v1454 = vld [vmem:[%s1 + $0x924] sm:$0xf]
    %v1455 = vld [vmem:[%s1 + $0x928] sm:$0xf]
    %v1456 = vld [vmem:[%s1 + $0x92c] sm:$0xf]
    %v1457 = vld [vmem:[%s1 + $0x930] sm:$0xf]
    %v1458 = vld [vmem:[%s1 + $0x934] sm:$0xf]
    %v1459 = vld [vmem:[%s1 + $0x938] sm:$0xf]
    %v1460 = vld [vmem:[%s1 + $0x93c] sm:$0xf]
    %v1461 = vld [vmem:[%s1 + $0x940] sm:$0xf]
    %v1462 = vld [vmem:[%s1 + $0x944] sm:$0xf]
    %v1463 = vld [vmem:[%s1 + $0x948] sm:$0xf]
    %v1464 = vld [vmem:[%s1 + $0x94c] sm:$0xf]
    %v1465 = vld [vmem:[%s1 + $0x950] sm:$0xf]
    %v1466 = vld [vmem:[%s1 + $0x954] sm:$0xf]
    %v1467 = vld [vmem:[%s1 + $0x958] sm:$0xf]
    %v1468 = vld [vmem:[%s1 + $0x95c] sm:$0xf]
    %v1469 = vld [vmem:[%s1 + $0x960] sm:$0xf]
    %v1470 = vld [vmem:[%s1 + $0x964] sm:$0xf]
    %v1471 = vld [vmem:[%s1 + $0x968] sm:$0xf]
    %v1472 = vld [vmem:[%s1 + $0x96c] sm:$0xf]
    %v1473 = vld [vmem:[%s1 + $0x970] sm:$0xf]
    %v1474 = vld [vmem:[%s1 + $0x974] sm:$0xf]
    %v1475 = vld [vmem:[%s1 + $0x978] sm:$0xf]
    %v1476 = vld [vmem:[%s1 + $0x97c] sm:$0xf]
    %v1477 = vld [vmem:[%s1 + $0x980] sm:$0xf]
    %v1478 = vld [vmem:[%s1 + $0x984] sm:$0xf]
    %v1479 = vld [vmem:[%s1 + $0x988] sm:$0xf]
    %v1480 = vld [vmem:[%s1 + $0x98c] sm:$0xf]
    %v1481 = vld [vmem:[%s1 + $0x990] sm:$0xf]
    %v1482 = vld [vmem:[%s1 + $0x994] sm:$0xf]
    %v1483 = vld [vmem:[%s1 + $0x998] sm:$0xf]
    %v1484 = vld [vmem:[%s1 + $0x99c] sm:$0xf]
    %v1485 = vld [vmem:[%s1 + $0x9a0] sm:$0xf]
    %v1486 = vld [vmem:[%s1 + $0x9a4] sm:$0xf]
    %v1487 = vld [vmem:[%s1 + $0x9a8] sm:$0xf]
    %v1488 = vld [vmem:[%s1 + $0x9ac] sm:$0xf]
    %v1489 = vld [vmem:[%s1 + $0x9b0] sm:$0xf]
    %v1490 = vld [vmem:[%s1 + $0x9b4] sm:$0xf]
    %v1491 = vld [vmem:[%s1 + $0x9b8] sm:$0xf]
    %v1492 = vld [vmem:[%s1 + $0x9bc] sm:$0xf]
    %v1493 = vld [vmem:[%s1 + $0x9c0] sm:$0xf]
    %v1494 = vld [vmem:[%s1 + $0x9c4] sm:$0xf]
    %v1495 = vld [vmem:[%s1 + $0x9c8] sm:$0xf]
    %v1496 = vld [vmem:[%s1 + $0x9cc] sm:$0xf]
    %v1497 = vld [vmem:[%s1 + $0x9d0] sm:$0xf]
    %v1498 = vld [vmem:[%s1 + $0x9d4] sm:$0xf]
    %v1499 = vld [vmem:[%s1 + $0x9d8] sm:$0xf]
    %v1500 = vld [vmem:[%s1 + $0x9dc] sm:$0xf]
    %v1501 = vld [vmem:[%s1 + $0x9e0] sm:$0xf]
    %v1502 = vld [vmem:[%s1 + $0x9e4] sm:$0xf]
    %v1503 = vld [vmem:[%s1 + $0x9e8] sm:$0xf]
    %v1504 = vld [vmem:[%s1 + $0x9ec] sm:$0xf]
    %v1505 = vld [vmem:[%s1 + $0x9f0] sm:$0xf]
    %v1506 = vld [vmem:[%s1 + $0x9f4] sm:$0xf]
    %v1507 = vld [vmem:[%s1 + $0x9f8] sm:$0xf]
    %v1508 = vld [vmem:[%s1 + $0x9fc] sm:$0xf]
    %v1509 = vld [vmem:[%s1 + $0xa00] sm:$0xf]
    %v1510 = vld [vmem:[%s1 + $0xa04] sm:$0xf]
    %v1511 = vld [vmem:[%s1 + $0xa08] sm:$0xf]
    %v1512 = vld [vmem:[%s1 + $0xa0c] sm:$0xf]
    %v1513 = vld [vmem:[%s1 + $0xa10] sm:$0xf]
    %v1514 = vld [vmem:[%s1 + $0xa14] sm:$0xf]
    %v1515 = vld [vmem:[%s1 + $0xa18] sm:$0xf]
    %v1516 = vld [vmem:[%s1 + $0xa1c] sm:$0xf]
    %v1517 = vld [vmem:[%s1 + $0xa20] sm:$0xf]
    %v1518 = vld [vmem:[%s1 + $0xa24] sm:$0xf]
    %v1519 = vld [vmem:[%s1 + $0xa28] sm:$0xf]
    %v1520 = vld [vmem:[%s1 + $0xa2c] sm:$0xf]
    %v1521 = vld [vmem:[%s1 + $0xa30] sm:$0xf]
    %v1522 = vld [vmem:[%s1 + $0xa34] sm:$0xf]
    %v1523 = vld [vmem:[%s1 + $0xa38] sm:$0xf]
    %v1524 = vld [vmem:[%s1 + $0xa3c] sm:$0xf]
    %v1525 = vld [vmem:[%s1 + $0xa40] sm:$0xf]
    %v1526 = vld [vmem:[%s1 + $0xa44] sm:$0xf]
    %v1527 = vld [vmem:[%s1 + $0xa48] sm:$0xf]
    %v1528 = vld [vmem:[%s1 + $0xa4c] sm:$0xf]
    %v1529 = vld [vmem:[%s1 + $0xa50] sm:$0xf]
    %v1530 = vld [vmem:[%s1 + $0xa54] sm:$0xf]
    %v1531 = vld [vmem:[%s1 + $0xa58] sm:$0xf]
    %v1532 = vld [vmem:[%s1 + $0xa5c] sm:$0xf]
    %v1533 = vld [vmem:[%s1 + $0xa60] sm:$0xf]
    %v1534 = vld [vmem:[%s1 + $0xa64] sm:$0xf]
    %v1535 = vld [vmem:[%s1 + $0xa68] sm:$0xf]
    %v1536 = vld [vmem:[%s1 + $0xa6c] sm:$0xf]
    %v1537 = vld [vmem:[%s1 + $0xa70] sm:$0xf]
    %v1538 = vld [vmem:[%s1 + $0xa74] sm:$0xf]
    %v1539 = vld [vmem:[%s1 + $0xa78] sm:$0xf]
    %v1540 = vld [vmem:[%s1 + $0xa7c] sm:$0xf]
    %v1541 = vld [vmem:[%s1 + $0xa80] sm:$0xf]
    %v1542 = vld [vmem:[%s1 + $0xa84] sm:$0xf]
    %v1543 = vld [vmem:[%s1 + $0xa88] sm:$0xf]
    %v1544 = vld [vmem:[%s1 + $0xa8c] sm:$0xf]
    %v1545 = vld [vmem:[%s1 + $0xa90] sm:$0xf]
    %v1546 = vld [vmem:[%s1 + $0xa94] sm:$0xf]
    %v1547 = vld [vmem:[%s1 + $0xa98] sm:$0xf]
    %v1548 = vld [vmem:[%s1 + $0xa9c] sm:$0xf]
    %v1549 = vld [vmem:[%s1 + $0xaa0] sm:$0xf]
    %v1550 = vld [vmem:[%s1 + $0xaa4] sm:$0xf]
    %v1551 = vld [vmem:[%s1 + $0xaa8] sm:$0xf]
    %v1552 = vld [vmem:[%s1 + $0xaac] sm:$0xf]
    %v1553 = vld [vmem:[%s1 + $0xab0] sm:$0xf]
    %v1554 = vld [vmem:[%s1 + $0xab4] sm:$0xf]
    %v1555 = vld [vmem:[%s1 + $0xab8] sm:$0xf]
    %v1556 = vld [vmem:[%s1 + $0xabc] sm:$0xf]
    %v1557 = vld [vmem:[%s1 + $0xac0] sm:$0xf]
    %v1558 = vld [vmem:[%s1 + $0xac4] sm:$0xf]
    %v1559 = vld [vmem:[%s1 + $0xac8] sm:$0xf]
    %v1560 = vld [vmem:[%s1 + $0xacc] sm:$0xf]
    %v1561 = vld [vmem:[%s1 + $0xad0] sm:$0xf]
    %v1562 = vld [vmem:[%s1 + $0xad4] sm:$0xf]
    %v1563 = vld [vmem:[%s1 + $0xad8] sm:$0xf]
    %v1564 = vld [vmem:[%s1 + $0xadc] sm:$0xf]
    %v1565 = vld [vmem:[%s1 + $0xae0] sm:$0xf]
    %v1566 = vld [vmem:[%s1 + $0xae4] sm:$0xf]
    %v1567 = vld [vmem:[%s1 + $0xae8] sm:$0xf]
    %v1568 = vld [vmem:[%s1 + $0xaec] sm:$0xf]
    %v1569 = vld [vmem:[%s1 + $0xaf0] sm:$0xf]
    %v1570 = vld [vmem:[%s1 + $0xaf4] sm:$0xf]
    %v1571 = vld [vmem:[%s1 + $0xaf8] sm:$0xf]
    %v1572 = vld [vmem:[%s1 + $0xafc] sm:$0xf]
    %v1573 = vld [vmem:[%s1 + $0xb00] sm:$0xf]
    %v1574 = vld [vmem:[%s1 + $0xb04] sm:$0xf]
    %v1575 = vld [vmem:[%s1 + $0xb08] sm:$0xf]
    %v1576 = vld [vmem:[%s1 + $0xb0c] sm:$0xf]
    %v1577 = vld [vmem:[%s1 + $0xb10] sm:$0xf]
    %v1578 = vld [vmem:[%s1 + $0xb14] sm:$0xf]
    %v1579 = vld [vmem:[%s1 + $0xb18] sm:$0xf]
    %v1580 = vld [vmem:[%s1 + $0xb1c] sm:$0xf]
    %v1581 = vld [vmem:[%s1 + $0xb20] sm:$0xf]
    %v1582 = vld [vmem:[%s1 + $0xb24] sm:$0xf]
    %v1583 = vld [vmem:[%s1 + $0xb28] sm:$0xf]
    %v1584 = vld [vmem:[%s1 + $0xb2c] sm:$0xf]
    %v1585 = vld [vmem:[%s1 + $0xb30] sm:$0xf]
    %v1586 = vld [vmem:[%s1 + $0xb34] sm:$0xf]
    %v1587 = vld [vmem:[%s1 + $0xb38] sm:$0xf]
    %v1588 = vld [vmem:[%s1 + $0xb3c] sm:$0xf]
    %v1589 = vld [vmem:[%s1 + $0xb40] sm:$0xf]
    %v1590 = vld [vmem:[%s1 + $0xb44] sm:$0xf]
    %v1591 = vld [vmem:[%s1 + $0xb48] sm:$0xf]
    %v1592 = vld [vmem:[%s1 + $0xb4c] sm:$0xf]
    %v1593 = vld [vmem:[%s1 + $0xb50] sm:$0xf]
    %v1594 = vld [vmem:[%s1 + $0xb54] sm:$0xf]
    %v1595 = vld [vmem:[%s1 + $0xb58] sm:$0xf]
    %v1596 = vld [vmem:[%s1 + $0xb5c] sm:$0xf]
    %v1597 = vld [vmem:[%s1 + $0xb60] sm:$0xf]
    %v1598 = vld [vmem:[%s1 + $0xb64] sm:$0xf]
    %v1599 = vld [vmem:[%s1 + $0xb68] sm:$0xf]
    %v1600 = vld [vmem:[%s1 + $0xb6c] sm:$0xf]
    %v1601 = vld [vmem:[%s1 + $0xb70] sm:$0xf]
    %v1602 = vld [vmem:[%s1 + $0xb74] sm:$0xf]
    %v1603 = vld [vmem:[%s1 + $0xb78] sm:$0xf]
    %v1604 = vld [vmem:[%s1 + $0xb7c] sm:$0xf]
    %v1605 = vld [vmem:[%s1 + $0xb80] sm:$0xf]
    %v1606 = vld [vmem:[%s1 + $0xb84] sm:$0xf]
    %v1607 = vld [vmem:[%s1 + $0xb88] sm:$0xf]
    %v1608 = vld [vmem:[%s1 + $0xb8c] sm:$0xf]
    %v1609 = vld [vmem:[%s1 + $0xb90] sm:$0xf]
    %v1610 = vld [vmem:[%s1 + $0xb94] sm:$0xf]
    %v1611 = vld [vmem:[%s1 + $0xb98] sm:$0xf]
    %v1612 = vld [vmem:[%s1 + $0xb9c] sm:$0xf]
    %v1613 = vld [vmem:[%s1 + $0xba0] sm:$0xf]
    %v1614 = vld [vmem:[%s1 + $0xba4] sm:$0xf]
    %v1615 = vld [vmem:[%s1 + $0xba8] sm:$0xf]
    %v1616 = vld [vmem:[%s1 + $0xbac] sm:$0xf]
    %v1617 = vld [vmem:[%s1 + $0xbb0] sm:$0xf]
    %v1618 = vld [vmem:[%s1 + $0xbb4] sm:$0xf]
    %v1619 = vld [vmem:[%s1 + $0xbb8] sm:$0xf]
    %v1620 = vld [vmem:[%s1 + $0xbbc] sm:$0xf]
    %v1621 = vld [vmem:[%s1 + $0xbc0] sm:$0xf]
    %v1622 = vld [vmem:[%s1 + $0xbc4] sm:$0xf]
    %v1623 = vld [vmem:[%s1 + $0xbc8] sm:$0xf]
    %v1624 = vld [vmem:[%s1 + $0xbcc] sm:$0xf]
    %v1625 = vld [vmem:[%s1 + $0xbd0] sm:$0xf]
    %v1626 = vld [vmem:[%s1 + $0xbd4] sm:$0xf]
    %v1627 = vld [vmem:[%s1 + $0xbd8] sm:$0xf]
    %v1628 = vld [vmem:[%s1 + $0xbdc] sm:$0xf]
    %v1629 = vld [vmem:[%s1 + $0xbe0] sm:$0xf]
    %v1630 = vld [vmem:[%s1 + $0xbe4] sm:$0xf]
    %v1631 = vld [vmem:[%s1 + $0xbe8] sm:$0xf]
    %v1632 = vld [vmem:[%s1 + $0xbec] sm:$0xf]
    %v1633 = vld [vmem:[%s1 + $0xbf0] sm:$0xf]
    %v1634 = vld [vmem:[%s1 + $0xbf4] sm:$0xf]
    %v1635 = vld [vmem:[%s1 + $0xbf8] sm:$0xf]
    %v1636 = vld [vmem:[%s1 + $0xbfc] sm:$0xf]
    %v1637 = vld [vmem:[%s1 + $0xc00] sm:$0xf]
    %v1638 = vld [vmem:[%s1 + $0xc04] sm:$0xf]
    %v1639 = vld [vmem:[%s1 + $0xc08] sm:$0xf]
    %v1640 = vld [vmem:[%s1 + $0xc0c] sm:$0xf]
    %v1641 = vld [vmem:[%s1 + $0xc10] sm:$0xf]
    %v1642 = vld [vmem:[%s1 + $0xc14] sm:$0xf]
    %v1643 = vld [vmem:[%s1 + $0xc18] sm:$0xf]
    %v1644 = vld [vmem:[%s1 + $0xc1c] sm:$0xf]
    %v1645 = vld [vmem:[%s1 + $0xc20] sm:$0xf]
    %v1646 = vld [vmem:[%s1 + $0xc24] sm:$0xf]
    %v1647 = vld [vmem:[%s1 + $0xc28] sm:$0xf]
    %v1648 = vld [vmem:[%s1 + $0xc2c] sm:$0xf]
    %v1649 = vld [vmem:[%s1 + $0xc30] sm:$0xf]
    %v1650 = vld [vmem:[%s1 + $0xc34] sm:$0xf]
    %v1651 = vld [vmem:[%s1 + $0xc38] sm:$0xf]
    %v1652 = vld [vmem:[%s1 + $0xc3c] sm:$0xf]
    %v1653 = vld [vmem:[%s1 + $0xc40] sm:$0xf]
    %v1654 = vld [vmem:[%s1 + $0xc44] sm:$0xf]
    %v1655 = vld [vmem:[%s1 + $0xc48] sm:$0xf]
    %v1656 = vld [vmem:[%s1 + $0xc4c] sm:$0xf]
    %v1657 = vld [vmem:[%s1 + $0xc50] sm:$0xf]
    %v1658 = vld [vmem:[%s1 + $0xc54] sm:$0xf]
    %v1659 = vld [vmem:[%s1 + $0xc58] sm:$0xf]
    %v1660 = vld [vmem:[%s1 + $0xc5c] sm:$0xf]
    %v1661 = vld [vmem:[%s1 + $0xc60] sm:$0xf]
    %v1662 = vld [vmem:[%s1 + $0xc64] sm:$0xf]
    %v1663 = vld [vmem:[%s1 + $0xc68] sm:$0xf]
    %v1664 = vld [vmem:[%s1 + $0xc6c] sm:$0xf]
    %v1665 = vld [vmem:[%s1 + $0xc70] sm:$0xf]
    %v1666 = vld [vmem:[%s1 + $0xc74] sm:$0xf]
    %v1667 = vld [vmem:[%s1 + $0xc78] sm:$0xf]
    %v1668 = vld [vmem:[%s1 + $0xc7c] sm:$0xf]
    %v1669 = vld [vmem:[%s1 + $0xc80] sm:$0xf]
    %v1670 = vld [vmem:[%s1 + $0xc84] sm:$0xf]
    %v1671 = vld [vmem:[%s1 + $0xc88] sm:$0xf]
    %v1672 = vld [vmem:[%s1 + $0xc8c] sm:$0xf]
    %v1673 = vld [vmem:[%s1 + $0xc90] sm:$0xf]
    %v1674 = vld [vmem:[%s1 + $0xc94] sm:$0xf]
    %v1675 = vld [vmem:[%s1 + $0xc98] sm:$0xf]
    %v1676 = vld [vmem:[%s1 + $0xc9c] sm:$0xf]
    %v1677 = vld [vmem:[%s1 + $0xca0] sm:$0xf]
    %v1678 = vld [vmem:[%s1 + $0xca4] sm:$0xf]
    %v1679 = vld [vmem:[%s1 + $0xca8] sm:$0xf]
    %v1680 = vld [vmem:[%s1 + $0xcac] sm:$0xf]
    %v1681 = vld [vmem:[%s1 + $0xcb0] sm:$0xf]
    %v1682 = vld [vmem:[%s1 + $0xcb4] sm:$0xf]
    %v1683 = vld [vmem:[%s1 + $0xcb8] sm:$0xf]
    %v1684 = vld [vmem:[%s1 + $0xcbc] sm:$0xf]
    %v1685 = vld [vmem:[%s1 + $0xcc0] sm:$0xf]
    %v1686 = vld [vmem:[%s1 + $0xcc4] sm:$0xf]
    %v1687 = vld [vmem:[%s1 + $0xcc8] sm:$0xf]
    %v1688 = vld [vmem:[%s1 + $0xccc] sm:$0xf]
    %v1689 = vld [vmem:[%s1 + $0xcd0] sm:$0xf]
    %v1690 = vld [vmem:[%s1 + $0xcd4] sm:$0xf]
    %v1691 = vld [vmem:[%s1 + $0xcd8] sm:$0xf]
    %v1692 = vld [vmem:[%s1 + $0xcdc] sm:$0xf]
    %v1693 = vld [vmem:[%s1 + $0xce0] sm:$0xf]
    %v1694 = vld [vmem:[%s1 + $0xce4] sm:$0xf]
    %v1695 = vld [vmem:[%s1 + $0xce8] sm:$0xf]
    %v1696 = vld [vmem:[%s1 + $0xcec] sm:$0xf]
    %v1697 = vld [vmem:[%s1 + $0xcf0] sm:$0xf]
    %v1698 = vld [vmem:[%s1 + $0xcf4] sm:$0xf]
    %v1699 = vld [vmem:[%s1 + $0xcf8] sm:$0xf]
    %v1700 = vld [vmem:[%s1 + $0xcfc] sm:$0xf]
    %v1701 = vld [vmem:[%s1 + $0xd00] sm:$0xf]
    %v1702 = vld [vmem:[%s1 + $0xd04] sm:$0xf]
    %v1703 = vld [vmem:[%s1 + $0xd08] sm:$0xf]
    %v1704 = vld [vmem:[%s1 + $0xd0c] sm:$0xf]
    %v1705 = vld [vmem:[%s1 + $0xd10] sm:$0xf]
    %v1706 = vld [vmem:[%s1 + $0xd14] sm:$0xf]
    %v1707 = vld [vmem:[%s1 + $0xd18] sm:$0xf]
    %v1708 = vld [vmem:[%s1 + $0xd1c] sm:$0xf]
    %v1709 = vld [vmem:[%s1 + $0xd20] sm:$0xf]
    %v1710 = vld [vmem:[%s1 + $0xd24] sm:$0xf]
    %v1711 = vld [vmem:[%s1 + $0xd28] sm:$0xf]
    %v1712 = vld [vmem:[%s1 + $0xd2c] sm:$0xf]
    %v1713 = vld [vmem:[%s1 + $0xd30] sm:$0xf]
    %v1714 = vld [vmem:[%s1 + $0xd34] sm:$0xf]
    %v1715 = vld [vmem:[%s1 + $0xd38] sm:$0xf]
    %v1716 = vld [vmem:[%s1 + $0xd3c] sm:$0xf]
    %v1717 = vld [vmem:[%s1 + $0xd40] sm:$0xf]
    %v1718 = vld [vmem:[%s1 + $0xd44] sm:$0xf]
    %v1719 = vld [vmem:[%s1 + $0xd48] sm:$0xf]
    %v1720 = vld [vmem:[%s1 + $0xd4c] sm:$0xf]
    %v1721 = vld [vmem:[%s1 + $0xd50] sm:$0xf]
    %v1722 = vld [vmem:[%s1 + $0xd54] sm:$0xf]
    %v1723 = vld [vmem:[%s1 + $0xd58] sm:$0xf]
    %v1724 = vld [vmem:[%s1 + $0xd5c] sm:$0xf]
    %v1725 = vld [vmem:[%s1 + $0xd60] sm:$0xf]
    %v1726 = vld [vmem:[%s1 + $0xd64] sm:$0xf]
    %v1727 = vld [vmem:[%s1 + $0xd68] sm:$0xf]
    %v1728 = vld [vmem:[%s1 + $0xd6c] sm:$0xf]
    %v1729 = vld [vmem:[%s1 + $0xd70] sm:$0xf]
    %v1730 = vld [vmem:[%s1 + $0xd74] sm:$0xf]
    %v1731 = vld [vmem:[%s1 + $0xd78] sm:$0xf]
    %v1732 = vld [vmem:[%s1 + $0xd7c] sm:$0xf]
    %v1733 = vld [vmem:[%s1 + $0xd80] sm:$0xf]
    %v1734 = vld [vmem:[%s1 + $0xd84] sm:$0xf]
    %v1735 = vld [vmem:[%s1 + $0xd88] sm:$0xf]
    %v1736 = vld [vmem:[%s1 + $0xd8c] sm:$0xf]
    %v1737 = vld [vmem:[%s1 + $0xd90] sm:$0xf]
    %v1738 = vld [vmem:[%s1 + $0xd94] sm:$0xf]
    %v1739 = vld [vmem:[%s1 + $0xd98] sm:$0xf]
    %v1740 = vld [vmem:[%s1 + $0xd9c] sm:$0xf]
    %v1741 = vld [vmem:[%s1 + $0xda0] sm:$0xf]
    %v1742 = vld [vmem:[%s1 + $0xda4] sm:$0xf]
    %v1743 = vld [vmem:[%s1 + $0xda8] sm:$0xf]
    %v1744 = vld [vmem:[%s1 + $0xdac] sm:$0xf]
    %v1745 = vld [vmem:[%s1 + $0xdb0] sm:$0xf]
    %v1746 = vld [vmem:[%s1 + $0xdb4] sm:$0xf]
    %v1747 = vld [vmem:[%s1 + $0xdb8] sm:$0xf]
    %v1748 = vld [vmem:[%s1 + $0xdbc] sm:$0xf]
    %v1749 = vld [vmem:[%s1 + $0xdc0] sm:$0xf]
    %v1750 = vld [vmem:[%s1 + $0xdc4] sm:$0xf]
    %v1751 = vld [vmem:[%s1 + $0xdc8] sm:$0xf]
    %v1752 = vld [vmem:[%s1 + $0xdcc] sm:$0xf]
    %v1753 = vld [vmem:[%s1 + $0xdd0] sm:$0xf]
    %v1754 = vld [vmem:[%s1 + $0xdd4] sm:$0xf]
    %v1755 = vld [vmem:[%s1 + $0xdd8] sm:$0xf]
    %v1756 = vld [vmem:[%s1 + $0xddc] sm:$0xf]
    %v1757 = vld [vmem:[%s1 + $0xde0] sm:$0xf]
    %v1758 = vld [vmem:[%s1 + $0xde4] sm:$0xf]
    %v1759 = vld [vmem:[%s1 + $0xde8] sm:$0xf]
    %v1760 = vld [vmem:[%s1 + $0xdec] sm:$0xf]
    %v1761 = vld [vmem:[%s1 + $0xdf0] sm:$0xf]
    %v1762 = vld [vmem:[%s1 + $0xdf4] sm:$0xf]
    %v1763 = vld [vmem:[%s1 + $0xdf8] sm:$0xf]
    %v1764 = vld [vmem:[%s1 + $0xdfc] sm:$0xf]
    %v1765 = vld [vmem:[%s1 + $0xe00] sm:$0xf]
    %v1766 = vld [vmem:[%s1 + $0xe04] sm:$0xf]
    %v1767 = vld [vmem:[%s1 + $0xe08] sm:$0xf]
    %v1768 = vld [vmem:[%s1 + $0xe0c] sm:$0xf]
    %v1769 = vld [vmem:[%s1 + $0xe10] sm:$0xf]
    %v1770 = vld [vmem:[%s1 + $0xe14] sm:$0xf]
    %v1771 = vld [vmem:[%s1 + $0xe18] sm:$0xf]
    %v1772 = vld [vmem:[%s1 + $0xe1c] sm:$0xf]
    %v1773 = vld [vmem:[%s1 + $0xe20] sm:$0xf]
    %v1774 = vld [vmem:[%s1 + $0xe24] sm:$0xf]
    %v1775 = vld [vmem:[%s1 + $0xe28] sm:$0xf]
    %v1776 = vld [vmem:[%s1 + $0xe2c] sm:$0xf]
    %v1777 = vld [vmem:[%s1 + $0xe30] sm:$0xf]
    %v1778 = vld [vmem:[%s1 + $0xe34] sm:$0xf]
    %v1779 = vld [vmem:[%s1 + $0xe38] sm:$0xf]
    %v1780 = vld [vmem:[%s1 + $0xe3c] sm:$0xf]
    %v1781 = vld [vmem:[%s1 + $0xe40] sm:$0xf]
    %v1782 = vld [vmem:[%s1 + $0xe44] sm:$0xf]
    %v1783 = vld [vmem:[%s1 + $0xe48] sm:$0xf]
    %v1784 = vld [vmem:[%s1 + $0xe4c] sm:$0xf]
    %v1785 = vld [vmem:[%s1 + $0xe50] sm:$0xf]
    %v1786 = vld [vmem:[%s1 + $0xe54] sm:$0xf]
    %v1787 = vld [vmem:[%s1 + $0xe58] sm:$0xf]
    %v1788 = vld [vmem:[%s1 + $0xe5c] sm:$0xf]
    %v1789 = vld [vmem:[%s1 + $0xe60] sm:$0xf]
    %v1790 = vld [vmem:[%s1 + $0xe64] sm:$0xf]
    %v1791 = vld [vmem:[%s1 + $0xe68] sm:$0xf]
    %v1792 = vld [vmem:[%s1 + $0xe6c] sm:$0xf]
    %v1793 = vld [vmem:[%s1 + $0xe70] sm:$0xf]
    %v1794 = vld [vmem:[%s1 + $0xe74] sm:$0xf]
    %v1795 = vld [vmem:[%s1 + $0xe78] sm:$0xf]
    %v1796 = vld [vmem:[%s1 + $0xe7c] sm:$0xf]
    %v1797 = vld [vmem:[%s1 + $0xe80] sm:$0xf]
    %v1798 = vld [vmem:[%s1 + $0xe84] sm:$0xf]
    %v1799 = vld [vmem:[%s1 + $0xe88] sm:$0xf]
    %v1800 = vld [vmem:[%s1 + $0xe8c] sm:$0xf]
    %v1801 = vld [vmem:[%s1 + $0xe90] sm:$0xf]
    %v1802 = vld [vmem:[%s1 + $0xe94] sm:$0xf]
    %v1803 = vld [vmem:[%s1 + $0xe98] sm:$0xf]
    %v1804 = vld [vmem:[%s1 + $0xe9c] sm:$0xf]
    %v1805 = vld [vmem:[%s1 + $0xea0] sm:$0xf]
    %v1806 = vld [vmem:[%s1 + $0xea4] sm:$0xf]
    %v1807 = vld [vmem:[%s1 + $0xea8] sm:$0xf]
    %v1808 = vld [vmem:[%s1 + $0xeac] sm:$0xf]
    %v1809 = vld [vmem:[%s1 + $0xeb0] sm:$0xf]
    %v1810 = vld [vmem:[%s1 + $0xeb4] sm:$0xf]
    %v1811 = vld [vmem:[%s1 + $0xeb8] sm:$0xf]
    %v1812 = vld [vmem:[%s1 + $0xebc] sm:$0xf]
    %v1813 = vld [vmem:[%s1 + $0xec0] sm:$0xf]
    %v1814 = vld [vmem:[%s1 + $0xec4] sm:$0xf]
    %v1815 = vld [vmem:[%s1 + $0xec8] sm:$0xf]
    %v1816 = vld [vmem:[%s1 + $0xecc] sm:$0xf]
    %v1817 = vld [vmem:[%s1 + $0xed0] sm:$0xf]
    %v1818 = vld [vmem:[%s1 + $0xed4] sm:$0xf]
    %v1819 = vld [vmem:[%s1 + $0xed8] sm:$0xf]
    %v1820 = vld [vmem:[%s1 + $0xedc] sm:$0xf]
    %v1821 = vld [vmem:[%s1 + $0xee0] sm:$0xf]
    %v1822 = vld [vmem:[%s1 + $0xee4] sm:$0xf]
    %v1823 = vld [vmem:[%s1 + $0xee8] sm:$0xf]
    %v1824 = vld [vmem:[%s1 + $0xeec] sm:$0xf]
    %v1825 = vld [vmem:[%s1 + $0xef0] sm:$0xf]
    %v1826 = vld [vmem:[%s1 + $0xef4] sm:$0xf]
    %v1827 = vld [vmem:[%s1 + $0xef8] sm:$0xf]
    %v1828 = vld [vmem:[%s1 + $0xefc] sm:$0xf]
    %v1829 = vld [vmem:[%s1 + $0xf00] sm:$0xf]
    %v1830 = vld [vmem:[%s1 + $0xf04] sm:$0xf]
    %v1831 = vld [vmem:[%s1 + $0xf08] sm:$0xf]
    %v1832 = vld [vmem:[%s1 + $0xf0c] sm:$0xf]
    %v1833 = vld [vmem:[%s1 + $0xf10] sm:$0xf]
    %v1834 = vld [vmem:[%s1 + $0xf14] sm:$0xf]
    %v1835 = vld [vmem:[%s1 + $0xf18] sm:$0xf]
    %v1836 = vld [vmem:[%s1 + $0xf1c] sm:$0xf]
    %v1837 = vld [vmem:[%s1 + $0xf20] sm:$0xf]
    %v1838 = vld [vmem:[%s1 + $0xf24] sm:$0xf]
    %v1839 = vld [vmem:[%s1 + $0xf28] sm:$0xf]
    %v1840 = vld [vmem:[%s1 + $0xf2c] sm:$0xf]
    %v1841 = vld [vmem:[%s1 + $0xf30] sm:$0xf]
    %v1842 = vld [vmem:[%s1 + $0xf34] sm:$0xf]
    %v1843 = vld [vmem:[%s1 + $0xf38] sm:$0xf]
    %v1844 = vld [vmem:[%s1 + $0xf3c] sm:$0xf]
    %v1845 = vld [vmem:[%s1 + $0xf40] sm:$0xf]
    %v1846 = vld [vmem:[%s1 + $0xf44] sm:$0xf]
    %v1847 = vld [vmem:[%s1 + $0xf48] sm:$0xf]
    %v1848 = vld [vmem:[%s1 + $0xf4c] sm:$0xf]
    %v1849 = vld [vmem:[%s1 + $0xf50] sm:$0xf]
    %v1850 = vld [vmem:[%s1 + $0xf54] sm:$0xf]
    %v1851 = vld [vmem:[%s1 + $0xf58] sm:$0xf]
    %v1852 = vld [vmem:[%s1 + $0xf5c] sm:$0xf]
    %v1853 = vld [vmem:[%s1 + $0xf60] sm:$0xf]
    %v1854 = vld [vmem:[%s1 + $0xf64] sm:$0xf]
    %v1855 = vld [vmem:[%s1 + $0xf68] sm:$0xf]
    %v1856 = vld [vmem:[%s1 + $0xf6c] sm:$0xf]
    %v1857 = vld [vmem:[%s1 + $0xf70] sm:$0xf]
    %v1858 = vld [vmem:[%s1 + $0xf74] sm:$0xf]
    %v1859 = vld [vmem:[%s1 + $0xf78] sm:$0xf]
    %v1860 = vld [vmem:[%s1 + $0xf7c] sm:$0xf]
    %v1861 = vld [vmem:[%s1 + $0xf80] sm:$0xf]
    %v1862 = vld [vmem:[%s1 + $0xf84] sm:$0xf]
    %v1863 = vld [vmem:[%s1 + $0xf88] sm:$0xf]
    %v1864 = vld [vmem:[%s1 + $0xf8c] sm:$0xf]
    %v1865 = vld [vmem:[%s1 + $0xf90] sm:$0xf]
    %v1866 = vld [vmem:[%s1 + $0xf94] sm:$0xf]
    %v1867 = vld [vmem:[%s1 + $0xf98] sm:$0xf]
    %v1868 = vld [vmem:[%s1 + $0xf9c] sm:$0xf]
    %v1869 = vld [vmem:[%s1 + $0xfa0] sm:$0xf]
    %v1870 = vld [vmem:[%s1 + $0xfa4] sm:$0xf]
    %v1871 = vld [vmem:[%s1 + $0xfa8] sm:$0xf]
    %v1872 = vld [vmem:[%s1 + $0xfac] sm:$0xf]
    %v1873 = vld [vmem:[%s1 + $0xfb0] sm:$0xf]
    %v1874 = vld [vmem:[%s1 + $0xfb4] sm:$0xf]
    %v1875 = vld [vmem:[%s1 + $0xfb8] sm:$0xf]
    %v1876 = vld [vmem:[%s1 + $0xfbc] sm:$0xf]
    %v1877 = vld [vmem:[%s1 + $0xfc0] sm:$0xf]
    %v1878 = vld [vmem:[%s1 + $0xfc4] sm:$0xf]
    %v1879 = vld [vmem:[%s1 + $0xfc8] sm:$0xf]
    %v1880 = vld [vmem:[%s1 + $0xfcc] sm:$0xf]
    %v1881 = vld [vmem:[%s1 + $0xfd0] sm:$0xf]
    %v1882 = vld [vmem:[%s1 + $0xfd4] sm:$0xf]
    %v1883 = vld [vmem:[%s1 + $0xfd8] sm:$0xf]
    %v1884 = vld [vmem:[%s1 + $0xfdc] sm:$0xf]
    %v1885 = vld [vmem:[%s1 + $0xfe0] sm:$0xf]
    %v1886 = vld [vmem:[%s1 + $0xfe4] sm:$0xf]
    %v1887 = vld [vmem:[%s1 + $0xfe8] sm:$0xf]
    %v1888 = vld [vmem:[%s1 + $0xfec] sm:$0xf]
    %v1889 = vld [vmem:[%s1 + $0xff0] sm:$0xf]
    %v1890 = vld [vmem:[%s1 + $0xff4] sm:$0xf]
    %v1891 = vld [vmem:[%s1 + $0xff8] sm:$0xf]
    %v1892 = vld [vmem:[%s1 + $0xffc] sm:$0xf]
    %s1893 = sld [smem:[#allocation2]]
    %v1894 = vstv %s1893
    %v2919 = vunpack.c.l.b16 %v869
    %v2920 = vunpack.c.l.b16 %v870
    %v2921 = vunpack.c.l.b16 %v871
    %v2922 = vunpack.c.l.b16 %v872
    %v2923 = vunpack.c.l.b16 %v873
    %v2924 = vunpack.c.l.b16 %v874
    %v2925 = vunpack.c.l.b16 %v875
    %v2926 = vunpack.c.l.b16 %v876
    %v2927 = vunpack.c.l.b16 %v877
    %v2928 = vunpack.c.l.b16 %v878
    %v2929 = vunpack.c.l.b16 %v879
    %v2930 = vunpack.c.l.b16 %v880
    %v2931 = vunpack.c.l.b16 %v881
    %v2932 = vunpack.c.l.b16 %v882
    %v2933 = vunpack.c.l.b16 %v883
    %v2934 = vunpack.c.l.b16 %v884
    %v2935 = vunpack.c.l.b16 %v885
    %v2936 = vunpack.c.l.b16 %v886
    %v2937 = vunpack.c.l.b16 %v887
    %v2938 = vunpack.c.l.b16 %v888
    %v2939 = vunpack.c.l.b16 %v889
    %v2940 = vunpack.c.l.b16 %v890
    %v2941 = vunpack.c.l.b16 %v891
    %v2942 = vunpack.c.l.b16 %v892
    %v2943 = vunpack.c.l.b16 %v893
    %v2944 = vunpack.c.l.b16 %v894
    %v2945 = vunpack.c.l.b16 %v895
    %v2946 = vunpack.c.l.b16 %v896
    %v2947 = vunpack.c.l.b16 %v897
    %v2948 = vunpack.c.l.b16 %v898
    %v2949 = vunpack.c.l.b16 %v899
    %v2950 = vunpack.c.l.b16 %v900
    %v2951 = vunpack.c.l.b16 %v901
    %v2952 = vunpack.c.l.b16 %v902
    %v2953 = vunpack.c.l.b16 %v903
    %v2954 = vunpack.c.l.b16 %v904
    %v2955 = vunpack.c.l.b16 %v905
    %v2956 = vunpack.c.l.b16 %v906
    %v2957 = vunpack.c.l.b16 %v907
    %v2958 = vunpack.c.l.b16 %v908
    %v2959 = vunpack.c.l.b16 %v909
    %v2960 = vunpack.c.l.b16 %v910
    %v2961 = vunpack.c.l.b16 %v911
    %v2962 = vunpack.c.l.b16 %v912
    %v2963 = vunpack.c.l.b16 %v913
    %v2964 = vunpack.c.l.b16 %v914
    %v2965 = vunpack.c.l.b16 %v915
    %v2966 = vunpack.c.l.b16 %v916
    %v2967 = vunpack.c.l.b16 %v917
    %v2968 = vunpack.c.l.b16 %v918
    %v2969 = vunpack.c.l.b16 %v919
    %v2970 = vunpack.c.l.b16 %v920
    %v2971 = vunpack.c.l.b16 %v921
    %v2972 = vunpack.c.l.b16 %v922
    %v2973 = vunpack.c.l.b16 %v923
    %v2974 = vunpack.c.l.b16 %v924
    %v2975 = vunpack.c.l.b16 %v925
    %v2976 = vunpack.c.l.b16 %v926
    %v2977 = vunpack.c.l.b16 %v927
    %v2978 = vunpack.c.l.b16 %v928
    %v2979 = vunpack.c.l.b16 %v929
    %v2980 = vunpack.c.l.b16 %v930
    %v2981 = vunpack.c.l.b16 %v931
    %v2982 = vunpack.c.l.b16 %v932
    %v2983 = vunpack.c.l.b16 %v933
    %v2984 = vunpack.c.l.b16 %v934
    %v2985 = vunpack.c.l.b16 %v935
    %v2986 = vunpack.c.l.b16 %v936
    %v2987 = vunpack.c.l.b16 %v937
    %v2988 = vunpack.c.l.b16 %v938
    %v2989 = vunpack.c.l.b16 %v939
    %v2990 = vunpack.c.l.b16 %v940
    %v2991 = vunpack.c.l.b16 %v941
    %v2992 = vunpack.c.l.b16 %v942
    %v2993 = vunpack.c.l.b16 %v943
    %v2994 = vunpack.c.l.b16 %v944
    %v2995 = vunpack.c.l.b16 %v945
    %v2996 = vunpack.c.l.b16 %v946
    %v2997 = vunpack.c.l.b16 %v947
    %v2998 = vunpack.c.l.b16 %v948
    %v2999 = vunpack.c.l.b16 %v949
    %v3000 = vunpack.c.l.b16 %v950
    %v3001 = vunpack.c.l.b16 %v951
    %v3002 = vunpack.c.l.b16 %v952
    %v3003 = vunpack.c.l.b16 %v953
    %v3004 = vunpack.c.l.b16 %v954
    %v3005 = vunpack.c.l.b16 %v955
    %v3006 = vunpack.c.l.b16 %v956
    %v3007 = vunpack.c.l.b16 %v957
    %v3008 = vunpack.c.l.b16 %v958
    %v3009 = vunpack.c.l.b16 %v959
    %v3010 = vunpack.c.l.b16 %v960
    %v3011 = vunpack.c.l.b16 %v961
    %v3012 = vunpack.c.l.b16 %v962
    %v3013 = vunpack.c.l.b16 %v963
    %v3014 = vunpack.c.l.b16 %v964
    %v3015 = vunpack.c.l.b16 %v965
    %v3016 = vunpack.c.l.b16 %v966
    %v3017 = vunpack.c.l.b16 %v967
    %v3018 = vunpack.c.l.b16 %v968
    %v3019 = vunpack.c.l.b16 %v969
    %v3020 = vunpack.c.l.b16 %v970
    %v3021 = vunpack.c.l.b16 %v971
    %v3022 = vunpack.c.l.b16 %v972
    %v3023 = vunpack.c.l.b16 %v973
    %v3024 = vunpack.c.l.b16 %v974
    %v3025 = vunpack.c.l.b16 %v975
    %v3026 = vunpack.c.l.b16 %v976
    %v3027 = vunpack.c.l.b16 %v977
    %v3028 = vunpack.c.l.b16 %v978
    %v3029 = vunpack.c.l.b16 %v979
    %v3030 = vunpack.c.l.b16 %v980
    %v3031 = vunpack.c.l.b16 %v981
    %v3032 = vunpack.c.l.b16 %v982
    %v3033 = vunpack.c.l.b16 %v983
    %v3034 = vunpack.c.l.b16 %v984
    %v3035 = vunpack.c.l.b16 %v985
    %v3036 = vunpack.c.l.b16 %v986
    %v3037 = vunpack.c.l.b16 %v987
    %v3038 = vunpack.c.l.b16 %v988
    %v3039 = vunpack.c.l.b16 %v989
    %v3040 = vunpack.c.l.b16 %v990
    %v3041 = vunpack.c.l.b16 %v991
    %v3042 = vunpack.c.l.b16 %v992
    %v3043 = vunpack.c.l.b16 %v993
    %v3044 = vunpack.c.l.b16 %v994
    %v3045 = vunpack.c.l.b16 %v995
    %v3046 = vunpack.c.l.b16 %v996
    %v3047 = vunpack.c.l.b16 %v997
    %v3048 = vunpack.c.l.b16 %v998
    %v3049 = vunpack.c.l.b16 %v999
    %v3050 = vunpack.c.l.b16 %v1000
    %v3051 = vunpack.c.l.b16 %v1001
    %v3052 = vunpack.c.l.b16 %v1002
    %v3053 = vunpack.c.l.b16 %v1003
    %v3054 = vunpack.c.l.b16 %v1004
    %v3055 = vunpack.c.l.b16 %v1005
    %v3056 = vunpack.c.l.b16 %v1006
    %v3057 = vunpack.c.l.b16 %v1007
    %v3058 = vunpack.c.l.b16 %v1008
    %v3059 = vunpack.c.l.b16 %v1009
    %v3060 = vunpack.c.l.b16 %v1010
    %v3061 = vunpack.c.l.b16 %v1011
    %v3062 = vunpack.c.l.b16 %v1012
    %v3063 = vunpack.c.l.b16 %v1013
    %v3064 = vunpack.c.l.b16 %v1014
    %v3065 = vunpack.c.l.b16 %v1015
    %v3066 = vunpack.c.l.b16 %v1016
    %v3067 = vunpack.c.l.b16 %v1017
    %v3068 = vunpack.c.l.b16 %v1018
    %v3069 = vunpack.c.l.b16 %v1019
    %v3070 = vunpack.c.l.b16 %v1020
    %v3071 = vunpack.c.l.b16 %v1021
    %v3072 = vunpack.c.l.b16 %v1022
    %v3073 = vunpack.c.l.b16 %v1023
    %v3074 = vunpack.c.l.b16 %v1024
    %v3075 = vunpack.c.l.b16 %v1025
    %v3076 = vunpack.c.l.b16 %v1026
    %v3077 = vunpack.c.l.b16 %v1027
    %v3078 = vunpack.c.l.b16 %v1028
    %v3079 = vunpack.c.l.b16 %v1029
    %v3080 = vunpack.c.l.b16 %v1030
    %v3081 = vunpack.c.l.b16 %v1031
    %v3082 = vunpack.c.l.b16 %v1032
    %v3083 = vunpack.c.l.b16 %v1033
    %v3084 = vunpack.c.l.b16 %v1034
    %v3085 = vunpack.c.l.b16 %v1035
    %v3086 = vunpack.c.l.b16 %v1036
    %v3087 = vunpack.c.l.b16 %v1037
    %v3088 = vunpack.c.l.b16 %v1038
    %v3089 = vunpack.c.l.b16 %v1039
    %v3090 = vunpack.c.l.b16 %v1040
    %v3091 = vunpack.c.l.b16 %v1041
    %v3092 = vunpack.c.l.b16 %v1042
    %v3093 = vunpack.c.l.b16 %v1043
    %v3094 = vunpack.c.l.b16 %v1044
    %v3095 = vunpack.c.l.b16 %v1045
    %v3096 = vunpack.c.l.b16 %v1046
    %v3097 = vunpack.c.l.b16 %v1047
    %v3098 = vunpack.c.l.b16 %v1048
    %v3099 = vunpack.c.l.b16 %v1049
    %v3100 = vunpack.c.l.b16 %v1050
    %v3101 = vunpack.c.l.b16 %v1051
    %v3102 = vunpack.c.l.b16 %v1052
    %v3103 = vunpack.c.l.b16 %v1053
    %v3104 = vunpack.c.l.b16 %v1054
    %v3105 = vunpack.c.l.b16 %v1055
    %v3106 = vunpack.c.l.b16 %v1056
    %v3107 = vunpack.c.l.b16 %v1057
    %v3108 = vunpack.c.l.b16 %v1058
    %v3109 = vunpack.c.l.b16 %v1059
    %v3110 = vunpack.c.l.b16 %v1060
    %v3111 = vunpack.c.l.b16 %v1061
    %v3112 = vunpack.c.l.b16 %v1062
    %v3113 = vunpack.c.l.b16 %v1063
    %v3114 = vunpack.c.l.b16 %v1064
    %v3115 = vunpack.c.l.b16 %v1065
    %v3116 = vunpack.c.l.b16 %v1066
    %v3117 = vunpack.c.l.b16 %v1067
    %v3118 = vunpack.c.l.b16 %v1068
    %v3119 = vunpack.c.l.b16 %v1069
    %v3120 = vunpack.c.l.b16 %v1070
    %v3121 = vunpack.c.l.b16 %v1071
    %v3122 = vunpack.c.l.b16 %v1072
    %v3123 = vunpack.c.l.b16 %v1073
    %v3124 = vunpack.c.l.b16 %v1074
    %v3125 = vunpack.c.l.b16 %v1075
    %v3126 = vunpack.c.l.b16 %v1076
    %v3127 = vunpack.c.l.b16 %v1077
    %v3128 = vunpack.c.l.b16 %v1078
    %v3129 = vunpack.c.l.b16 %v1079
    %v3130 = vunpack.c.l.b16 %v1080
    %v3131 = vunpack.c.l.b16 %v1081
    %v3132 = vunpack.c.l.b16 %v1082
    %v3133 = vunpack.c.l.b16 %v1083
    %v3134 = vunpack.c.l.b16 %v1084
    %v3135 = vunpack.c.l.b16 %v1085
    %v3136 = vunpack.c.l.b16 %v1086
    %v3137 = vunpack.c.l.b16 %v1087
    %v3138 = vunpack.c.l.b16 %v1088
    %v3139 = vunpack.c.l.b16 %v1089
    %v3140 = vunpack.c.l.b16 %v1090
    %v3141 = vunpack.c.l.b16 %v1091
    %v3142 = vunpack.c.l.b16 %v1092
    %v3143 = vunpack.c.l.b16 %v1093
    %v3144 = vunpack.c.l.b16 %v1094
    %v3145 = vunpack.c.l.b16 %v1095
    %v3146 = vunpack.c.l.b16 %v1096
    %v3147 = vunpack.c.l.b16 %v1097
    %v3148 = vunpack.c.l.b16 %v1098
    %v3149 = vunpack.c.l.b16 %v1099
    %v3150 = vunpack.c.l.b16 %v1100
    %v3151 = vunpack.c.l.b16 %v1101
    %v3152 = vunpack.c.l.b16 %v1102
    %v3153 = vunpack.c.l.b16 %v1103
    %v3154 = vunpack.c.l.b16 %v1104
    %v3155 = vunpack.c.l.b16 %v1105
    %v3156 = vunpack.c.l.b16 %v1106
    %v3157 = vunpack.c.l.b16 %v1107
    %v3158 = vunpack.c.l.b16 %v1108
    %v3159 = vunpack.c.l.b16 %v1109
    %v3160 = vunpack.c.l.b16 %v1110
    %v3161 = vunpack.c.l.b16 %v1111
    %v3162 = vunpack.c.l.b16 %v1112
    %v3163 = vunpack.c.l.b16 %v1113
    %v3164 = vunpack.c.l.b16 %v1114
    %v3165 = vunpack.c.l.b16 %v1115
    %v3166 = vunpack.c.l.b16 %v1116
    %v3167 = vunpack.c.l.b16 %v1117
    %v3168 = vunpack.c.l.b16 %v1118
    %v3169 = vunpack.c.l.b16 %v1119
    %v3170 = vunpack.c.l.b16 %v1120
    %v3171 = vunpack.c.l.b16 %v1121
    %v3172 = vunpack.c.l.b16 %v1122
    %v3173 = vunpack.c.l.b16 %v1123
    %v3174 = vunpack.c.l.b16 %v1124
    %v3175 = vunpack.c.l.b16 %v1125
    %v3176 = vunpack.c.l.b16 %v1126
    %v3177 = vunpack.c.l.b16 %v1127
    %v3178 = vunpack.c.l.b16 %v1128
    %v3179 = vunpack.c.l.b16 %v1129
    %v3180 = vunpack.c.l.b16 %v1130
    %v3181 = vunpack.c.l.b16 %v1131
    %v3182 = vunpack.c.l.b16 %v1132
    %v3183 = vunpack.c.l.b16 %v1133
    %v3184 = vunpack.c.l.b16 %v1134
    %v3185 = vunpack.c.l.b16 %v1135
    %v3186 = vunpack.c.l.b16 %v1136
    %v3187 = vunpack.c.l.b16 %v1137
    %v3188 = vunpack.c.l.b16 %v1138
    %v3189 = vunpack.c.l.b16 %v1139
    %v3190 = vunpack.c.l.b16 %v1140
    %v3191 = vunpack.c.l.b16 %v1141
    %v3192 = vunpack.c.l.b16 %v1142
    %v3193 = vunpack.c.l.b16 %v1143
    %v3194 = vunpack.c.l.b16 %v1144
    %v3195 = vunpack.c.l.b16 %v1145
    %v3196 = vunpack.c.l.b16 %v1146
    %v3197 = vunpack.c.l.b16 %v1147
    %v3198 = vunpack.c.l.b16 %v1148
    %v3199 = vunpack.c.l.b16 %v1149
    %v3200 = vunpack.c.l.b16 %v1150
    %v3201 = vunpack.c.l.b16 %v1151
    %v3202 = vunpack.c.l.b16 %v1152
    %v3203 = vunpack.c.l.b16 %v1153
    %v3204 = vunpack.c.l.b16 %v1154
    %v3205 = vunpack.c.l.b16 %v1155
    %v3206 = vunpack.c.l.b16 %v1156
    %v3207 = vunpack.c.l.b16 %v1157
    %v3208 = vunpack.c.l.b16 %v1158
    %v3209 = vunpack.c.l.b16 %v1159
    %v3210 = vunpack.c.l.b16 %v1160
    %v3211 = vunpack.c.l.b16 %v1161
    %v3212 = vunpack.c.l.b16 %v1162
    %v3213 = vunpack.c.l.b16 %v1163
    %v3214 = vunpack.c.l.b16 %v1164
    %v3215 = vunpack.c.l.b16 %v1165
    %v3216 = vunpack.c.l.b16 %v1166
    %v3217 = vunpack.c.l.b16 %v1167
    %v3218 = vunpack.c.l.b16 %v1168
    %v3219 = vunpack.c.l.b16 %v1169
    %v3220 = vunpack.c.l.b16 %v1170
    %v3221 = vunpack.c.l.b16 %v1171
    %v3222 = vunpack.c.l.b16 %v1172
    %v3223 = vunpack.c.l.b16 %v1173
    %v3224 = vunpack.c.l.b16 %v1174
    %v3225 = vunpack.c.l.b16 %v1175
    %v3226 = vunpack.c.l.b16 %v1176
    %v3227 = vunpack.c.l.b16 %v1177
    %v3228 = vunpack.c.l.b16 %v1178
    %v3229 = vunpack.c.l.b16 %v1179
    %v3230 = vunpack.c.l.b16 %v1180
    %v3231 = vunpack.c.l.b16 %v1181
    %v3232 = vunpack.c.l.b16 %v1182
    %v3233 = vunpack.c.l.b16 %v1183
    %v3234 = vunpack.c.l.b16 %v1184
    %v3235 = vunpack.c.l.b16 %v1185
    %v3236 = vunpack.c.l.b16 %v1186
    %v3237 = vunpack.c.l.b16 %v1187
    %v3238 = vunpack.c.l.b16 %v1188
    %v3239 = vunpack.c.l.b16 %v1189
    %v3240 = vunpack.c.l.b16 %v1190
    %v3241 = vunpack.c.l.b16 %v1191
    %v3242 = vunpack.c.l.b16 %v1192
    %v3243 = vunpack.c.l.b16 %v1193
    %v3244 = vunpack.c.l.b16 %v1194
    %v3245 = vunpack.c.l.b16 %v1195
    %v3246 = vunpack.c.l.b16 %v1196
    %v3247 = vunpack.c.l.b16 %v1197
    %v3248 = vunpack.c.l.b16 %v1198
    %v3249 = vunpack.c.l.b16 %v1199
    %v3250 = vunpack.c.l.b16 %v1200
    %v3251 = vunpack.c.l.b16 %v1201
    %v3252 = vunpack.c.l.b16 %v1202
    %v3253 = vunpack.c.l.b16 %v1203
    %v3254 = vunpack.c.l.b16 %v1204
    %v3255 = vunpack.c.l.b16 %v1205
    %v3256 = vunpack.c.l.b16 %v1206
    %v3257 = vunpack.c.l.b16 %v1207
    %v3258 = vunpack.c.l.b16 %v1208
    %v3259 = vunpack.c.l.b16 %v1209
    %v3260 = vunpack.c.l.b16 %v1210
    %v3261 = vunpack.c.l.b16 %v1211
    %v3262 = vunpack.c.l.b16 %v1212
    %v3263 = vunpack.c.l.b16 %v1213
    %v3264 = vunpack.c.l.b16 %v1214
    %v3265 = vunpack.c.l.b16 %v1215
    %v3266 = vunpack.c.l.b16 %v1216
    %v3267 = vunpack.c.l.b16 %v1217
    %v3268 = vunpack.c.l.b16 %v1218
    %v3269 = vunpack.c.l.b16 %v1219
    %v3270 = vunpack.c.l.b16 %v1220
    %v3271 = vunpack.c.l.b16 %v1221
    %v3272 = vunpack.c.l.b16 %v1222
    %v3273 = vunpack.c.l.b16 %v1223
    %v3274 = vunpack.c.l.b16 %v1224
    %v3275 = vunpack.c.l.b16 %v1225
    %v3276 = vunpack.c.l.b16 %v1226
    %v3277 = vunpack.c.l.b16 %v1227
    %v3278 = vunpack.c.l.b16 %v1228
    %v3279 = vunpack.c.l.b16 %v1229
    %v3280 = vunpack.c.l.b16 %v1230
    %v3281 = vunpack.c.l.b16 %v1231
    %v3282 = vunpack.c.l.b16 %v1232
    %v3283 = vunpack.c.l.b16 %v1233
    %v3284 = vunpack.c.l.b16 %v1234
    %v3285 = vunpack.c.l.b16 %v1235
    %v3286 = vunpack.c.l.b16 %v1236
    %v3287 = vunpack.c.l.b16 %v1237
    %v3288 = vunpack.c.l.b16 %v1238
    %v3289 = vunpack.c.l.b16 %v1239
    %v3290 = vunpack.c.l.b16 %v1240
    %v3291 = vunpack.c.l.b16 %v1241
    %v3292 = vunpack.c.l.b16 %v1242
    %v3293 = vunpack.c.l.b16 %v1243
    %v3294 = vunpack.c.l.b16 %v1244
    %v3295 = vunpack.c.l.b16 %v1245
    %v3296 = vunpack.c.l.b16 %v1246
    %v3297 = vunpack.c.l.b16 %v1247
    %v3298 = vunpack.c.l.b16 %v1248
    %v3299 = vunpack.c.l.b16 %v1249
    %v3300 = vunpack.c.l.b16 %v1250
    %v3301 = vunpack.c.l.b16 %v1251
    %v3302 = vunpack.c.l.b16 %v1252
    %v3303 = vunpack.c.l.b16 %v1253
    %v3304 = vunpack.c.l.b16 %v1254
    %v3305 = vunpack.c.l.b16 %v1255
    %v3306 = vunpack.c.l.b16 %v1256
    %v3307 = vunpack.c.l.b16 %v1257
    %v3308 = vunpack.c.l.b16 %v1258
    %v3309 = vunpack.c.l.b16 %v1259
    %v3310 = vunpack.c.l.b16 %v1260
    %v3311 = vunpack.c.l.b16 %v1261
    %v3312 = vunpack.c.l.b16 %v1262
    %v3313 = vunpack.c.l.b16 %v1263
    %v3314 = vunpack.c.l.b16 %v1264
    %v3315 = vunpack.c.l.b16 %v1265
    %v3316 = vunpack.c.l.b16 %v1266
    %v3317 = vunpack.c.l.b16 %v1267
    %v3318 = vunpack.c.l.b16 %v1268
    %v3319 = vunpack.c.l.b16 %v1269
    %v3320 = vunpack.c.l.b16 %v1270
    %v3321 = vunpack.c.l.b16 %v1271
    %v3322 = vunpack.c.l.b16 %v1272
    %v3323 = vunpack.c.l.b16 %v1273
    %v3324 = vunpack.c.l.b16 %v1274
    %v3325 = vunpack.c.l.b16 %v1275
    %v3326 = vunpack.c.l.b16 %v1276
    %v3327 = vunpack.c.l.b16 %v1277
    %v3328 = vunpack.c.l.b16 %v1278
    %v3329 = vunpack.c.l.b16 %v1279
    %v3330 = vunpack.c.l.b16 %v1280
    %v3331 = vunpack.c.l.b16 %v1281
    %v3332 = vunpack.c.l.b16 %v1282
    %v3333 = vunpack.c.l.b16 %v1283
    %v3334 = vunpack.c.l.b16 %v1284
    %v3335 = vunpack.c.l.b16 %v1285
    %v3336 = vunpack.c.l.b16 %v1286
    %v3337 = vunpack.c.l.b16 %v1287
    %v3338 = vunpack.c.l.b16 %v1288
    %v3339 = vunpack.c.l.b16 %v1289
    %v3340 = vunpack.c.l.b16 %v1290
    %v3341 = vunpack.c.l.b16 %v1291
    %v3342 = vunpack.c.l.b16 %v1292
    %v3343 = vunpack.c.l.b16 %v1293
    %v3344 = vunpack.c.l.b16 %v1294
    %v3345 = vunpack.c.l.b16 %v1295
    %v3346 = vunpack.c.l.b16 %v1296
    %v3347 = vunpack.c.l.b16 %v1297
    %v3348 = vunpack.c.l.b16 %v1298
    %v3349 = vunpack.c.l.b16 %v1299
    %v3350 = vunpack.c.l.b16 %v1300
    %v3351 = vunpack.c.l.b16 %v1301
    %v3352 = vunpack.c.l.b16 %v1302
    %v3353 = vunpack.c.l.b16 %v1303
    %v3354 = vunpack.c.l.b16 %v1304
    %v3355 = vunpack.c.l.b16 %v1305
    %v3356 = vunpack.c.l.b16 %v1306
    %v3357 = vunpack.c.l.b16 %v1307
    %v3358 = vunpack.c.l.b16 %v1308
    %v3359 = vunpack.c.l.b16 %v1309
    %v3360 = vunpack.c.l.b16 %v1310
    %v3361 = vunpack.c.l.b16 %v1311
    %v3362 = vunpack.c.l.b16 %v1312
    %v3363 = vunpack.c.l.b16 %v1313
    %v3364 = vunpack.c.l.b16 %v1314
    %v3365 = vunpack.c.l.b16 %v1315
    %v3366 = vunpack.c.l.b16 %v1316
    %v3367 = vunpack.c.l.b16 %v1317
    %v3368 = vunpack.c.l.b16 %v1318
    %v3369 = vunpack.c.l.b16 %v1319
    %v3370 = vunpack.c.l.b16 %v1320
    %v3371 = vunpack.c.l.b16 %v1321
    %v3372 = vunpack.c.l.b16 %v1322
    %v3373 = vunpack.c.l.b16 %v1323
    %v3374 = vunpack.c.l.b16 %v1324
    %v3375 = vunpack.c.l.b16 %v1325
    %v3376 = vunpack.c.l.b16 %v1326
    %v3377 = vunpack.c.l.b16 %v1327
    %v3378 = vunpack.c.l.b16 %v1328
    %v3379 = vunpack.c.l.b16 %v1329
    %v3380 = vunpack.c.l.b16 %v1330
    %v3381 = vunpack.c.l.b16 %v1331
    %v3382 = vunpack.c.l.b16 %v1332
    %v3383 = vunpack.c.l.b16 %v1333
    %v3384 = vunpack.c.l.b16 %v1334
    %v3385 = vunpack.c.l.b16 %v1335
    %v3386 = vunpack.c.l.b16 %v1336
    %v3387 = vunpack.c.l.b16 %v1337
    %v3388 = vunpack.c.l.b16 %v1338
    %v3389 = vunpack.c.l.b16 %v1339
    %v3390 = vunpack.c.l.b16 %v1340
    %v3391 = vunpack.c.l.b16 %v1341
    %v3392 = vunpack.c.l.b16 %v1342
    %v3393 = vunpack.c.l.b16 %v1343
    %v3394 = vunpack.c.l.b16 %v1344
    %v3395 = vunpack.c.l.b16 %v1345
    %v3396 = vunpack.c.l.b16 %v1346
    %v3397 = vunpack.c.l.b16 %v1347
    %v3398 = vunpack.c.l.b16 %v1348
    %v3399 = vunpack.c.l.b16 %v1349
    %v3400 = vunpack.c.l.b16 %v1350
    %v3401 = vunpack.c.l.b16 %v1351
    %v3402 = vunpack.c.l.b16 %v1352
    %v3403 = vunpack.c.l.b16 %v1353
    %v3404 = vunpack.c.l.b16 %v1354
    %v3405 = vunpack.c.l.b16 %v1355
    %v3406 = vunpack.c.l.b16 %v1356
    %v3407 = vunpack.c.l.b16 %v1357
    %v3408 = vunpack.c.l.b16 %v1358
    %v3409 = vunpack.c.l.b16 %v1359
    %v3410 = vunpack.c.l.b16 %v1360
    %v3411 = vunpack.c.l.b16 %v1361
    %v3412 = vunpack.c.l.b16 %v1362
    %v3413 = vunpack.c.l.b16 %v1363
    %v3414 = vunpack.c.l.b16 %v1364
    %v3415 = vunpack.c.l.b16 %v1365
    %v3416 = vunpack.c.l.b16 %v1366
    %v3417 = vunpack.c.l.b16 %v1367
    %v3418 = vunpack.c.l.b16 %v1368
    %v3419 = vunpack.c.l.b16 %v1369
    %v3420 = vunpack.c.l.b16 %v1370
    %v3421 = vunpack.c.l.b16 %v1371
    %v3422 = vunpack.c.l.b16 %v1372
    %v3423 = vunpack.c.l.b16 %v1373
    %v3424 = vunpack.c.l.b16 %v1374
    %v3425 = vunpack.c.l.b16 %v1375
    %v3426 = vunpack.c.l.b16 %v1376
    %v3427 = vunpack.c.l.b16 %v1377
    %v3428 = vunpack.c.l.b16 %v1378
    %v3429 = vunpack.c.l.b16 %v1379
    %v3430 = vunpack.c.l.b16 %v1380
    %v3431 = vunpack.c.l.b16 %v1381
    %v3432 = vunpack.c.l.b16 %v1382
    %v3433 = vunpack.c.l.b16 %v1383
    %v3434 = vunpack.c.l.b16 %v1384
    %v3435 = vunpack.c.l.b16 %v1385
    %v3436 = vunpack.c.l.b16 %v1386
    %v3437 = vunpack.c.l.b16 %v1387
    %v3438 = vunpack.c.l.b16 %v1388
    %v3439 = vunpack.c.l.b16 %v1389
    %v3440 = vunpack.c.l.b16 %v1390
    %v3441 = vunpack.c.l.b16 %v1391
    %v3442 = vunpack.c.l.b16 %v1392
    %v3443 = vunpack.c.l.b16 %v1393
    %v3444 = vunpack.c.l.b16 %v1394
    %v3445 = vunpack.c.l.b16 %v1395
    %v3446 = vunpack.c.l.b16 %v1396
    %v3447 = vunpack.c.l.b16 %v1397
    %v3448 = vunpack.c.l.b16 %v1398
    %v3449 = vunpack.c.l.b16 %v1399
    %v3450 = vunpack.c.l.b16 %v1400
    %v3451 = vunpack.c.l.b16 %v1401
    %v3452 = vunpack.c.l.b16 %v1402
    %v3453 = vunpack.c.l.b16 %v1403
    %v3454 = vunpack.c.l.b16 %v1404
    %v3455 = vunpack.c.l.b16 %v1405
    %v3456 = vunpack.c.l.b16 %v1406
    %v3457 = vunpack.c.l.b16 %v1407
    %v3458 = vunpack.c.l.b16 %v1408
    %v3459 = vunpack.c.l.b16 %v1409
    %v3460 = vunpack.c.l.b16 %v1410
    %v3461 = vunpack.c.l.b16 %v1411
    %v3462 = vunpack.c.l.b16 %v1412
    %v3463 = vunpack.c.l.b16 %v1413
    %v3464 = vunpack.c.l.b16 %v1414
    %v3465 = vunpack.c.l.b16 %v1415
    %v3466 = vunpack.c.l.b16 %v1416
    %v3467 = vunpack.c.l.b16 %v1417
    %v3468 = vunpack.c.l.b16 %v1418
    %v3469 = vunpack.c.l.b16 %v1419
    %v3470 = vunpack.c.l.b16 %v1420
    %v3471 = vunpack.c.l.b16 %v1421
    %v3472 = vunpack.c.l.b16 %v1422
    %v3473 = vunpack.c.l.b16 %v1423
    %v3474 = vunpack.c.l.b16 %v1424
    %v3475 = vunpack.c.l.b16 %v1425
    %v3476 = vunpack.c.l.b16 %v1426
    %v3477 = vunpack.c.l.b16 %v1427
    %v3478 = vunpack.c.l.b16 %v1428
    %v3479 = vunpack.c.l.b16 %v1429
    %v3480 = vunpack.c.l.b16 %v1430
    %v3481 = vunpack.c.l.b16 %v1431
    %v3482 = vunpack.c.l.b16 %v1432
    %v3483 = vunpack.c.l.b16 %v1433
    %v3484 = vunpack.c.l.b16 %v1434
    %v3485 = vunpack.c.l.b16 %v1435
    %v3486 = vunpack.c.l.b16 %v1436
    %v3487 = vunpack.c.l.b16 %v1437
    %v3488 = vunpack.c.l.b16 %v1438
    %v3489 = vunpack.c.l.b16 %v1439
    %v3490 = vunpack.c.l.b16 %v1440
    %v3491 = vunpack.c.l.b16 %v1441
    %v3492 = vunpack.c.l.b16 %v1442
    %v3493 = vunpack.c.l.b16 %v1443
    %v3494 = vunpack.c.l.b16 %v1444
    %v3495 = vunpack.c.l.b16 %v1445
    %v3496 = vunpack.c.l.b16 %v1446
    %v3497 = vunpack.c.l.b16 %v1447
    %v3498 = vunpack.c.l.b16 %v1448
    %v3499 = vunpack.c.l.b16 %v1449
    %v3500 = vunpack.c.l.b16 %v1450
    %v3501 = vunpack.c.l.b16 %v1451
    %v3502 = vunpack.c.l.b16 %v1452
    %v3503 = vunpack.c.l.b16 %v1453
    %v3504 = vunpack.c.l.b16 %v1454
    %v3505 = vunpack.c.l.b16 %v1455
    %v3506 = vunpack.c.l.b16 %v1456
    %v3507 = vunpack.c.l.b16 %v1457
    %v3508 = vunpack.c.l.b16 %v1458
    %v3509 = vunpack.c.l.b16 %v1459
    %v3510 = vunpack.c.l.b16 %v1460
    %v3511 = vunpack.c.l.b16 %v1461
    %v3512 = vunpack.c.l.b16 %v1462
    %v3513 = vunpack.c.l.b16 %v1463
    %v3514 = vunpack.c.l.b16 %v1464
    %v3515 = vunpack.c.l.b16 %v1465
    %v3516 = vunpack.c.l.b16 %v1466
    %v3517 = vunpack.c.l.b16 %v1467
    %v3518 = vunpack.c.l.b16 %v1468
    %v3519 = vunpack.c.l.b16 %v1469
    %v3520 = vunpack.c.l.b16 %v1470
    %v3521 = vunpack.c.l.b16 %v1471
    %v3522 = vunpack.c.l.b16 %v1472
    %v3523 = vunpack.c.l.b16 %v1473
    %v3524 = vunpack.c.l.b16 %v1474
    %v3525 = vunpack.c.l.b16 %v1475
    %v3526 = vunpack.c.l.b16 %v1476
    %v3527 = vunpack.c.l.b16 %v1477
    %v3528 = vunpack.c.l.b16 %v1478
    %v3529 = vunpack.c.l.b16 %v1479
    %v3530 = vunpack.c.l.b16 %v1480
    %v3531 = vunpack.c.l.b16 %v1481
    %v3532 = vunpack.c.l.b16 %v1482
    %v3533 = vunpack.c.l.b16 %v1483
    %v3534 = vunpack.c.l.b16 %v1484
    %v3535 = vunpack.c.l.b16 %v1485
    %v3536 = vunpack.c.l.b16 %v1486
    %v3537 = vunpack.c.l.b16 %v1487
    %v3538 = vunpack.c.l.b16 %v1488
    %v3539 = vunpack.c.l.b16 %v1489
    %v3540 = vunpack.c.l.b16 %v1490
    %v3541 = vunpack.c.l.b16 %v1491
    %v3542 = vunpack.c.l.b16 %v1492
    %v3543 = vunpack.c.l.b16 %v1493
    %v3544 = vunpack.c.l.b16 %v1494
    %v3545 = vunpack.c.l.b16 %v1495
    %v3546 = vunpack.c.l.b16 %v1496
    %v3547 = vunpack.c.l.b16 %v1497
    %v3548 = vunpack.c.l.b16 %v1498
    %v3549 = vunpack.c.l.b16 %v1499
    %v3550 = vunpack.c.l.b16 %v1500
    %v3551 = vunpack.c.l.b16 %v1501
    %v3552 = vunpack.c.l.b16 %v1502
    %v3553 = vunpack.c.l.b16 %v1503
    %v3554 = vunpack.c.l.b16 %v1504
    %v3555 = vunpack.c.l.b16 %v1505
    %v3556 = vunpack.c.l.b16 %v1506
    %v3557 = vunpack.c.l.b16 %v1507
    %v3558 = vunpack.c.l.b16 %v1508
    %v3559 = vunpack.c.l.b16 %v1509
    %v3560 = vunpack.c.l.b16 %v1510
    %v3561 = vunpack.c.l.b16 %v1511
    %v3562 = vunpack.c.l.b16 %v1512
    %v3563 = vunpack.c.l.b16 %v1513
    %v3564 = vunpack.c.l.b16 %v1514
    %v3565 = vunpack.c.l.b16 %v1515
    %v3566 = vunpack.c.l.b16 %v1516
    %v3567 = vunpack.c.l.b16 %v1517
    %v3568 = vunpack.c.l.b16 %v1518
    %v3569 = vunpack.c.l.b16 %v1519
    %v3570 = vunpack.c.l.b16 %v1520
    %v3571 = vunpack.c.l.b16 %v1521
    %v3572 = vunpack.c.l.b16 %v1522
    %v3573 = vunpack.c.l.b16 %v1523
    %v3574 = vunpack.c.l.b16 %v1524
    %v3575 = vunpack.c.l.b16 %v1525
    %v3576 = vunpack.c.l.b16 %v1526
    %v3577 = vunpack.c.l.b16 %v1527
    %v3578 = vunpack.c.l.b16 %v1528
    %v3579 = vunpack.c.l.b16 %v1529
    %v3580 = vunpack.c.l.b16 %v1530
    %v3581 = vunpack.c.l.b16 %v1531
    %v3582 = vunpack.c.l.b16 %v1532
    %v3583 = vunpack.c.l.b16 %v1533
    %v3584 = vunpack.c.l.b16 %v1534
    %v3585 = vunpack.c.l.b16 %v1535
    %v3586 = vunpack.c.l.b16 %v1536
    %v3587 = vunpack.c.l.b16 %v1537
    %v3588 = vunpack.c.l.b16 %v1538
    %v3589 = vunpack.c.l.b16 %v1539
    %v3590 = vunpack.c.l.b16 %v1540
    %v3591 = vunpack.c.l.b16 %v1541
    %v3592 = vunpack.c.l.b16 %v1542
    %v3593 = vunpack.c.l.b16 %v1543
    %v3594 = vunpack.c.l.b16 %v1544
    %v3595 = vunpack.c.l.b16 %v1545
    %v3596 = vunpack.c.l.b16 %v1546
    %v3597 = vunpack.c.l.b16 %v1547
    %v3598 = vunpack.c.l.b16 %v1548
    %v3599 = vunpack.c.l.b16 %v1549
    %v3600 = vunpack.c.l.b16 %v1550
    %v3601 = vunpack.c.l.b16 %v1551
    %v3602 = vunpack.c.l.b16 %v1552
    %v3603 = vunpack.c.l.b16 %v1553
    %v3604 = vunpack.c.l.b16 %v1554
    %v3605 = vunpack.c.l.b16 %v1555
    %v3606 = vunpack.c.l.b16 %v1556
    %v3607 = vunpack.c.l.b16 %v1557
    %v3608 = vunpack.c.l.b16 %v1558
    %v3609 = vunpack.c.l.b16 %v1559
    %v3610 = vunpack.c.l.b16 %v1560
    %v3611 = vunpack.c.l.b16 %v1561
    %v3612 = vunpack.c.l.b16 %v1562
    %v3613 = vunpack.c.l.b16 %v1563
    %v3614 = vunpack.c.l.b16 %v1564
    %v3615 = vunpack.c.l.b16 %v1565
    %v3616 = vunpack.c.l.b16 %v1566
    %v3617 = vunpack.c.l.b16 %v1567
    %v3618 = vunpack.c.l.b16 %v1568
    %v3619 = vunpack.c.l.b16 %v1569
    %v3620 = vunpack.c.l.b16 %v1570
    %v3621 = vunpack.c.l.b16 %v1571
    %v3622 = vunpack.c.l.b16 %v1572
    %v3623 = vunpack.c.l.b16 %v1573
    %v3624 = vunpack.c.l.b16 %v1574
    %v3625 = vunpack.c.l.b16 %v1575
    %v3626 = vunpack.c.l.b16 %v1576
    %v3627 = vunpack.c.l.b16 %v1577
    %v3628 = vunpack.c.l.b16 %v1578
    %v3629 = vunpack.c.l.b16 %v1579
    %v3630 = vunpack.c.l.b16 %v1580
    %v3631 = vunpack.c.l.b16 %v1581
    %v3632 = vunpack.c.l.b16 %v1582
    %v3633 = vunpack.c.l.b16 %v1583
    %v3634 = vunpack.c.l.b16 %v1584
    %v3635 = vunpack.c.l.b16 %v1585
    %v3636 = vunpack.c.l.b16 %v1586
    %v3637 = vunpack.c.l.b16 %v1587
    %v3638 = vunpack.c.l.b16 %v1588
    %v3639 = vunpack.c.l.b16 %v1589
    %v3640 = vunpack.c.l.b16 %v1590
    %v3641 = vunpack.c.l.b16 %v1591
    %v3642 = vunpack.c.l.b16 %v1592
    %v3643 = vunpack.c.l.b16 %v1593
    %v3644 = vunpack.c.l.b16 %v1594
    %v3645 = vunpack.c.l.b16 %v1595
    %v3646 = vunpack.c.l.b16 %v1596
    %v3647 = vunpack.c.l.b16 %v1597
    %v3648 = vunpack.c.l.b16 %v1598
    %v3649 = vunpack.c.l.b16 %v1599
    %v3650 = vunpack.c.l.b16 %v1600
    %v3651 = vunpack.c.l.b16 %v1601
    %v3652 = vunpack.c.l.b16 %v1602
    %v3653 = vunpack.c.l.b16 %v1603
    %v3654 = vunpack.c.l.b16 %v1604
    %v3655 = vunpack.c.l.b16 %v1605
    %v3656 = vunpack.c.l.b16 %v1606
    %v3657 = vunpack.c.l.b16 %v1607
    %v3658 = vunpack.c.l.b16 %v1608
    %v3659 = vunpack.c.l.b16 %v1609
    %v3660 = vunpack.c.l.b16 %v1610
    %v3661 = vunpack.c.l.b16 %v1611
    %v3662 = vunpack.c.l.b16 %v1612
    %v3663 = vunpack.c.l.b16 %v1613
    %v3664 = vunpack.c.l.b16 %v1614
    %v3665 = vunpack.c.l.b16 %v1615
    %v3666 = vunpack.c.l.b16 %v1616
    %v3667 = vunpack.c.l.b16 %v1617
    %v3668 = vunpack.c.l.b16 %v1618
    %v3669 = vunpack.c.l.b16 %v1619
    %v3670 = vunpack.c.l.b16 %v1620
    %v3671 = vunpack.c.l.b16 %v1621
    %v3672 = vunpack.c.l.b16 %v1622
    %v3673 = vunpack.c.l.b16 %v1623
    %v3674 = vunpack.c.l.b16 %v1624
    %v3675 = vunpack.c.l.b16 %v1625
    %v3676 = vunpack.c.l.b16 %v1626
    %v3677 = vunpack.c.l.b16 %v1627
    %v3678 = vunpack.c.l.b16 %v1628
    %v3679 = vunpack.c.l.b16 %v1629
    %v3680 = vunpack.c.l.b16 %v1630
    %v3681 = vunpack.c.l.b16 %v1631
    %v3682 = vunpack.c.l.b16 %v1632
    %v3683 = vunpack.c.l.b16 %v1633
    %v3684 = vunpack.c.l.b16 %v1634
    %v3685 = vunpack.c.l.b16 %v1635
    %v3686 = vunpack.c.l.b16 %v1636
    %v3687 = vunpack.c.l.b16 %v1637
    %v3688 = vunpack.c.l.b16 %v1638
    %v3689 = vunpack.c.l.b16 %v1639
    %v3690 = vunpack.c.l.b16 %v1640
    %v3691 = vunpack.c.l.b16 %v1641
    %v3692 = vunpack.c.l.b16 %v1642
    %v3693 = vunpack.c.l.b16 %v1643
    %v3694 = vunpack.c.l.b16 %v1644
    %v3695 = vunpack.c.l.b16 %v1645
    %v3696 = vunpack.c.l.b16 %v1646
    %v3697 = vunpack.c.l.b16 %v1647
    %v3698 = vunpack.c.l.b16 %v1648
    %v3699 = vunpack.c.l.b16 %v1649
    %v3700 = vunpack.c.l.b16 %v1650
    %v3701 = vunpack.c.l.b16 %v1651
    %v3702 = vunpack.c.l.b16 %v1652
    %v3703 = vunpack.c.l.b16 %v1653
    %v3704 = vunpack.c.l.b16 %v1654
    %v3705 = vunpack.c.l.b16 %v1655
    %v3706 = vunpack.c.l.b16 %v1656
    %v3707 = vunpack.c.l.b16 %v1657
    %v3708 = vunpack.c.l.b16 %v1658
    %v3709 = vunpack.c.l.b16 %v1659
    %v3710 = vunpack.c.l.b16 %v1660
    %v3711 = vunpack.c.l.b16 %v1661
    %v3712 = vunpack.c.l.b16 %v1662
    %v3713 = vunpack.c.l.b16 %v1663
    %v3714 = vunpack.c.l.b16 %v1664
    %v3715 = vunpack.c.l.b16 %v1665
    %v3716 = vunpack.c.l.b16 %v1666
    %v3717 = vunpack.c.l.b16 %v1667
    %v3718 = vunpack.c.l.b16 %v1668
    %v3719 = vunpack.c.l.b16 %v1669
    %v3720 = vunpack.c.l.b16 %v1670
    %v3721 = vunpack.c.l.b16 %v1671
    %v3722 = vunpack.c.l.b16 %v1672
    %v3723 = vunpack.c.l.b16 %v1673
    %v3724 = vunpack.c.l.b16 %v1674
    %v3725 = vunpack.c.l.b16 %v1675
    %v3726 = vunpack.c.l.b16 %v1676
    %v3727 = vunpack.c.l.b16 %v1677
    %v3728 = vunpack.c.l.b16 %v1678
    %v3729 = vunpack.c.l.b16 %v1679
    %v3730 = vunpack.c.l.b16 %v1680
    %v3731 = vunpack.c.l.b16 %v1681
    %v3732 = vunpack.c.l.b16 %v1682
    %v3733 = vunpack.c.l.b16 %v1683
    %v3734 = vunpack.c.l.b16 %v1684
    %v3735 = vunpack.c.l.b16 %v1685
    %v3736 = vunpack.c.l.b16 %v1686
    %v3737 = vunpack.c.l.b16 %v1687
    %v3738 = vunpack.c.l.b16 %v1688
    %v3739 = vunpack.c.l.b16 %v1689
    %v3740 = vunpack.c.l.b16 %v1690
    %v3741 = vunpack.c.l.b16 %v1691
    %v3742 = vunpack.c.l.b16 %v1692
    %v3743 = vunpack.c.l.b16 %v1693
    %v3744 = vunpack.c.l.b16 %v1694
    %v3745 = vunpack.c.l.b16 %v1695
    %v3746 = vunpack.c.l.b16 %v1696
    %v3747 = vunpack.c.l.b16 %v1697
    %v3748 = vunpack.c.l.b16 %v1698
    %v3749 = vunpack.c.l.b16 %v1699
    %v3750 = vunpack.c.l.b16 %v1700
    %v3751 = vunpack.c.l.b16 %v1701
    %v3752 = vunpack.c.l.b16 %v1702
    %v3753 = vunpack.c.l.b16 %v1703
    %v3754 = vunpack.c.l.b16 %v1704
    %v3755 = vunpack.c.l.b16 %v1705
    %v3756 = vunpack.c.l.b16 %v1706
    %v3757 = vunpack.c.l.b16 %v1707
    %v3758 = vunpack.c.l.b16 %v1708
    %v3759 = vunpack.c.l.b16 %v1709
    %v3760 = vunpack.c.l.b16 %v1710
    %v3761 = vunpack.c.l.b16 %v1711
    %v3762 = vunpack.c.l.b16 %v1712
    %v3763 = vunpack.c.l.b16 %v1713
    %v3764 = vunpack.c.l.b16 %v1714
    %v3765 = vunpack.c.l.b16 %v1715
    %v3766 = vunpack.c.l.b16 %v1716
    %v3767 = vunpack.c.l.b16 %v1717
    %v3768 = vunpack.c.l.b16 %v1718
    %v3769 = vunpack.c.l.b16 %v1719
    %v3770 = vunpack.c.l.b16 %v1720
    %v3771 = vunpack.c.l.b16 %v1721
    %v3772 = vunpack.c.l.b16 %v1722
    %v3773 = vunpack.c.l.b16 %v1723
    %v3774 = vunpack.c.l.b16 %v1724
    %v3775 = vunpack.c.l.b16 %v1725
    %v3776 = vunpack.c.l.b16 %v1726
    %v3777 = vunpack.c.l.b16 %v1727
    %v3778 = vunpack.c.l.b16 %v1728
    %v3779 = vunpack.c.l.b16 %v1729
    %v3780 = vunpack.c.l.b16 %v1730
    %v3781 = vunpack.c.l.b16 %v1731
    %v3782 = vunpack.c.l.b16 %v1732
    %v3783 = vunpack.c.l.b16 %v1733
    %v3784 = vunpack.c.l.b16 %v1734
    %v3785 = vunpack.c.l.b16 %v1735
    %v3786 = vunpack.c.l.b16 %v1736
    %v3787 = vunpack.c.l.b16 %v1737
    %v3788 = vunpack.c.l.b16 %v1738
    %v3789 = vunpack.c.l.b16 %v1739
    %v3790 = vunpack.c.l.b16 %v1740
    %v3791 = vunpack.c.l.b16 %v1741
    %v3792 = vunpack.c.l.b16 %v1742
    %v3793 = vunpack.c.l.b16 %v1743
    %v3794 = vunpack.c.l.b16 %v1744
    %v3795 = vunpack.c.l.b16 %v1745
    %v3796 = vunpack.c.l.b16 %v1746
    %v3797 = vunpack.c.l.b16 %v1747
    %v3798 = vunpack.c.l.b16 %v1748
    %v3799 = vunpack.c.l.b16 %v1749
    %v3800 = vunpack.c.l.b16 %v1750
    %v3801 = vunpack.c.l.b16 %v1751
    %v3802 = vunpack.c.l.b16 %v1752
    %v3803 = vunpack.c.l.b16 %v1753
    %v3804 = vunpack.c.l.b16 %v1754
    %v3805 = vunpack.c.l.b16 %v1755
    %v3806 = vunpack.c.l.b16 %v1756
    %v3807 = vunpack.c.l.b16 %v1757
    %v3808 = vunpack.c.l.b16 %v1758
    %v3809 = vunpack.c.l.b16 %v1759
    %v3810 = vunpack.c.l.b16 %v1760
    %v3811 = vunpack.c.l.b16 %v1761
    %v3812 = vunpack.c.l.b16 %v1762
    %v3813 = vunpack.c.l.b16 %v1763
    %v3814 = vunpack.c.l.b16 %v1764
    %v3815 = vunpack.c.l.b16 %v1765
    %v3816 = vunpack.c.l.b16 %v1766
    %v3817 = vunpack.c.l.b16 %v1767
    %v3818 = vunpack.c.l.b16 %v1768
    %v3819 = vunpack.c.l.b16 %v1769
    %v3820 = vunpack.c.l.b16 %v1770
    %v3821 = vunpack.c.l.b16 %v1771
    %v3822 = vunpack.c.l.b16 %v1772
    %v3823 = vunpack.c.l.b16 %v1773
    %v3824 = vunpack.c.l.b16 %v1774
    %v3825 = vunpack.c.l.b16 %v1775
    %v3826 = vunpack.c.l.b16 %v1776
    %v3827 = vunpack.c.l.b16 %v1777
    %v3828 = vunpack.c.l.b16 %v1778
    %v3829 = vunpack.c.l.b16 %v1779
    %v3830 = vunpack.c.l.b16 %v1780
    %v3831 = vunpack.c.l.b16 %v1781
    %v3832 = vunpack.c.l.b16 %v1782
    %v3833 = vunpack.c.l.b16 %v1783
    %v3834 = vunpack.c.l.b16 %v1784
    %v3835 = vunpack.c.l.b16 %v1785
    %v3836 = vunpack.c.l.b16 %v1786
    %v3837 = vunpack.c.l.b16 %v1787
    %v3838 = vunpack.c.l.b16 %v1788
    %v3839 = vunpack.c.l.b16 %v1789
    %v3840 = vunpack.c.l.b16 %v1790
    %v3841 = vunpack.c.l.b16 %v1791
    %v3842 = vunpack.c.l.b16 %v1792
    %v3843 = vunpack.c.l.b16 %v1793
    %v3844 = vunpack.c.l.b16 %v1794
    %v3845 = vunpack.c.l.b16 %v1795
    %v3846 = vunpack.c.l.b16 %v1796
    %v3847 = vunpack.c.l.b16 %v1797
    %v3848 = vunpack.c.l.b16 %v1798
    %v3849 = vunpack.c.l.b16 %v1799
    %v3850 = vunpack.c.l.b16 %v1800
    %v3851 = vunpack.c.l.b16 %v1801
    %v3852 = vunpack.c.l.b16 %v1802
    %v3853 = vunpack.c.l.b16 %v1803
    %v3854 = vunpack.c.l.b16 %v1804
    %v3855 = vunpack.c.l.b16 %v1805
    %v3856 = vunpack.c.l.b16 %v1806
    %v3857 = vunpack.c.l.b16 %v1807
    %v3858 = vunpack.c.l.b16 %v1808
    %v3859 = vunpack.c.l.b16 %v1809
    %v3860 = vunpack.c.l.b16 %v1810
    %v3861 = vunpack.c.l.b16 %v1811
    %v3862 = vunpack.c.l.b16 %v1812
    %v3863 = vunpack.c.l.b16 %v1813
    %v3864 = vunpack.c.l.b16 %v1814
    %v3865 = vunpack.c.l.b16 %v1815
    %v3866 = vunpack.c.l.b16 %v1816
    %v3867 = vunpack.c.l.b16 %v1817
    %v3868 = vunpack.c.l.b16 %v1818
    %v3869 = vunpack.c.l.b16 %v1819
    %v3870 = vunpack.c.l.b16 %v1820
    %v3871 = vunpack.c.l.b16 %v1821
    %v3872 = vunpack.c.l.b16 %v1822
    %v3873 = vunpack.c.l.b16 %v1823
    %v3874 = vunpack.c.l.b16 %v1824
    %v3875 = vunpack.c.l.b16 %v1825
    %v3876 = vunpack.c.l.b16 %v1826
    %v3877 = vunpack.c.l.b16 %v1827
    %v3878 = vunpack.c.l.b16 %v1828
    %v3879 = vunpack.c.l.b16 %v1829
    %v3880 = vunpack.c.l.b16 %v1830
    %v3881 = vunpack.c.l.b16 %v1831
    %v3882 = vunpack.c.l.b16 %v1832
    %v3883 = vunpack.c.l.b16 %v1833
    %v3884 = vunpack.c.l.b16 %v1834
    %v3885 = vunpack.c.l.b16 %v1835
    %v3886 = vunpack.c.l.b16 %v1836
    %v3887 = vunpack.c.l.b16 %v1837
    %v3888 = vunpack.c.l.b16 %v1838
    %v3889 = vunpack.c.l.b16 %v1839
    %v3890 = vunpack.c.l.b16 %v1840
    %v3891 = vunpack.c.l.b16 %v1841
    %v3892 = vunpack.c.l.b16 %v1842
    %v3893 = vunpack.c.l.b16 %v1843
    %v3894 = vunpack.c.l.b16 %v1844
    %v3895 = vunpack.c.l.b16 %v1845
    %v3896 = vunpack.c.l.b16 %v1846
    %v3897 = vunpack.c.l.b16 %v1847
    %v3898 = vunpack.c.l.b16 %v1848
    %v3899 = vunpack.c.l.b16 %v1849
    %v3900 = vunpack.c.l.b16 %v1850
    %v3901 = vunpack.c.l.b16 %v1851
    %v3902 = vunpack.c.l.b16 %v1852
    %v3903 = vunpack.c.l.b16 %v1853
    %v3904 = vunpack.c.l.b16 %v1854
    %v3905 = vunpack.c.l.b16 %v1855
    %v3906 = vunpack.c.l.b16 %v1856
    %v3907 = vunpack.c.l.b16 %v1857
    %v3908 = vunpack.c.l.b16 %v1858
    %v3909 = vunpack.c.l.b16 %v1859
    %v3910 = vunpack.c.l.b16 %v1860
    %v3911 = vunpack.c.l.b16 %v1861
    %v3912 = vunpack.c.l.b16 %v1862
    %v3913 = vunpack.c.l.b16 %v1863
    %v3914 = vunpack.c.l.b16 %v1864
    %v3915 = vunpack.c.l.b16 %v1865
    %v3916 = vunpack.c.l.b16 %v1866
    %v3917 = vunpack.c.l.b16 %v1867
    %v3918 = vunpack.c.l.b16 %v1868
    %v3919 = vunpack.c.l.b16 %v1869
    %v3920 = vunpack.c.l.b16 %v1870
    %v3921 = vunpack.c.l.b16 %v1871
    %v3922 = vunpack.c.l.b16 %v1872
    %v3923 = vunpack.c.l.b16 %v1873
    %v3924 = vunpack.c.l.b16 %v1874
    %v3925 = vunpack.c.l.b16 %v1875
    %v3926 = vunpack.c.l.b16 %v1876
    %v3927 = vunpack.c.l.b16 %v1877
    %v3928 = vunpack.c.l.b16 %v1878
    %v3929 = vunpack.c.l.b16 %v1879
    %v3930 = vunpack.c.l.b16 %v1880
    %v3931 = vunpack.c.l.b16 %v1881
    %v3932 = vunpack.c.l.b16 %v1882
    %v3933 = vunpack.c.l.b16 %v1883
    %v3934 = vunpack.c.l.b16 %v1884
    %v3935 = vunpack.c.l.b16 %v1885
    %v3936 = vunpack.c.l.b16 %v1886
    %v3937 = vunpack.c.l.b16 %v1887
    %v3938 = vunpack.c.l.b16 %v1888
    %v3939 = vunpack.c.l.b16 %v1889
    %v3940 = vunpack.c.l.b16 %v1890
    %v3941 = vunpack.c.l.b16 %v1891
    %v3942 = vunpack.c.l.b16 %v1892
    %v3943 = vpack.c.b16 %v2920, %v2919
    %v3944 = vpack.c.b16 %v2922, %v2921
    %v3945 = vpack.c.b16 %v2924, %v2923
    %v3946 = vpack.c.b16 %v2926, %v2925
    %v3947 = vpack.c.b16 %v2928, %v2927
    %v3948 = vpack.c.b16 %v2930, %v2929
    %v3949 = vpack.c.b16 %v2932, %v2931
    %v3950 = vpack.c.b16 %v2934, %v2933
    %v3951 = vpack.c.b16 %v2936, %v2935
    %v3952 = vpack.c.b16 %v2938, %v2937
    %v3953 = vpack.c.b16 %v2940, %v2939
    %v3954 = vpack.c.b16 %v2942, %v2941
    %v3955 = vpack.c.b16 %v2944, %v2943
    %v3956 = vpack.c.b16 %v2946, %v2945
    %v3957 = vpack.c.b16 %v2948, %v2947
    %v3958 = vpack.c.b16 %v2950, %v2949
    %v3959 = vpack.c.b16 %v2952, %v2951
    %v3960 = vpack.c.b16 %v2954, %v2953
    %v3961 = vpack.c.b16 %v2956, %v2955
    %v3962 = vpack.c.b16 %v2958, %v2957
    %v3963 = vpack.c.b16 %v2960, %v2959
    %v3964 = vpack.c.b16 %v2962, %v2961
    %v3965 = vpack.c.b16 %v2964, %v2963
    %v3966 = vpack.c.b16 %v2966, %v2965
    %v3967 = vpack.c.b16 %v2968, %v2967
    %v3968 = vpack.c.b16 %v2970, %v2969
    %v3969 = vpack.c.b16 %v2972, %v2971
    %v3970 = vpack.c.b16 %v2974, %v2973
    %v3971 = vpack.c.b16 %v2976, %v2975
    %v3972 = vpack.c.b16 %v2978, %v2977
    %v3973 = vpack.c.b16 %v2980, %v2979
    %v3974 = vpack.c.b16 %v2982, %v2981
    %v3975 = vpack.c.b16 %v2984, %v2983
    %v3976 = vpack.c.b16 %v2986, %v2985
    %v3977 = vpack.c.b16 %v2988, %v2987
    %v3978 = vpack.c.b16 %v2990, %v2989
    %v3979 = vpack.c.b16 %v2992, %v2991
    %v3980 = vpack.c.b16 %v2994, %v2993
    %v3981 = vpack.c.b16 %v2996, %v2995
    %v3982 = vpack.c.b16 %v2998, %v2997
    %v3983 = vpack.c.b16 %v3000, %v2999
    %v3984 = vpack.c.b16 %v3002, %v3001
    %v3985 = vpack.c.b16 %v3004, %v3003
    %v3986 = vpack.c.b16 %v3006, %v3005
    %v3987 = vpack.c.b16 %v3008, %v3007
    %v3988 = vpack.c.b16 %v3010, %v3009
    %v3989 = vpack.c.b16 %v3012, %v3011
    %v3990 = vpack.c.b16 %v3014, %v3013
    %v3991 = vpack.c.b16 %v3016, %v3015
    %v3992 = vpack.c.b16 %v3018, %v3017
    %v3993 = vpack.c.b16 %v3020, %v3019
    %v3994 = vpack.c.b16 %v3022, %v3021
    %v3995 = vpack.c.b16 %v3024, %v3023
    %v3996 = vpack.c.b16 %v3026, %v3025
    %v3997 = vpack.c.b16 %v3028, %v3027
    %v3998 = vpack.c.b16 %v3030, %v3029
    %v3999 = vpack.c.b16 %v3032, %v3031
    %v4000 = vpack.c.b16 %v3034, %v3033
    %v4001 = vpack.c.b16 %v3036, %v3035
    %v4002 = vpack.c.b16 %v3038, %v3037
    %v4003 = vpack.c.b16 %v3040, %v3039
    %v4004 = vpack.c.b16 %v3042, %v3041
    %v4005 = vpack.c.b16 %v3044, %v3043
    %v4006 = vpack.c.b16 %v3046, %v3045
    %v4007 = vpack.c.b16 %v3048, %v3047
    %v4008 = vpack.c.b16 %v3050, %v3049
    %v4009 = vpack.c.b16 %v3052, %v3051
    %v4010 = vpack.c.b16 %v3054, %v3053
    %v4011 = vpack.c.b16 %v3056, %v3055
    %v4012 = vpack.c.b16 %v3058, %v3057
    %v4013 = vpack.c.b16 %v3060, %v3059
    %v4014 = vpack.c.b16 %v3062, %v3061
    %v4015 = vpack.c.b16 %v3064, %v3063
    %v4016 = vpack.c.b16 %v3066, %v3065
    %v4017 = vpack.c.b16 %v3068, %v3067
    %v4018 = vpack.c.b16 %v3070, %v3069
    %v4019 = vpack.c.b16 %v3072, %v3071
    %v4020 = vpack.c.b16 %v3074, %v3073
    %v4021 = vpack.c.b16 %v3076, %v3075
    %v4022 = vpack.c.b16 %v3078, %v3077
    %v4023 = vpack.c.b16 %v3080, %v3079
    %v4024 = vpack.c.b16 %v3082, %v3081
    %v4025 = vpack.c.b16 %v3084, %v3083
    %v4026 = vpack.c.b16 %v3086, %v3085
    %v4027 = vpack.c.b16 %v3088, %v3087
    %v4028 = vpack.c.b16 %v3090, %v3089
    %v4029 = vpack.c.b16 %v3092, %v3091
    %v4030 = vpack.c.b16 %v3094, %v3093
    %v4031 = vpack.c.b16 %v3096, %v3095
    %v4032 = vpack.c.b16 %v3098, %v3097
    %v4033 = vpack.c.b16 %v3100, %v3099
    %v4034 = vpack.c.b16 %v3102, %v3101
    %v4035 = vpack.c.b16 %v3104, %v3103
    %v4036 = vpack.c.b16 %v3106, %v3105
    %v4037 = vpack.c.b16 %v3108, %v3107
    %v4038 = vpack.c.b16 %v3110, %v3109
    %v4039 = vpack.c.b16 %v3112, %v3111
    %v4040 = vpack.c.b16 %v3114, %v3113
    %v4041 = vpack.c.b16 %v3116, %v3115
    %v4042 = vpack.c.b16 %v3118, %v3117
    %v4043 = vpack.c.b16 %v3120, %v3119
    %v4044 = vpack.c.b16 %v3122, %v3121
    %v4045 = vpack.c.b16 %v3124, %v3123
    %v4046 = vpack.c.b16 %v3126, %v3125
    %v4047 = vpack.c.b16 %v3128, %v3127
    %v4048 = vpack.c.b16 %v3130, %v3129
    %v4049 = vpack.c.b16 %v3132, %v3131
    %v4050 = vpack.c.b16 %v3134, %v3133
    %v4051 = vpack.c.b16 %v3136, %v3135
    %v4052 = vpack.c.b16 %v3138, %v3137
    %v4053 = vpack.c.b16 %v3140, %v3139
    %v4054 = vpack.c.b16 %v3142, %v3141
    %v4055 = vpack.c.b16 %v3144, %v3143
    %v4056 = vpack.c.b16 %v3146, %v3145
    %v4057 = vpack.c.b16 %v3148, %v3147
    %v4058 = vpack.c.b16 %v3150, %v3149
    %v4059 = vpack.c.b16 %v3152, %v3151
    %v4060 = vpack.c.b16 %v3154, %v3153
    %v4061 = vpack.c.b16 %v3156, %v3155
    %v4062 = vpack.c.b16 %v3158, %v3157
    %v4063 = vpack.c.b16 %v3160, %v3159
    %v4064 = vpack.c.b16 %v3162, %v3161
    %v4065 = vpack.c.b16 %v3164, %v3163
    %v4066 = vpack.c.b16 %v3166, %v3165
    %v4067 = vpack.c.b16 %v3168, %v3167
    %v4068 = vpack.c.b16 %v3170, %v3169
    %v4069 = vpack.c.b16 %v3172, %v3171
    %v4070 = vpack.c.b16 %v3174, %v3173
    %v4071 = vpack.c.b16 %v3176, %v3175
    %v4072 = vpack.c.b16 %v3178, %v3177
    %v4073 = vpack.c.b16 %v3180, %v3179
    %v4074 = vpack.c.b16 %v3182, %v3181
    %v4075 = vpack.c.b16 %v3184, %v3183
    %v4076 = vpack.c.b16 %v3186, %v3185
    %v4077 = vpack.c.b16 %v3188, %v3187
    %v4078 = vpack.c.b16 %v3190, %v3189
    %v4079 = vpack.c.b16 %v3192, %v3191
    %v4080 = vpack.c.b16 %v3194, %v3193
    %v4081 = vpack.c.b16 %v3196, %v3195
    %v4082 = vpack.c.b16 %v3198, %v3197
    %v4083 = vpack.c.b16 %v3200, %v3199
    %v4084 = vpack.c.b16 %v3202, %v3201
    %v4085 = vpack.c.b16 %v3204, %v3203
    %v4086 = vpack.c.b16 %v3206, %v3205
    %v4087 = vpack.c.b16 %v3208, %v3207
    %v4088 = vpack.c.b16 %v3210, %v3209
    %v4089 = vpack.c.b16 %v3212, %v3211
    %v4090 = vpack.c.b16 %v3214, %v3213
    %v4091 = vpack.c.b16 %v3216, %v3215
    %v4092 = vpack.c.b16 %v3218, %v3217
    %v4093 = vpack.c.b16 %v3220, %v3219
    %v4094 = vpack.c.b16 %v3222, %v3221
    %v4095 = vpack.c.b16 %v3224, %v3223
    %v4096 = vpack.c.b16 %v3226, %v3225
    %v4097 = vpack.c.b16 %v3228, %v3227
    %v4098 = vpack.c.b16 %v3230, %v3229
    %v4099 = vpack.c.b16 %v3232, %v3231
    %v4100 = vpack.c.b16 %v3234, %v3233
    %v4101 = vpack.c.b16 %v3236, %v3235
    %v4102 = vpack.c.b16 %v3238, %v3237
    %v4103 = vpack.c.b16 %v3240, %v3239
    %v4104 = vpack.c.b16 %v3242, %v3241
    %v4105 = vpack.c.b16 %v3244, %v3243
    %v4106 = vpack.c.b16 %v3246, %v3245
    %v4107 = vpack.c.b16 %v3248, %v3247
    %v4108 = vpack.c.b16 %v3250, %v3249
    %v4109 = vpack.c.b16 %v3252, %v3251
    %v4110 = vpack.c.b16 %v3254, %v3253
    %v4111 = vpack.c.b16 %v3256, %v3255
    %v4112 = vpack.c.b16 %v3258, %v3257
    %v4113 = vpack.c.b16 %v3260, %v3259
    %v4114 = vpack.c.b16 %v3262, %v3261
    %v4115 = vpack.c.b16 %v3264, %v3263
    %v4116 = vpack.c.b16 %v3266, %v3265
    %v4117 = vpack.c.b16 %v3268, %v3267
    %v4118 = vpack.c.b16 %v3270, %v3269
    %v4119 = vpack.c.b16 %v3272, %v3271
    %v4120 = vpack.c.b16 %v3274, %v3273
    %v4121 = vpack.c.b16 %v3276, %v3275
    %v4122 = vpack.c.b16 %v3278, %v3277
    %v4123 = vpack.c.b16 %v3280, %v3279
    %v4124 = vpack.c.b16 %v3282, %v3281
    %v4125 = vpack.c.b16 %v3284, %v3283
    %v4126 = vpack.c.b16 %v3286, %v3285
    %v4127 = vpack.c.b16 %v3288, %v3287
    %v4128 = vpack.c.b16 %v3290, %v3289
    %v4129 = vpack.c.b16 %v3292, %v3291
    %v4130 = vpack.c.b16 %v3294, %v3293
    %v4131 = vpack.c.b16 %v3296, %v3295
    %v4132 = vpack.c.b16 %v3298, %v3297
    %v4133 = vpack.c.b16 %v3300, %v3299
    %v4134 = vpack.c.b16 %v3302, %v3301
    %v4135 = vpack.c.b16 %v3304, %v3303
    %v4136 = vpack.c.b16 %v3306, %v3305
    %v4137 = vpack.c.b16 %v3308, %v3307
    %v4138 = vpack.c.b16 %v3310, %v3309
    %v4139 = vpack.c.b16 %v3312, %v3311
    %v4140 = vpack.c.b16 %v3314, %v3313
    %v4141 = vpack.c.b16 %v3316, %v3315
    %v4142 = vpack.c.b16 %v3318, %v3317
    %v4143 = vpack.c.b16 %v3320, %v3319
    %v4144 = vpack.c.b16 %v3322, %v3321
    %v4145 = vpack.c.b16 %v3324, %v3323
    %v4146 = vpack.c.b16 %v3326, %v3325
    %v4147 = vpack.c.b16 %v3328, %v3327
    %v4148 = vpack.c.b16 %v3330, %v3329
    %v4149 = vpack.c.b16 %v3332, %v3331
    %v4150 = vpack.c.b16 %v3334, %v3333
    %v4151 = vpack.c.b16 %v3336, %v3335
    %v4152 = vpack.c.b16 %v3338, %v3337
    %v4153 = vpack.c.b16 %v3340, %v3339
    %v4154 = vpack.c.b16 %v3342, %v3341
    %v4155 = vpack.c.b16 %v3344, %v3343
    %v4156 = vpack.c.b16 %v3346, %v3345
    %v4157 = vpack.c.b16 %v3348, %v3347
    %v4158 = vpack.c.b16 %v3350, %v3349
    %v4159 = vpack.c.b16 %v3352, %v3351
    %v4160 = vpack.c.b16 %v3354, %v3353
    %v4161 = vpack.c.b16 %v3356, %v3355
    %v4162 = vpack.c.b16 %v3358, %v3357
    %v4163 = vpack.c.b16 %v3360, %v3359
    %v4164 = vpack.c.b16 %v3362, %v3361
    %v4165 = vpack.c.b16 %v3364, %v3363
    %v4166 = vpack.c.b16 %v3366, %v3365
    %v4167 = vpack.c.b16 %v3368, %v3367
    %v4168 = vpack.c.b16 %v3370, %v3369
    %v4169 = vpack.c.b16 %v3372, %v3371
    %v4170 = vpack.c.b16 %v3374, %v3373
    %v4171 = vpack.c.b16 %v3376, %v3375
    %v4172 = vpack.c.b16 %v3378, %v3377
    %v4173 = vpack.c.b16 %v3380, %v3379
    %v4174 = vpack.c.b16 %v3382, %v3381
    %v4175 = vpack.c.b16 %v3384, %v3383
    %v4176 = vpack.c.b16 %v3386, %v3385
    %v4177 = vpack.c.b16 %v3388, %v3387
    %v4178 = vpack.c.b16 %v3390, %v3389
    %v4179 = vpack.c.b16 %v3392, %v3391
    %v4180 = vpack.c.b16 %v3394, %v3393
    %v4181 = vpack.c.b16 %v3396, %v3395
    %v4182 = vpack.c.b16 %v3398, %v3397
    %v4183 = vpack.c.b16 %v3400, %v3399
    %v4184 = vpack.c.b16 %v3402, %v3401
    %v4185 = vpack.c.b16 %v3404, %v3403
    %v4186 = vpack.c.b16 %v3406, %v3405
    %v4187 = vpack.c.b16 %v3408, %v3407
    %v4188 = vpack.c.b16 %v3410, %v3409
    %v4189 = vpack.c.b16 %v3412, %v3411
    %v4190 = vpack.c.b16 %v3414, %v3413
    %v4191 = vpack.c.b16 %v3416, %v3415
    %v4192 = vpack.c.b16 %v3418, %v3417
    %v4193 = vpack.c.b16 %v3420, %v3419
    %v4194 = vpack.c.b16 %v3422, %v3421
    %v4195 = vpack.c.b16 %v3424, %v3423
    %v4196 = vpack.c.b16 %v3426, %v3425
    %v4197 = vpack.c.b16 %v3428, %v3427
    %v4198 = vpack.c.b16 %v3430, %v3429
    %v4199 = vpack.c.b16 %v3432, %v3431
    %v4200 = vpack.c.b16 %v3434, %v3433
    %v4201 = vpack.c.b16 %v3436, %v3435
    %v4202 = vpack.c.b16 %v3438, %v3437
    %v4203 = vpack.c.b16 %v3440, %v3439
    %v4204 = vpack.c.b16 %v3442, %v3441
    %v4205 = vpack.c.b16 %v3444, %v3443
    %v4206 = vpack.c.b16 %v3446, %v3445
    %v4207 = vpack.c.b16 %v3448, %v3447
    %v4208 = vpack.c.b16 %v3450, %v3449
    %v4209 = vpack.c.b16 %v3452, %v3451
    %v4210 = vpack.c.b16 %v3454, %v3453
    %v4211 = vpack.c.b16 %v3456, %v3455
    %v4212 = vpack.c.b16 %v3458, %v3457
    %v4213 = vpack.c.b16 %v3460, %v3459
    %v4214 = vpack.c.b16 %v3462, %v3461
    %v4215 = vpack.c.b16 %v3464, %v3463
    %v4216 = vpack.c.b16 %v3466, %v3465
    %v4217 = vpack.c.b16 %v3468, %v3467
    %v4218 = vpack.c.b16 %v3470, %v3469
    %v4219 = vpack.c.b16 %v3472, %v3471
    %v4220 = vpack.c.b16 %v3474, %v3473
    %v4221 = vpack.c.b16 %v3476, %v3475
    %v4222 = vpack.c.b16 %v3478, %v3477
    %v4223 = vpack.c.b16 %v3480, %v3479
    %v4224 = vpack.c.b16 %v3482, %v3481
    %v4225 = vpack.c.b16 %v3484, %v3483
    %v4226 = vpack.c.b16 %v3486, %v3485
    %v4227 = vpack.c.b16 %v3488, %v3487
    %v4228 = vpack.c.b16 %v3490, %v3489
    %v4229 = vpack.c.b16 %v3492, %v3491
    %v4230 = vpack.c.b16 %v3494, %v3493
    %v4231 = vpack.c.b16 %v3496, %v3495
    %v4232 = vpack.c.b16 %v3498, %v3497
    %v4233 = vpack.c.b16 %v3500, %v3499
    %v4234 = vpack.c.b16 %v3502, %v3501
    %v4235 = vpack.c.b16 %v3504, %v3503
    %v4236 = vpack.c.b16 %v3506, %v3505
    %v4237 = vpack.c.b16 %v3508, %v3507
    %v4238 = vpack.c.b16 %v3510, %v3509
    %v4239 = vpack.c.b16 %v3512, %v3511
    %v4240 = vpack.c.b16 %v3514, %v3513
    %v4241 = vpack.c.b16 %v3516, %v3515
    %v4242 = vpack.c.b16 %v3518, %v3517
    %v4243 = vpack.c.b16 %v3520, %v3519
    %v4244 = vpack.c.b16 %v3522, %v3521
    %v4245 = vpack.c.b16 %v3524, %v3523
    %v4246 = vpack.c.b16 %v3526, %v3525
    %v4247 = vpack.c.b16 %v3528, %v3527
    %v4248 = vpack.c.b16 %v3530, %v3529
    %v4249 = vpack.c.b16 %v3532, %v3531
    %v4250 = vpack.c.b16 %v3534, %v3533
    %v4251 = vpack.c.b16 %v3536, %v3535
    %v4252 = vpack.c.b16 %v3538, %v3537
    %v4253 = vpack.c.b16 %v3540, %v3539
    %v4254 = vpack.c.b16 %v3542, %v3541
    %v4255 = vpack.c.b16 %v3544, %v3543
    %v4256 = vpack.c.b16 %v3546, %v3545
    %v4257 = vpack.c.b16 %v3548, %v3547
    %v4258 = vpack.c.b16 %v3550, %v3549
    %v4259 = vpack.c.b16 %v3552, %v3551
    %v4260 = vpack.c.b16 %v3554, %v3553
    %v4261 = vpack.c.b16 %v3556, %v3555
    %v4262 = vpack.c.b16 %v3558, %v3557
    %v4263 = vpack.c.b16 %v3560, %v3559
    %v4264 = vpack.c.b16 %v3562, %v3561
    %v4265 = vpack.c.b16 %v3564, %v3563
    %v4266 = vpack.c.b16 %v3566, %v3565
    %v4267 = vpack.c.b16 %v3568, %v3567
    %v4268 = vpack.c.b16 %v3570, %v3569
    %v4269 = vpack.c.b16 %v3572, %v3571
    %v4270 = vpack.c.b16 %v3574, %v3573
    %v4271 = vpack.c.b16 %v3576, %v3575
    %v4272 = vpack.c.b16 %v3578, %v3577
    %v4273 = vpack.c.b16 %v3580, %v3579
    %v4274 = vpack.c.b16 %v3582, %v3581
    %v4275 = vpack.c.b16 %v3584, %v3583
    %v4276 = vpack.c.b16 %v3586, %v3585
    %v4277 = vpack.c.b16 %v3588, %v3587
    %v4278 = vpack.c.b16 %v3590, %v3589
    %v4279 = vpack.c.b16 %v3592, %v3591
    %v4280 = vpack.c.b16 %v3594, %v3593
    %v4281 = vpack.c.b16 %v3596, %v3595
    %v4282 = vpack.c.b16 %v3598, %v3597
    %v4283 = vpack.c.b16 %v3600, %v3599
    %v4284 = vpack.c.b16 %v3602, %v3601
    %v4285 = vpack.c.b16 %v3604, %v3603
    %v4286 = vpack.c.b16 %v3606, %v3605
    %v4287 = vpack.c.b16 %v3608, %v3607
    %v4288 = vpack.c.b16 %v3610, %v3609
    %v4289 = vpack.c.b16 %v3612, %v3611
    %v4290 = vpack.c.b16 %v3614, %v3613
    %v4291 = vpack.c.b16 %v3616, %v3615
    %v4292 = vpack.c.b16 %v3618, %v3617
    %v4293 = vpack.c.b16 %v3620, %v3619
    %v4294 = vpack.c.b16 %v3622, %v3621
    %v4295 = vpack.c.b16 %v3624, %v3623
    %v4296 = vpack.c.b16 %v3626, %v3625
    %v4297 = vpack.c.b16 %v3628, %v3627
    %v4298 = vpack.c.b16 %v3630, %v3629
    %v4299 = vpack.c.b16 %v3632, %v3631
    %v4300 = vpack.c.b16 %v3634, %v3633
    %v4301 = vpack.c.b16 %v3636, %v3635
    %v4302 = vpack.c.b16 %v3638, %v3637
    %v4303 = vpack.c.b16 %v3640, %v3639
    %v4304 = vpack.c.b16 %v3642, %v3641
    %v4305 = vpack.c.b16 %v3644, %v3643
    %v4306 = vpack.c.b16 %v3646, %v3645
    %v4307 = vpack.c.b16 %v3648, %v3647
    %v4308 = vpack.c.b16 %v3650, %v3649
    %v4309 = vpack.c.b16 %v3652, %v3651
    %v4310 = vpack.c.b16 %v3654, %v3653
    %v4311 = vpack.c.b16 %v3656, %v3655
    %v4312 = vpack.c.b16 %v3658, %v3657
    %v4313 = vpack.c.b16 %v3660, %v3659
    %v4314 = vpack.c.b16 %v3662, %v3661
    %v4315 = vpack.c.b16 %v3664, %v3663
    %v4316 = vpack.c.b16 %v3666, %v3665
    %v4317 = vpack.c.b16 %v3668, %v3667
    %v4318 = vpack.c.b16 %v3670, %v3669
    %v4319 = vpack.c.b16 %v3672, %v3671
    %v4320 = vpack.c.b16 %v3674, %v3673
    %v4321 = vpack.c.b16 %v3676, %v3675
    %v4322 = vpack.c.b16 %v3678, %v3677
    %v4323 = vpack.c.b16 %v3680, %v3679
    %v4324 = vpack.c.b16 %v3682, %v3681
    %v4325 = vpack.c.b16 %v3684, %v3683
    %v4326 = vpack.c.b16 %v3686, %v3685
    %v4327 = vpack.c.b16 %v3688, %v3687
    %v4328 = vpack.c.b16 %v3690, %v3689
    %v4329 = vpack.c.b16 %v3692, %v3691
    %v4330 = vpack.c.b16 %v3694, %v3693
    %v4331 = vpack.c.b16 %v3696, %v3695
    %v4332 = vpack.c.b16 %v3698, %v3697
    %v4333 = vpack.c.b16 %v3700, %v3699
    %v4334 = vpack.c.b16 %v3702, %v3701
    %v4335 = vpack.c.b16 %v3704, %v3703
    %v4336 = vpack.c.b16 %v3706, %v3705
    %v4337 = vpack.c.b16 %v3708, %v3707
    %v4338 = vpack.c.b16 %v3710, %v3709
    %v4339 = vpack.c.b16 %v3712, %v3711
    %v4340 = vpack.c.b16 %v3714, %v3713
    %v4341 = vpack.c.b16 %v3716, %v3715
    %v4342 = vpack.c.b16 %v3718, %v3717
    %v4343 = vpack.c.b16 %v3720, %v3719
    %v4344 = vpack.c.b16 %v3722, %v3721
    %v4345 = vpack.c.b16 %v3724, %v3723
    %v4346 = vpack.c.b16 %v3726, %v3725
    %v4347 = vpack.c.b16 %v3728, %v3727
    %v4348 = vpack.c.b16 %v3730, %v3729
    %v4349 = vpack.c.b16 %v3732, %v3731
    %v4350 = vpack.c.b16 %v3734, %v3733
    %v4351 = vpack.c.b16 %v3736, %v3735
    %v4352 = vpack.c.b16 %v3738, %v3737
    %v4353 = vpack.c.b16 %v3740, %v3739
    %v4354 = vpack.c.b16 %v3742, %v3741
    %v4355 = vpack.c.b16 %v3744, %v3743
    %v4356 = vpack.c.b16 %v3746, %v3745
    %v4357 = vpack.c.b16 %v3748, %v3747
    %v4358 = vpack.c.b16 %v3750, %v3749
    %v4359 = vpack.c.b16 %v3752, %v3751
    %v4360 = vpack.c.b16 %v3754, %v3753
    %v4361 = vpack.c.b16 %v3756, %v3755
    %v4362 = vpack.c.b16 %v3758, %v3757
    %v4363 = vpack.c.b16 %v3760, %v3759
    %v4364 = vpack.c.b16 %v3762, %v3761
    %v4365 = vpack.c.b16 %v3764, %v3763
    %v4366 = vpack.c.b16 %v3766, %v3765
    %v4367 = vpack.c.b16 %v3768, %v3767
    %v4368 = vpack.c.b16 %v3770, %v3769
    %v4369 = vpack.c.b16 %v3772, %v3771
    %v4370 = vpack.c.b16 %v3774, %v3773
    %v4371 = vpack.c.b16 %v3776, %v3775
    %v4372 = vpack.c.b16 %v3778, %v3777
    %v4373 = vpack.c.b16 %v3780, %v3779
    %v4374 = vpack.c.b16 %v3782, %v3781
    %v4375 = vpack.c.b16 %v3784, %v3783
    %v4376 = vpack.c.b16 %v3786, %v3785
    %v4377 = vpack.c.b16 %v3788, %v3787
    %v4378 = vpack.c.b16 %v3790, %v3789
    %v4379 = vpack.c.b16 %v3792, %v3791
    %v4380 = vpack.c.b16 %v3794, %v3793
    %v4381 = vpack.c.b16 %v3796, %v3795
    %v4382 = vpack.c.b16 %v3798, %v3797
    %v4383 = vpack.c.b16 %v3800, %v3799
    %v4384 = vpack.c.b16 %v3802, %v3801
    %v4385 = vpack.c.b16 %v3804, %v3803
    %v4386 = vpack.c.b16 %v3806, %v3805
    %v4387 = vpack.c.b16 %v3808, %v3807
    %v4388 = vpack.c.b16 %v3810, %v3809
    %v4389 = vpack.c.b16 %v3812, %v3811
    %v4390 = vpack.c.b16 %v3814, %v3813
    %v4391 = vpack.c.b16 %v3816, %v3815
    %v4392 = vpack.c.b16 %v3818, %v3817
    %v4393 = vpack.c.b16 %v3820, %v3819
    %v4394 = vpack.c.b16 %v3822, %v3821
    %v4395 = vpack.c.b16 %v3824, %v3823
    %v4396 = vpack.c.b16 %v3826, %v3825
    %v4397 = vpack.c.b16 %v3828, %v3827
    %v4398 = vpack.c.b16 %v3830, %v3829
    %v4399 = vpack.c.b16 %v3832, %v3831
    %v4400 = vpack.c.b16 %v3834, %v3833
    %v4401 = vpack.c.b16 %v3836, %v3835
    %v4402 = vpack.c.b16 %v3838, %v3837
    %v4403 = vpack.c.b16 %v3840, %v3839
    %v4404 = vpack.c.b16 %v3842, %v3841
    %v4405 = vpack.c.b16 %v3844, %v3843
    %v4406 = vpack.c.b16 %v3846, %v3845
    %v4407 = vpack.c.b16 %v3848, %v3847
    %v4408 = vpack.c.b16 %v3850, %v3849
    %v4409 = vpack.c.b16 %v3852, %v3851
    %v4410 = vpack.c.b16 %v3854, %v3853
    %v4411 = vpack.c.b16 %v3856, %v3855
    %v4412 = vpack.c.b16 %v3858, %v3857
    %v4413 = vpack.c.b16 %v3860, %v3859
    %v4414 = vpack.c.b16 %v3862, %v3861
    %v4415 = vpack.c.b16 %v3864, %v3863
    %v4416 = vpack.c.b16 %v3866, %v3865
    %v4417 = vpack.c.b16 %v3868, %v3867
    %v4418 = vpack.c.b16 %v3870, %v3869
    %v4419 = vpack.c.b16 %v3872, %v3871
    %v4420 = vpack.c.b16 %v3874, %v3873
    %v4421 = vpack.c.b16 %v3876, %v3875
    %v4422 = vpack.c.b16 %v3878, %v3877
    %v4423 = vpack.c.b16 %v3880, %v3879
    %v4424 = vpack.c.b16 %v3882, %v3881
    %v4425 = vpack.c.b16 %v3884, %v3883
    %v4426 = vpack.c.b16 %v3886, %v3885
    %v4427 = vpack.c.b16 %v3888, %v3887
    %v4428 = vpack.c.b16 %v3890, %v3889
    %v4429 = vpack.c.b16 %v3892, %v3891
    %v4430 = vpack.c.b16 %v3894, %v3893
    %v4431 = vpack.c.b16 %v3896, %v3895
    %v4432 = vpack.c.b16 %v3898, %v3897
    %v4433 = vpack.c.b16 %v3900, %v3899
    %v4434 = vpack.c.b16 %v3902, %v3901
    %v4435 = vpack.c.b16 %v3904, %v3903
    %v4436 = vpack.c.b16 %v3906, %v3905
    %v4437 = vpack.c.b16 %v3908, %v3907
    %v4438 = vpack.c.b16 %v3910, %v3909
    %v4439 = vpack.c.b16 %v3912, %v3911
    %v4440 = vpack.c.b16 %v3914, %v3913
    %v4441 = vpack.c.b16 %v3916, %v3915
    %v4442 = vpack.c.b16 %v3918, %v3917
    %v4443 = vpack.c.b16 %v3920, %v3919
    %v4444 = vpack.c.b16 %v3922, %v3921
    %v4445 = vpack.c.b16 %v3924, %v3923
    %v4446 = vpack.c.b16 %v3926, %v3925
    %v4447 = vpack.c.b16 %v3928, %v3927
    %v4448 = vpack.c.b16 %v3930, %v3929
    %v4449 = vpack.c.b16 %v3932, %v3931
    %v4450 = vpack.c.b16 %v3934, %v3933
    %v4451 = vpack.c.b16 %v3936, %v3935
    %v4452 = vpack.c.b16 %v3938, %v3937
    %v4453 = vpack.c.b16 %v3940, %v3939
    %v4454 = vpack.c.b16 %v3942, %v3941
    %4967 = vmatprep.subr.bf16.mxu0 0
    %4968 = vmatpush1.bf16.msra.mxu0 %v3950
    %4969 = vmatprep.subr.bf16.mxu0 0
    %4970 = vmatpush1.bf16.msra.mxu0 %v3949
    %4971 = vmatprep.subr.bf16.mxu0 0
    %4972 = vmatpush1.bf16.msra.mxu0 %v3948
    %4973 = vmatprep.subr.bf16.mxu0 0
    %4974 = vmatpush1.bf16.msra.mxu0 %v3947
    %4975 = vmatprep.subr.bf16.mxu0 0
    %4976 = vmatpush1.bf16.msra.mxu0 %v3946
    %4977 = vmatprep.subr.bf16.mxu0 0
    %4978 = vmatpush1.bf16.msra.mxu0 %v3945
    %4979 = vmatprep.subr.bf16.mxu0 0
    %4980 = vmatpush1.bf16.msra.mxu0 %v3944
    %4981 = vmatprep.subr.bf16.mxu0 0
    %4982 = vmatpush1.bf16.msra.mxu0 %v3943
    %4983 = vmatprep.subr.bf16.mxu0 0
    %4984 = vmatpush2.bf16.msra.mxu0 %v3958
    %4985 = vmatprep.subr.bf16.mxu0 0
    %4986 = vmatpush2.bf16.msra.mxu0 %v3957
    %4987 = vmatprep.subr.bf16.mxu0 0
    %4988 = vmatpush2.bf16.msra.mxu0 %v3956
    %4989 = vmatprep.subr.bf16.mxu0 0
    %4990 = vmatpush2.bf16.msra.mxu0 %v3955
    %4991 = vmatprep.subr.bf16.mxu0 0
    %4992 = vmatpush2.bf16.msra.mxu0 %v3954
    %4993 = vmatprep.subr.bf16.mxu0 0
    %4994 = vmatpush2.bf16.msra.mxu0 %v3953
    %4995 = vmatprep.subr.bf16.mxu0 0
    %4996 = vmatpush2.bf16.msra.mxu0 %v3952
    %4997 = vmatprep.subr.bf16.mxu0 0
    %4998 = vmatpush2.bf16.msra.mxu0 %v3951
    %4999 = vmatprep.mubr.bf16.mxu0 %v806
    %5000 = vmatmul.mubr.bf16.gmra.mxu0 %v805
    %v5001 = vpop.f32.mrf.mxu0
    %v5002 = vadd.f32 %v1894, %v5001
    %v5003 = vpop.f32.mrf.mxu0
    %v5004 = vpop.f32.mrf.mxu0
    %v5005 = vpop.f32.mrf.mxu0
    %5006 = vdwg.mxu0
    %5007 = vmatprep.subr.bf16.mxu0 0
    %5008 = vmatpush1.bf16.msra.mxu0 %v3966
    %5009 = vmatprep.subr.bf16.mxu0 0
    %5010 = vmatpush1.bf16.msra.mxu0 %v3965
    %5011 = vmatprep.subr.bf16.mxu0 0
    %5012 = vmatpush1.bf16.msra.mxu0 %v3964
    %5013 = vmatprep.subr.bf16.mxu0 0
    %5014 = vmatpush1.bf16.msra.mxu0 %v3963
    %5015 = vmatprep.subr.bf16.mxu0 0
    %5016 = vmatpush1.bf16.msra.mxu0 %v3962
    %5017 = vmatprep.subr.bf16.mxu0 0
    %5018 = vmatpush1.bf16.msra.mxu0 %v3961
    %5019 = vmatprep.subr.bf16.mxu0 0
    %5020 = vmatpush1.bf16.msra.mxu0 %v3960
    %5021 = vmatprep.subr.bf16.mxu0 0
    %5022 = vmatpush1.bf16.msra.mxu0 %v3959
    %5023 = vmatprep.subr.bf16.mxu0 0
    %5024 = vmatpush2.bf16.msra.mxu0 %v3974
    %5025 = vmatprep.subr.bf16.mxu0 0
    %5026 = vmatpush2.bf16.msra.mxu0 %v3973
    %5027 = vmatprep.subr.bf16.mxu0 0
    %5028 = vmatpush2.bf16.msra.mxu0 %v3972
    %5029 = vmatprep.subr.bf16.mxu0 0
    %5030 = vmatpush2.bf16.msra.mxu0 %v3971
    %5031 = vmatprep.subr.bf16.mxu0 0
    %5032 = vmatpush2.bf16.msra.mxu0 %v3970
    %5033 = vmatprep.subr.bf16.mxu0 0
    %5034 = vmatpush2.bf16.msra.mxu0 %v3969
    %5035 = vmatprep.subr.bf16.mxu0 0
    %5036 = vmatpush2.bf16.msra.mxu0 %v3968
    %5037 = vmatprep.subr.bf16.mxu0 0
    %5038 = vmatpush2.bf16.msra.mxu0 %v3967
    %5039 = vmatprep.mubr.bf16.mxu0 %v808
    %5040 = vmatmul.mubr.bf16.gmra.mxu0 %v807
    %v5041 = vpop.f32.mrf.mxu0
    %v5042 = vadd.f32 %v5002, %v5041
    %v5043 = vpop.f32.mrf.mxu0
    %v5044 = vpop.f32.mrf.mxu0
    %v5045 = vpop.f32.mrf.mxu0
    %5046 = vdwg.mxu0
    %5047 = vmatprep.subr.bf16.mxu0 0
    %5048 = vmatpush1.bf16.msra.mxu0 %v3982
    %5049 = vmatprep.subr.bf16.mxu0 0
    %5050 = vmatpush1.bf16.msra.mxu0 %v3981
    %5051 = vmatprep.subr.bf16.mxu0 0
    %5052 = vmatpush1.bf16.msra.mxu0 %v3980
    %5053 = vmatprep.subr.bf16.mxu0 0
    %5054 = vmatpush1.bf16.msra.mxu0 %v3979
    %5055 = vmatprep.subr.bf16.mxu0 0
    %5056 = vmatpush1.bf16.msra.mxu0 %v3978
    %5057 = vmatprep.subr.bf16.mxu0 0
    %5058 = vmatpush1.bf16.msra.mxu0 %v3977
    %5059 = vmatprep.subr.bf16.mxu0 0
    %5060 = vmatpush1.bf16.msra.mxu0 %v3976
    %5061 = vmatprep.subr.bf16.mxu0 0
    %5062 = vmatpush1.bf16.msra.mxu0 %v3975
    %5063 = vmatprep.subr.bf16.mxu0 0
    %5064 = vmatpush2.bf16.msra.mxu0 %v3990
    %5065 = vmatprep.subr.bf16.mxu0 0
    %5066 = vmatpush2.bf16.msra.mxu0 %v3989
    %5067 = vmatprep.subr.bf16.mxu0 0
    %5068 = vmatpush2.bf16.msra.mxu0 %v3988
    %5069 = vmatprep.subr.bf16.mxu0 0
    %5070 = vmatpush2.bf16.msra.mxu0 %v3987
    %5071 = vmatprep.subr.bf16.mxu0 0
    %5072 = vmatpush2.bf16.msra.mxu0 %v3986
    %5073 = vmatprep.subr.bf16.mxu0 0
    %5074 = vmatpush2.bf16.msra.mxu0 %v3985
    %5075 = vmatprep.subr.bf16.mxu0 0
    %5076 = vmatpush2.bf16.msra.mxu0 %v3984
    %5077 = vmatprep.subr.bf16.mxu0 0
    %5078 = vmatpush2.bf16.msra.mxu0 %v3983
    %5079 = vmatprep.mubr.bf16.mxu0 %v810
    %5080 = vmatmul.mubr.bf16.gmra.mxu0 %v809
    %v5081 = vpop.f32.mrf.mxu0
    %v5082 = vadd.f32 %v5042, %v5081
    %v5083 = vpop.f32.mrf.mxu0
    %v5084 = vpop.f32.mrf.mxu0
    %v5085 = vpop.f32.mrf.mxu0
    %5086 = vdwg.mxu0
    %5087 = vmatprep.subr.bf16.mxu0 0
    %5088 = vmatpush1.bf16.msra.mxu0 %v3998
    %5089 = vmatprep.subr.bf16.mxu0 0
    %5090 = vmatpush1.bf16.msra.mxu0 %v3997
    %5091 = vmatprep.subr.bf16.mxu0 0
    %5092 = vmatpush1.bf16.msra.mxu0 %v3996
    %5093 = vmatprep.subr.bf16.mxu0 0
    %5094 = vmatpush1.bf16.msra.mxu0 %v3995
    %5095 = vmatprep.subr.bf16.mxu0 0
    %5096 = vmatpush1.bf16.msra.mxu0 %v3994
    %5097 = vmatprep.subr.bf16.mxu0 0
    %5098 = vmatpush1.bf16.msra.mxu0 %v3993
    %5099 = vmatprep.subr.bf16.mxu0 0
    %5100 = vmatpush1.bf16.msra.mxu0 %v3992
    %5101 = vmatprep.subr.bf16.mxu0 0
    %5102 = vmatpush1.bf16.msra.mxu0 %v3991
    %5103 = vmatprep.subr.bf16.mxu0 0
    %5104 = vmatpush2.bf16.msra.mxu0 %v4006
    %5105 = vmatprep.subr.bf16.mxu0 0
    %5106 = vmatpush2.bf16.msra.mxu0 %v4005
    %5107 = vmatprep.subr.bf16.mxu0 0
    %5108 = vmatpush2.bf16.msra.mxu0 %v4004
    %5109 = vmatprep.subr.bf16.mxu0 0
    %5110 = vmatpush2.bf16.msra.mxu0 %v4003
    %5111 = vmatprep.subr.bf16.mxu0 0
    %5112 = vmatpush2.bf16.msra.mxu0 %v4002
    %5113 = vmatprep.subr.bf16.mxu0 0
    %5114 = vmatpush2.bf16.msra.mxu0 %v4001
    %5115 = vmatprep.subr.bf16.mxu0 0
    %5116 = vmatpush2.bf16.msra.mxu0 %v4000
    %5117 = vmatprep.subr.bf16.mxu0 0
    %5118 = vmatpush2.bf16.msra.mxu0 %v3999
    %5119 = vmatprep.mubr.bf16.mxu0 %v812
    %5120 = vmatmul.mubr.bf16.gmra.mxu0 %v811
    %v5121 = vpop.f32.mrf.mxu0
    %v5122 = vadd.f32 %v5082, %v5121
    %v5123 = vpop.f32.mrf.mxu0
    %v5124 = vpop.f32.mrf.mxu0
    %v5125 = vpop.f32.mrf.mxu0
    %5126 = vdwg.mxu0
    %5127 = vmatprep.subr.bf16.mxu0 0
    %5128 = vmatpush1.bf16.msra.mxu0 %v4014
    %5129 = vmatprep.subr.bf16.mxu0 0
    %5130 = vmatpush1.bf16.msra.mxu0 %v4013
    %5131 = vmatprep.subr.bf16.mxu0 0
    %5132 = vmatpush1.bf16.msra.mxu0 %v4012
    %5133 = vmatprep.subr.bf16.mxu0 0
    %5134 = vmatpush1.bf16.msra.mxu0 %v4011
    %5135 = vmatprep.subr.bf16.mxu0 0
    %5136 = vmatpush1.bf16.msra.mxu0 %v4010
    %5137 = vmatprep.subr.bf16.mxu0 0
    %5138 = vmatpush1.bf16.msra.mxu0 %v4009
    %5139 = vmatprep.subr.bf16.mxu0 0
    %5140 = vmatpush1.bf16.msra.mxu0 %v4008
    %5141 = vmatprep.subr.bf16.mxu0 0
    %5142 = vmatpush1.bf16.msra.mxu0 %v4007
    %5143 = vmatprep.subr.bf16.mxu0 0
    %5144 = vmatpush2.bf16.msra.mxu0 %v4022
    %5145 = vmatprep.subr.bf16.mxu0 0
    %5146 = vmatpush2.bf16.msra.mxu0 %v4021
    %5147 = vmatprep.subr.bf16.mxu0 0
    %5148 = vmatpush2.bf16.msra.mxu0 %v4020
    %5149 = vmatprep.subr.bf16.mxu0 0
    %5150 = vmatpush2.bf16.msra.mxu0 %v4019
    %5151 = vmatprep.subr.bf16.mxu0 0
    %5152 = vmatpush2.bf16.msra.mxu0 %v4018
    %5153 = vmatprep.subr.bf16.mxu0 0
    %5154 = vmatpush2.bf16.msra.mxu0 %v4017
    %5155 = vmatprep.subr.bf16.mxu0 0
    %5156 = vmatpush2.bf16.msra.mxu0 %v4016
    %5157 = vmatprep.subr.bf16.mxu0 0
    %5158 = vmatpush2.bf16.msra.mxu0 %v4015
    %5159 = vmatprep.mubr.bf16.mxu0 %v814
    %5160 = vmatmul.mubr.bf16.gmra.mxu0 %v813
    %v5161 = vpop.f32.mrf.mxu0
    %v5162 = vadd.f32 %v5122, %v5161
    %v5163 = vpop.f32.mrf.mxu0
    %v5164 = vpop.f32.mrf.mxu0
    %v5165 = vpop.f32.mrf.mxu0
    %5166 = vdwg.mxu0
    %5167 = vmatprep.subr.bf16.mxu0 0
    %5168 = vmatpush1.bf16.msra.mxu0 %v4030
    %5169 = vmatprep.subr.bf16.mxu0 0
    %5170 = vmatpush1.bf16.msra.mxu0 %v4029
    %5171 = vmatprep.subr.bf16.mxu0 0
    %5172 = vmatpush1.bf16.msra.mxu0 %v4028
    %5173 = vmatprep.subr.bf16.mxu0 0
    %5174 = vmatpush1.bf16.msra.mxu0 %v4027
    %5175 = vmatprep.subr.bf16.mxu0 0
    %5176 = vmatpush1.bf16.msra.mxu0 %v4026
    %5177 = vmatprep.subr.bf16.mxu0 0
    %5178 = vmatpush1.bf16.msra.mxu0 %v4025
    %5179 = vmatprep.subr.bf16.mxu0 0
    %5180 = vmatpush1.bf16.msra.mxu0 %v4024
    %5181 = vmatprep.subr.bf16.mxu0 0
    %5182 = vmatpush1.bf16.msra.mxu0 %v4023
    %5183 = vmatprep.subr.bf16.mxu0 0
    %5184 = vmatpush2.bf16.msra.mxu0 %v4038
    %5185 = vmatprep.subr.bf16.mxu0 0
    %5186 = vmatpush2.bf16.msra.mxu0 %v4037
    %5187 = vmatprep.subr.bf16.mxu0 0
    %5188 = vmatpush2.bf16.msra.mxu0 %v4036
    %5189 = vmatprep.subr.bf16.mxu0 0
    %5190 = vmatpush2.bf16.msra.mxu0 %v4035
    %5191 = vmatprep.subr.bf16.mxu0 0
    %5192 = vmatpush2.bf16.msra.mxu0 %v4034
    %5193 = vmatprep.subr.bf16.mxu0 0
    %5194 = vmatpush2.bf16.msra.mxu0 %v4033
    %5195 = vmatprep.subr.bf16.mxu0 0
    %5196 = vmatpush2.bf16.msra.mxu0 %v4032
    %5197 = vmatprep.subr.bf16.mxu0 0
    %5198 = vmatpush2.bf16.msra.mxu0 %v4031
    %5199 = vmatprep.mubr.bf16.mxu0 %v816
    %5200 = vmatmul.mubr.bf16.gmra.mxu0 %v815
    %v5201 = vpop.f32.mrf.mxu0
    %v5202 = vadd.f32 %v5162, %v5201
    %v5203 = vpop.f32.mrf.mxu0
    %v5204 = vpop.f32.mrf.mxu0
    %v5205 = vpop.f32.mrf.mxu0
    %5206 = vdwg.mxu0
    %5207 = vmatprep.subr.bf16.mxu0 0
    %5208 = vmatpush1.bf16.msra.mxu0 %v4046
    %5209 = vmatprep.subr.bf16.mxu0 0
    %5210 = vmatpush1.bf16.msra.mxu0 %v4045
    %5211 = vmatprep.subr.bf16.mxu0 0
    %5212 = vmatpush1.bf16.msra.mxu0 %v4044
    %5213 = vmatprep.subr.bf16.mxu0 0
    %5214 = vmatpush1.bf16.msra.mxu0 %v4043
    %5215 = vmatprep.subr.bf16.mxu0 0
    %5216 = vmatpush1.bf16.msra.mxu0 %v4042
    %5217 = vmatprep.subr.bf16.mxu0 0
    %5218 = vmatpush1.bf16.msra.mxu0 %v4041
    %5219 = vmatprep.subr.bf16.mxu0 0
    %5220 = vmatpush1.bf16.msra.mxu0 %v4040
    %5221 = vmatprep.subr.bf16.mxu0 0
    %5222 = vmatpush1.bf16.msra.mxu0 %v4039
    %5223 = vmatprep.subr.bf16.mxu0 0
    %5224 = vmatpush2.bf16.msra.mxu0 %v4054
    %5225 = vmatprep.subr.bf16.mxu0 0
    %5226 = vmatpush2.bf16.msra.mxu0 %v4053
    %5227 = vmatprep.subr.bf16.mxu0 0
    %5228 = vmatpush2.bf16.msra.mxu0 %v4052
    %5229 = vmatprep.subr.bf16.mxu0 0
    %5230 = vmatpush2.bf16.msra.mxu0 %v4051
    %5231 = vmatprep.subr.bf16.mxu0 0
    %5232 = vmatpush2.bf16.msra.mxu0 %v4050
    %5233 = vmatprep.subr.bf16.mxu0 0
    %5234 = vmatpush2.bf16.msra.mxu0 %v4049
    %5235 = vmatprep.subr.bf16.mxu0 0
    %5236 = vmatpush2.bf16.msra.mxu0 %v4048
    %5237 = vmatprep.subr.bf16.mxu0 0
    %5238 = vmatpush2.bf16.msra.mxu0 %v4047
    %5239 = vmatprep.mubr.bf16.mxu0 %v818
    %5240 = vmatmul.mubr.bf16.gmra.mxu0 %v817
    %v5241 = vpop.f32.mrf.mxu0
    %v5242 = vadd.f32 %v5202, %v5241
    %v5243 = vpop.f32.mrf.mxu0
    %v5244 = vpop.f32.mrf.mxu0
    %v5245 = vpop.f32.mrf.mxu0
    %5246 = vdwg.mxu0
    %5247 = vmatprep.subr.bf16.mxu0 0
    %5248 = vmatpush1.bf16.msra.mxu0 %v4062
    %5249 = vmatprep.subr.bf16.mxu0 0
    %5250 = vmatpush1.bf16.msra.mxu0 %v4061
    %5251 = vmatprep.subr.bf16.mxu0 0
    %5252 = vmatpush1.bf16.msra.mxu0 %v4060
    %5253 = vmatprep.subr.bf16.mxu0 0
    %5254 = vmatpush1.bf16.msra.mxu0 %v4059
    %5255 = vmatprep.subr.bf16.mxu0 0
    %5256 = vmatpush1.bf16.msra.mxu0 %v4058
    %5257 = vmatprep.subr.bf16.mxu0 0
    %5258 = vmatpush1.bf16.msra.mxu0 %v4057
    %5259 = vmatprep.subr.bf16.mxu0 0
    %5260 = vmatpush1.bf16.msra.mxu0 %v4056
    %5261 = vmatprep.subr.bf16.mxu0 0
    %5262 = vmatpush1.bf16.msra.mxu0 %v4055
    %5263 = vmatprep.subr.bf16.mxu0 0
    %5264 = vmatpush2.bf16.msra.mxu0 %v4070
    %5265 = vmatprep.subr.bf16.mxu0 0
    %5266 = vmatpush2.bf16.msra.mxu0 %v4069
    %5267 = vmatprep.subr.bf16.mxu0 0
    %5268 = vmatpush2.bf16.msra.mxu0 %v4068
    %5269 = vmatprep.subr.bf16.mxu0 0
    %5270 = vmatpush2.bf16.msra.mxu0 %v4067
    %5271 = vmatprep.subr.bf16.mxu0 0
    %5272 = vmatpush2.bf16.msra.mxu0 %v4066
    %5273 = vmatprep.subr.bf16.mxu0 0
    %5274 = vmatpush2.bf16.msra.mxu0 %v4065
    %5275 = vmatprep.subr.bf16.mxu0 0
    %5276 = vmatpush2.bf16.msra.mxu0 %v4064
    %5277 = vmatprep.subr.bf16.mxu0 0
    %5278 = vmatpush2.bf16.msra.mxu0 %v4063
    %5279 = vmatprep.mubr.bf16.mxu0 %v820
    %5280 = vmatmul.mubr.bf16.gmra.mxu0 %v819
    %v5281 = vpop.f32.mrf.mxu0
    %v5282 = vadd.f32 %v5242, %v5281
    %v5283 = vpop.f32.mrf.mxu0
    %v5284 = vpop.f32.mrf.mxu0
    %v5285 = vpop.f32.mrf.mxu0
    %5286 = vdwg.mxu0
    %5287 = vmatprep.subr.bf16.mxu0 0
    %5288 = vmatpush1.bf16.msra.mxu0 %v4078
    %5289 = vmatprep.subr.bf16.mxu0 0
    %5290 = vmatpush1.bf16.msra.mxu0 %v4077
    %5291 = vmatprep.subr.bf16.mxu0 0
    %5292 = vmatpush1.bf16.msra.mxu0 %v4076
    %5293 = vmatprep.subr.bf16.mxu0 0
    %5294 = vmatpush1.bf16.msra.mxu0 %v4075
    %5295 = vmatprep.subr.bf16.mxu0 0
    %5296 = vmatpush1.bf16.msra.mxu0 %v4074
    %5297 = vmatprep.subr.bf16.mxu0 0
    %5298 = vmatpush1.bf16.msra.mxu0 %v4073
    %5299 = vmatprep.subr.bf16.mxu0 0
    %5300 = vmatpush1.bf16.msra.mxu0 %v4072
    %5301 = vmatprep.subr.bf16.mxu0 0
    %5302 = vmatpush1.bf16.msra.mxu0 %v4071
    %5303 = vmatprep.subr.bf16.mxu0 0
    %5304 = vmatpush2.bf16.msra.mxu0 %v4086
    %5305 = vmatprep.subr.bf16.mxu0 0
    %5306 = vmatpush2.bf16.msra.mxu0 %v4085
    %5307 = vmatprep.subr.bf16.mxu0 0
    %5308 = vmatpush2.bf16.msra.mxu0 %v4084
    %5309 = vmatprep.subr.bf16.mxu0 0
    %5310 = vmatpush2.bf16.msra.mxu0 %v4083
    %5311 = vmatprep.subr.bf16.mxu0 0
    %5312 = vmatpush2.bf16.msra.mxu0 %v4082
    %5313 = vmatprep.subr.bf16.mxu0 0
    %5314 = vmatpush2.bf16.msra.mxu0 %v4081
    %5315 = vmatprep.subr.bf16.mxu0 0
    %5316 = vmatpush2.bf16.msra.mxu0 %v4080
    %5317 = vmatprep.subr.bf16.mxu0 0
    %5318 = vmatpush2.bf16.msra.mxu0 %v4079
    %5319 = vmatprep.mubr.bf16.mxu0 %v822
    %5320 = vmatmul.mubr.bf16.gmra.mxu0 %v821
    %v5321 = vpop.f32.mrf.mxu0
    %v5322 = vadd.f32 %v5282, %v5321
    %v5323 = vpop.f32.mrf.mxu0
    %v5324 = vpop.f32.mrf.mxu0
    %v5325 = vpop.f32.mrf.mxu0
    %5326 = vdwg.mxu0
    %5327 = vmatprep.subr.bf16.mxu0 0
    %5328 = vmatpush1.bf16.msra.mxu0 %v4094
    %5329 = vmatprep.subr.bf16.mxu0 0
    %5330 = vmatpush1.bf16.msra.mxu0 %v4093
    %5331 = vmatprep.subr.bf16.mxu0 0
    %5332 = vmatpush1.bf16.msra.mxu0 %v4092
    %5333 = vmatprep.subr.bf16.mxu0 0
    %5334 = vmatpush1.bf16.msra.mxu0 %v4091
    %5335 = vmatprep.subr.bf16.mxu0 0
    %5336 = vmatpush1.bf16.msra.mxu0 %v4090
    %5337 = vmatprep.subr.bf16.mxu0 0
    %5338 = vmatpush1.bf16.msra.mxu0 %v4089
    %5339 = vmatprep.subr.bf16.mxu0 0
    %5340 = vmatpush1.bf16.msra.mxu0 %v4088
    %5341 = vmatprep.subr.bf16.mxu0 0
    %5342 = vmatpush1.bf16.msra.mxu0 %v4087
    %5343 = vmatprep.subr.bf16.mxu0 0
    %5344 = vmatpush2.bf16.msra.mxu0 %v4102
    %5345 = vmatprep.subr.bf16.mxu0 0
    %5346 = vmatpush2.bf16.msra.mxu0 %v4101
    %5347 = vmatprep.subr.bf16.mxu0 0
    %5348 = vmatpush2.bf16.msra.mxu0 %v4100
    %5349 = vmatprep.subr.bf16.mxu0 0
    %5350 = vmatpush2.bf16.msra.mxu0 %v4099
    %5351 = vmatprep.subr.bf16.mxu0 0
    %5352 = vmatpush2.bf16.msra.mxu0 %v4098
    %5353 = vmatprep.subr.bf16.mxu0 0
    %5354 = vmatpush2.bf16.msra.mxu0 %v4097
    %5355 = vmatprep.subr.bf16.mxu0 0
    %5356 = vmatpush2.bf16.msra.mxu0 %v4096
    %5357 = vmatprep.subr.bf16.mxu0 0
    %5358 = vmatpush2.bf16.msra.mxu0 %v4095
    %5359 = vmatprep.mubr.bf16.mxu0 %v824
    %5360 = vmatmul.mubr.bf16.gmra.mxu0 %v823
    %v5361 = vpop.f32.mrf.mxu0
    %v5362 = vadd.f32 %v5322, %v5361
    %v5363 = vpop.f32.mrf.mxu0
    %v5364 = vpop.f32.mrf.mxu0
    %v5365 = vpop.f32.mrf.mxu0
    %5366 = vdwg.mxu0
    %5367 = vmatprep.subr.bf16.mxu0 0
    %5368 = vmatpush1.bf16.msra.mxu0 %v4110
    %5369 = vmatprep.subr.bf16.mxu0 0
    %5370 = vmatpush1.bf16.msra.mxu0 %v4109
    %5371 = vmatprep.subr.bf16.mxu0 0
    %5372 = vmatpush1.bf16.msra.mxu0 %v4108
    %5373 = vmatprep.subr.bf16.mxu0 0
    %5374 = vmatpush1.bf16.msra.mxu0 %v4107
    %5375 = vmatprep.subr.bf16.mxu0 0
    %5376 = vmatpush1.bf16.msra.mxu0 %v4106
    %5377 = vmatprep.subr.bf16.mxu0 0
    %5378 = vmatpush1.bf16.msra.mxu0 %v4105
    %5379 = vmatprep.subr.bf16.mxu0 0
    %5380 = vmatpush1.bf16.msra.mxu0 %v4104
    %5381 = vmatprep.subr.bf16.mxu0 0
    %5382 = vmatpush1.bf16.msra.mxu0 %v4103
    %5383 = vmatprep.subr.bf16.mxu0 0
    %5384 = vmatpush2.bf16.msra.mxu0 %v4118
    %5385 = vmatprep.subr.bf16.mxu0 0
    %5386 = vmatpush2.bf16.msra.mxu0 %v4117
    %5387 = vmatprep.subr.bf16.mxu0 0
    %5388 = vmatpush2.bf16.msra.mxu0 %v4116
    %5389 = vmatprep.subr.bf16.mxu0 0
    %5390 = vmatpush2.bf16.msra.mxu0 %v4115
    %5391 = vmatprep.subr.bf16.mxu0 0
    %5392 = vmatpush2.bf16.msra.mxu0 %v4114
    %5393 = vmatprep.subr.bf16.mxu0 0
    %5394 = vmatpush2.bf16.msra.mxu0 %v4113
    %5395 = vmatprep.subr.bf16.mxu0 0
    %5396 = vmatpush2.bf16.msra.mxu0 %v4112
    %5397 = vmatprep.subr.bf16.mxu0 0
    %5398 = vmatpush2.bf16.msra.mxu0 %v4111
    %5399 = vmatprep.mubr.bf16.mxu0 %v826
    %5400 = vmatmul.mubr.bf16.gmra.mxu0 %v825
    %v5401 = vpop.f32.mrf.mxu0
    %v5402 = vadd.f32 %v5362, %v5401
    %v5403 = vpop.f32.mrf.mxu0
    %v5404 = vpop.f32.mrf.mxu0
    %v5405 = vpop.f32.mrf.mxu0
    %5406 = vdwg.mxu0
    %5407 = vmatprep.subr.bf16.mxu0 0
    %5408 = vmatpush1.bf16.msra.mxu0 %v4126
    %5409 = vmatprep.subr.bf16.mxu0 0
    %5410 = vmatpush1.bf16.msra.mxu0 %v4125
    %5411 = vmatprep.subr.bf16.mxu0 0
    %5412 = vmatpush1.bf16.msra.mxu0 %v4124
    %5413 = vmatprep.subr.bf16.mxu0 0
    %5414 = vmatpush1.bf16.msra.mxu0 %v4123
    %5415 = vmatprep.subr.bf16.mxu0 0
    %5416 = vmatpush1.bf16.msra.mxu0 %v4122
    %5417 = vmatprep.subr.bf16.mxu0 0
    %5418 = vmatpush1.bf16.msra.mxu0 %v4121
    %5419 = vmatprep.subr.bf16.mxu0 0
    %5420 = vmatpush1.bf16.msra.mxu0 %v4120
    %5421 = vmatprep.subr.bf16.mxu0 0
    %5422 = vmatpush1.bf16.msra.mxu0 %v4119
    %5423 = vmatprep.subr.bf16.mxu0 0
    %5424 = vmatpush2.bf16.msra.mxu0 %v4134
    %5425 = vmatprep.subr.bf16.mxu0 0
    %5426 = vmatpush2.bf16.msra.mxu0 %v4133
    %5427 = vmatprep.subr.bf16.mxu0 0
    %5428 = vmatpush2.bf16.msra.mxu0 %v4132
    %5429 = vmatprep.subr.bf16.mxu0 0
    %5430 = vmatpush2.bf16.msra.mxu0 %v4131
    %5431 = vmatprep.subr.bf16.mxu0 0
    %5432 = vmatpush2.bf16.msra.mxu0 %v4130
    %5433 = vmatprep.subr.bf16.mxu0 0
    %5434 = vmatpush2.bf16.msra.mxu0 %v4129
    %5435 = vmatprep.subr.bf16.mxu0 0
    %5436 = vmatpush2.bf16.msra.mxu0 %v4128
    %5437 = vmatprep.subr.bf16.mxu0 0
    %5438 = vmatpush2.bf16.msra.mxu0 %v4127
    %5439 = vmatprep.mubr.bf16.mxu0 %v828
    %5440 = vmatmul.mubr.bf16.gmra.mxu0 %v827
    %v5441 = vpop.f32.mrf.mxu0
    %v5442 = vadd.f32 %v5402, %v5441
    %v5443 = vpop.f32.mrf.mxu0
    %v5444 = vpop.f32.mrf.mxu0
    %v5445 = vpop.f32.mrf.mxu0
    %5446 = vdwg.mxu0
    %5447 = vmatprep.subr.bf16.mxu0 0
    %5448 = vmatpush1.bf16.msra.mxu0 %v4142
    %5449 = vmatprep.subr.bf16.mxu0 0
    %5450 = vmatpush1.bf16.msra.mxu0 %v4141
    %5451 = vmatprep.subr.bf16.mxu0 0
    %5452 = vmatpush1.bf16.msra.mxu0 %v4140
    %5453 = vmatprep.subr.bf16.mxu0 0
    %5454 = vmatpush1.bf16.msra.mxu0 %v4139
    %5455 = vmatprep.subr.bf16.mxu0 0
    %5456 = vmatpush1.bf16.msra.mxu0 %v4138
    %5457 = vmatprep.subr.bf16.mxu0 0
    %5458 = vmatpush1.bf16.msra.mxu0 %v4137
    %5459 = vmatprep.subr.bf16.mxu0 0
    %5460 = vmatpush1.bf16.msra.mxu0 %v4136
    %5461 = vmatprep.subr.bf16.mxu0 0
    %5462 = vmatpush1.bf16.msra.mxu0 %v4135
    %5463 = vmatprep.subr.bf16.mxu0 0
    %5464 = vmatpush2.bf16.msra.mxu0 %v4150
    %5465 = vmatprep.subr.bf16.mxu0 0
    %5466 = vmatpush2.bf16.msra.mxu0 %v4149
    %5467 = vmatprep.subr.bf16.mxu0 0
    %5468 = vmatpush2.bf16.msra.mxu0 %v4148
    %5469 = vmatprep.subr.bf16.mxu0 0
    %5470 = vmatpush2.bf16.msra.mxu0 %v4147
    %5471 = vmatprep.subr.bf16.mxu0 0
    %5472 = vmatpush2.bf16.msra.mxu0 %v4146
    %5473 = vmatprep.subr.bf16.mxu0 0
    %5474 = vmatpush2.bf16.msra.mxu0 %v4145
    %5475 = vmatprep.subr.bf16.mxu0 0
    %5476 = vmatpush2.bf16.msra.mxu0 %v4144
    %5477 = vmatprep.subr.bf16.mxu0 0
    %5478 = vmatpush2.bf16.msra.mxu0 %v4143
    %5479 = vmatprep.mubr.bf16.mxu0 %v830
    %5480 = vmatmul.mubr.bf16.gmra.mxu0 %v829
    %v5481 = vpop.f32.mrf.mxu0
    %v5482 = vadd.f32 %v5442, %v5481
    %v5483 = vpop.f32.mrf.mxu0
    %v5484 = vpop.f32.mrf.mxu0
    %v5485 = vpop.f32.mrf.mxu0
    %5486 = vdwg.mxu0
    %5487 = vmatprep.subr.bf16.mxu0 0
    %5488 = vmatpush1.bf16.msra.mxu0 %v4158
    %5489 = vmatprep.subr.bf16.mxu0 0
    %5490 = vmatpush1.bf16.msra.mxu0 %v4157
    %5491 = vmatprep.subr.bf16.mxu0 0
    %5492 = vmatpush1.bf16.msra.mxu0 %v4156
    %5493 = vmatprep.subr.bf16.mxu0 0
    %5494 = vmatpush1.bf16.msra.mxu0 %v4155
    %5495 = vmatprep.subr.bf16.mxu0 0
    %5496 = vmatpush1.bf16.msra.mxu0 %v4154
    %5497 = vmatprep.subr.bf16.mxu0 0
    %5498 = vmatpush1.bf16.msra.mxu0 %v4153
    %5499 = vmatprep.subr.bf16.mxu0 0
    %5500 = vmatpush1.bf16.msra.mxu0 %v4152
    %5501 = vmatprep.subr.bf16.mxu0 0
    %5502 = vmatpush1.bf16.msra.mxu0 %v4151
    %5503 = vmatprep.subr.bf16.mxu0 0
    %5504 = vmatpush2.bf16.msra.mxu0 %v4166
    %5505 = vmatprep.subr.bf16.mxu0 0
    %5506 = vmatpush2.bf16.msra.mxu0 %v4165
    %5507 = vmatprep.subr.bf16.mxu0 0
    %5508 = vmatpush2.bf16.msra.mxu0 %v4164
    %5509 = vmatprep.subr.bf16.mxu0 0
    %5510 = vmatpush2.bf16.msra.mxu0 %v4163
    %5511 = vmatprep.subr.bf16.mxu0 0
    %5512 = vmatpush2.bf16.msra.mxu0 %v4162
    %5513 = vmatprep.subr.bf16.mxu0 0
    %5514 = vmatpush2.bf16.msra.mxu0 %v4161
    %5515 = vmatprep.subr.bf16.mxu0 0
    %5516 = vmatpush2.bf16.msra.mxu0 %v4160
    %5517 = vmatprep.subr.bf16.mxu0 0
    %5518 = vmatpush2.bf16.msra.mxu0 %v4159
    %5519 = vmatprep.mubr.bf16.mxu0 %v832
    %5520 = vmatmul.mubr.bf16.gmra.mxu0 %v831
    %v5521 = vpop.f32.mrf.mxu0
    %v5522 = vadd.f32 %v5482, %v5521
    %v5523 = vpop.f32.mrf.mxu0
    %v5524 = vpop.f32.mrf.mxu0
    %v5525 = vpop.f32.mrf.mxu0
    %5526 = vdwg.mxu0
    %5527 = vmatprep.subr.bf16.mxu0 0
    %5528 = vmatpush1.bf16.msra.mxu0 %v4174
    %5529 = vmatprep.subr.bf16.mxu0 0
    %5530 = vmatpush1.bf16.msra.mxu0 %v4173
    %5531 = vmatprep.subr.bf16.mxu0 0
    %5532 = vmatpush1.bf16.msra.mxu0 %v4172
    %5533 = vmatprep.subr.bf16.mxu0 0
    %5534 = vmatpush1.bf16.msra.mxu0 %v4171
    %5535 = vmatprep.subr.bf16.mxu0 0
    %5536 = vmatpush1.bf16.msra.mxu0 %v4170
    %5537 = vmatprep.subr.bf16.mxu0 0
    %5538 = vmatpush1.bf16.msra.mxu0 %v4169
    %5539 = vmatprep.subr.bf16.mxu0 0
    %5540 = vmatpush1.bf16.msra.mxu0 %v4168
    %5541 = vmatprep.subr.bf16.mxu0 0
    %5542 = vmatpush1.bf16.msra.mxu0 %v4167
    %5543 = vmatprep.subr.bf16.mxu0 0
    %5544 = vmatpush2.bf16.msra.mxu0 %v4182
    %5545 = vmatprep.subr.bf16.mxu0 0
    %5546 = vmatpush2.bf16.msra.mxu0 %v4181
    %5547 = vmatprep.subr.bf16.mxu0 0
    %5548 = vmatpush2.bf16.msra.mxu0 %v4180
    %5549 = vmatprep.subr.bf16.mxu0 0
    %5550 = vmatpush2.bf16.msra.mxu0 %v4179
    %5551 = vmatprep.subr.bf16.mxu0 0
    %5552 = vmatpush2.bf16.msra.mxu0 %v4178
    %5553 = vmatprep.subr.bf16.mxu0 0
    %5554 = vmatpush2.bf16.msra.mxu0 %v4177
    %5555 = vmatprep.subr.bf16.mxu0 0
    %5556 = vmatpush2.bf16.msra.mxu0 %v4176
    %5557 = vmatprep.subr.bf16.mxu0 0
    %5558 = vmatpush2.bf16.msra.mxu0 %v4175
    %5559 = vmatprep.mubr.bf16.mxu0 %v834
    %5560 = vmatmul.mubr.bf16.gmra.mxu0 %v833
    %v5561 = vpop.f32.mrf.mxu0
    %v5562 = vadd.f32 %v5522, %v5561
    %v5563 = vpop.f32.mrf.mxu0
    %v5564 = vpop.f32.mrf.mxu0
    %v5565 = vpop.f32.mrf.mxu0
    %5566 = vdwg.mxu0
    %5567 = vmatprep.subr.bf16.mxu0 0
    %5568 = vmatpush1.bf16.msra.mxu0 %v4190
    %5569 = vmatprep.subr.bf16.mxu0 0
    %5570 = vmatpush1.bf16.msra.mxu0 %v4189
    %5571 = vmatprep.subr.bf16.mxu0 0
    %5572 = vmatpush1.bf16.msra.mxu0 %v4188
    %5573 = vmatprep.subr.bf16.mxu0 0
    %5574 = vmatpush1.bf16.msra.mxu0 %v4187
    %5575 = vmatprep.subr.bf16.mxu0 0
    %5576 = vmatpush1.bf16.msra.mxu0 %v4186
    %5577 = vmatprep.subr.bf16.mxu0 0
    %5578 = vmatpush1.bf16.msra.mxu0 %v4185
    %5579 = vmatprep.subr.bf16.mxu0 0
    %5580 = vmatpush1.bf16.msra.mxu0 %v4184
    %5581 = vmatprep.subr.bf16.mxu0 0
    %5582 = vmatpush1.bf16.msra.mxu0 %v4183
    %5583 = vmatprep.subr.bf16.mxu0 0
    %5584 = vmatpush2.bf16.msra.mxu0 %v4198
    %5585 = vmatprep.subr.bf16.mxu0 0
    %5586 = vmatpush2.bf16.msra.mxu0 %v4197
    %5587 = vmatprep.subr.bf16.mxu0 0
    %5588 = vmatpush2.bf16.msra.mxu0 %v4196
    %5589 = vmatprep.subr.bf16.mxu0 0
    %5590 = vmatpush2.bf16.msra.mxu0 %v4195
    %5591 = vmatprep.subr.bf16.mxu0 0
    %5592 = vmatpush2.bf16.msra.mxu0 %v4194
    %5593 = vmatprep.subr.bf16.mxu0 0
    %5594 = vmatpush2.bf16.msra.mxu0 %v4193
    %5595 = vmatprep.subr.bf16.mxu0 0
    %5596 = vmatpush2.bf16.msra.mxu0 %v4192
    %5597 = vmatprep.subr.bf16.mxu0 0
    %5598 = vmatpush2.bf16.msra.mxu0 %v4191
    %5599 = vmatprep.mubr.bf16.mxu0 %v836
    %5600 = vmatmul.mubr.bf16.gmra.mxu0 %v835
    %v5601 = vpop.f32.mrf.mxu0
    %v5602 = vadd.f32 %v5562, %v5601
    %v5603 = vpop.f32.mrf.mxu0
    %v5604 = vpop.f32.mrf.mxu0
    %v5605 = vpop.f32.mrf.mxu0
    %5606 = vdwg.mxu0
    %5607 = vmatprep.subr.bf16.mxu0 0
    %5608 = vmatpush1.bf16.msra.mxu0 %v4206
    %5609 = vmatprep.subr.bf16.mxu0 0
    %5610 = vmatpush1.bf16.msra.mxu0 %v4205
    %5611 = vmatprep.subr.bf16.mxu0 0
    %5612 = vmatpush1.bf16.msra.mxu0 %v4204
    %5613 = vmatprep.subr.bf16.mxu0 0
    %5614 = vmatpush1.bf16.msra.mxu0 %v4203
    %5615 = vmatprep.subr.bf16.mxu0 0
    %5616 = vmatpush1.bf16.msra.mxu0 %v4202
    %5617 = vmatprep.subr.bf16.mxu0 0
    %5618 = vmatpush1.bf16.msra.mxu0 %v4201
    %5619 = vmatprep.subr.bf16.mxu0 0
    %5620 = vmatpush1.bf16.msra.mxu0 %v4200
    %5621 = vmatprep.subr.bf16.mxu0 0
    %5622 = vmatpush1.bf16.msra.mxu0 %v4199
    %5623 = vmatprep.subr.bf16.mxu0 0
    %5624 = vmatpush2.bf16.msra.mxu0 %v4214
    %5625 = vmatprep.subr.bf16.mxu0 0
    %5626 = vmatpush2.bf16.msra.mxu0 %v4213
    %5627 = vmatprep.subr.bf16.mxu0 0
    %5628 = vmatpush2.bf16.msra.mxu0 %v4212
    %5629 = vmatprep.subr.bf16.mxu0 0
    %5630 = vmatpush2.bf16.msra.mxu0 %v4211
    %5631 = vmatprep.subr.bf16.mxu0 0
    %5632 = vmatpush2.bf16.msra.mxu0 %v4210
    %5633 = vmatprep.subr.bf16.mxu0 0
    %5634 = vmatpush2.bf16.msra.mxu0 %v4209
    %5635 = vmatprep.subr.bf16.mxu0 0
    %5636 = vmatpush2.bf16.msra.mxu0 %v4208
    %5637 = vmatprep.subr.bf16.mxu0 0
    %5638 = vmatpush2.bf16.msra.mxu0 %v4207
    %5639 = vmatprep.mubr.bf16.mxu0 %v838
    %5640 = vmatmul.mubr.bf16.gmra.mxu0 %v837
    %v5641 = vpop.f32.mrf.mxu0
    %v5642 = vadd.f32 %v5602, %v5641
    %v5643 = vpop.f32.mrf.mxu0
    %v5644 = vpop.f32.mrf.mxu0
    %v5645 = vpop.f32.mrf.mxu0
    %5646 = vdwg.mxu0
    %5647 = vmatprep.subr.bf16.mxu0 0
    %5648 = vmatpush1.bf16.msra.mxu0 %v4222
    %5649 = vmatprep.subr.bf16.mxu0 0
    %5650 = vmatpush1.bf16.msra.mxu0 %v4221
    %5651 = vmatprep.subr.bf16.mxu0 0
    %5652 = vmatpush1.bf16.msra.mxu0 %v4220
    %5653 = vmatprep.subr.bf16.mxu0 0
    %5654 = vmatpush1.bf16.msra.mxu0 %v4219
    %5655 = vmatprep.subr.bf16.mxu0 0
    %5656 = vmatpush1.bf16.msra.mxu0 %v4218
    %5657 = vmatprep.subr.bf16.mxu0 0
    %5658 = vmatpush1.bf16.msra.mxu0 %v4217
    %5659 = vmatprep.subr.bf16.mxu0 0
    %5660 = vmatpush1.bf16.msra.mxu0 %v4216
    %5661 = vmatprep.subr.bf16.mxu0 0
    %5662 = vmatpush1.bf16.msra.mxu0 %v4215
    %5663 = vmatprep.subr.bf16.mxu0 0
    %5664 = vmatpush2.bf16.msra.mxu0 %v4230
    %5665 = vmatprep.subr.bf16.mxu0 0
    %5666 = vmatpush2.bf16.msra.mxu0 %v4229
    %5667 = vmatprep.subr.bf16.mxu0 0
    %5668 = vmatpush2.bf16.msra.mxu0 %v4228
    %5669 = vmatprep.subr.bf16.mxu0 0
    %5670 = vmatpush2.bf16.msra.mxu0 %v4227
    %5671 = vmatprep.subr.bf16.mxu0 0
    %5672 = vmatpush2.bf16.msra.mxu0 %v4226
    %5673 = vmatprep.subr.bf16.mxu0 0
    %5674 = vmatpush2.bf16.msra.mxu0 %v4225
    %5675 = vmatprep.subr.bf16.mxu0 0
    %5676 = vmatpush2.bf16.msra.mxu0 %v4224
    %5677 = vmatprep.subr.bf16.mxu0 0
    %5678 = vmatpush2.bf16.msra.mxu0 %v4223
    %5679 = vmatprep.mubr.bf16.mxu0 %v840
    %5680 = vmatmul.mubr.bf16.gmra.mxu0 %v839
    %v5681 = vpop.f32.mrf.mxu0
    %v5682 = vadd.f32 %v5642, %v5681
    %v5683 = vpop.f32.mrf.mxu0
    %v5684 = vpop.f32.mrf.mxu0
    %v5685 = vpop.f32.mrf.mxu0
    %5686 = vdwg.mxu0
    %5687 = vmatprep.subr.bf16.mxu0 0
    %5688 = vmatpush1.bf16.msra.mxu0 %v4238
    %5689 = vmatprep.subr.bf16.mxu0 0
    %5690 = vmatpush1.bf16.msra.mxu0 %v4237
    %5691 = vmatprep.subr.bf16.mxu0 0
    %5692 = vmatpush1.bf16.msra.mxu0 %v4236
    %5693 = vmatprep.subr.bf16.mxu0 0
    %5694 = vmatpush1.bf16.msra.mxu0 %v4235
    %5695 = vmatprep.subr.bf16.mxu0 0
    %5696 = vmatpush1.bf16.msra.mxu0 %v4234
    %5697 = vmatprep.subr.bf16.mxu0 0
    %5698 = vmatpush1.bf16.msra.mxu0 %v4233
    %5699 = vmatprep.subr.bf16.mxu0 0
    %5700 = vmatpush1.bf16.msra.mxu0 %v4232
    %5701 = vmatprep.subr.bf16.mxu0 0
    %5702 = vmatpush1.bf16.msra.mxu0 %v4231
    %5703 = vmatprep.subr.bf16.mxu0 0
    %5704 = vmatpush2.bf16.msra.mxu0 %v4246
    %5705 = vmatprep.subr.bf16.mxu0 0
    %5706 = vmatpush2.bf16.msra.mxu0 %v4245
    %5707 = vmatprep.subr.bf16.mxu0 0
    %5708 = vmatpush2.bf16.msra.mxu0 %v4244
    %5709 = vmatprep.subr.bf16.mxu0 0
    %5710 = vmatpush2.bf16.msra.mxu0 %v4243
    %5711 = vmatprep.subr.bf16.mxu0 0
    %5712 = vmatpush2.bf16.msra.mxu0 %v4242
    %5713 = vmatprep.subr.bf16.mxu0 0
    %5714 = vmatpush2.bf16.msra.mxu0 %v4241
    %5715 = vmatprep.subr.bf16.mxu0 0
    %5716 = vmatpush2.bf16.msra.mxu0 %v4240
    %5717 = vmatprep.subr.bf16.mxu0 0
    %5718 = vmatpush2.bf16.msra.mxu0 %v4239
    %5719 = vmatprep.mubr.bf16.mxu0 %v842
    %5720 = vmatmul.mubr.bf16.gmra.mxu0 %v841
    %v5721 = vpop.f32.mrf.mxu0
    %v5722 = vadd.f32 %v5682, %v5721
    %v5723 = vpop.f32.mrf.mxu0
    %v5724 = vpop.f32.mrf.mxu0
    %v5725 = vpop.f32.mrf.mxu0
    %5726 = vdwg.mxu0
    %5727 = vmatprep.subr.bf16.mxu0 0
    %5728 = vmatpush1.bf16.msra.mxu0 %v4254
    %5729 = vmatprep.subr.bf16.mxu0 0
    %5730 = vmatpush1.bf16.msra.mxu0 %v4253
    %5731 = vmatprep.subr.bf16.mxu0 0
    %5732 = vmatpush1.bf16.msra.mxu0 %v4252
    %5733 = vmatprep.subr.bf16.mxu0 0
    %5734 = vmatpush1.bf16.msra.mxu0 %v4251
    %5735 = vmatprep.subr.bf16.mxu0 0
    %5736 = vmatpush1.bf16.msra.mxu0 %v4250
    %5737 = vmatprep.subr.bf16.mxu0 0
    %5738 = vmatpush1.bf16.msra.mxu0 %v4249
    %5739 = vmatprep.subr.bf16.mxu0 0
    %5740 = vmatpush1.bf16.msra.mxu0 %v4248
    %5741 = vmatprep.subr.bf16.mxu0 0
    %5742 = vmatpush1.bf16.msra.mxu0 %v4247
    %5743 = vmatprep.subr.bf16.mxu0 0
    %5744 = vmatpush2.bf16.msra.mxu0 %v4262
    %5745 = vmatprep.subr.bf16.mxu0 0
    %5746 = vmatpush2.bf16.msra.mxu0 %v4261
    %5747 = vmatprep.subr.bf16.mxu0 0
    %5748 = vmatpush2.bf16.msra.mxu0 %v4260
    %5749 = vmatprep.subr.bf16.mxu0 0
    %5750 = vmatpush2.bf16.msra.mxu0 %v4259
    %5751 = vmatprep.subr.bf16.mxu0 0
    %5752 = vmatpush2.bf16.msra.mxu0 %v4258
    %5753 = vmatprep.subr.bf16.mxu0 0
    %5754 = vmatpush2.bf16.msra.mxu0 %v4257
    %5755 = vmatprep.subr.bf16.mxu0 0
    %5756 = vmatpush2.bf16.msra.mxu0 %v4256
    %5757 = vmatprep.subr.bf16.mxu0 0
    %5758 = vmatpush2.bf16.msra.mxu0 %v4255
    %5759 = vmatprep.mubr.bf16.mxu0 %v844
    %5760 = vmatmul.mubr.bf16.gmra.mxu0 %v843
    %v5761 = vpop.f32.mrf.mxu0
    %v5762 = vadd.f32 %v5722, %v5761
    %v5763 = vpop.f32.mrf.mxu0
    %v5764 = vpop.f32.mrf.mxu0
    %v5765 = vpop.f32.mrf.mxu0
    %5766 = vdwg.mxu0
    %5767 = vmatprep.subr.bf16.mxu0 0
    %5768 = vmatpush1.bf16.msra.mxu0 %v4270
    %5769 = vmatprep.subr.bf16.mxu0 0
    %5770 = vmatpush1.bf16.msra.mxu0 %v4269
    %5771 = vmatprep.subr.bf16.mxu0 0
    %5772 = vmatpush1.bf16.msra.mxu0 %v4268
    %5773 = vmatprep.subr.bf16.mxu0 0
    %5774 = vmatpush1.bf16.msra.mxu0 %v4267
    %5775 = vmatprep.subr.bf16.mxu0 0
    %5776 = vmatpush1.bf16.msra.mxu0 %v4266
    %5777 = vmatprep.subr.bf16.mxu0 0
    %5778 = vmatpush1.bf16.msra.mxu0 %v4265
    %5779 = vmatprep.subr.bf16.mxu0 0
    %5780 = vmatpush1.bf16.msra.mxu0 %v4264
    %5781 = vmatprep.subr.bf16.mxu0 0
    %5782 = vmatpush1.bf16.msra.mxu0 %v4263
    %5783 = vmatprep.subr.bf16.mxu0 0
    %5784 = vmatpush2.bf16.msra.mxu0 %v4278
    %5785 = vmatprep.subr.bf16.mxu0 0
    %5786 = vmatpush2.bf16.msra.mxu0 %v4277
    %5787 = vmatprep.subr.bf16.mxu0 0
    %5788 = vmatpush2.bf16.msra.mxu0 %v4276
    %5789 = vmatprep.subr.bf16.mxu0 0
    %5790 = vmatpush2.bf16.msra.mxu0 %v4275
    %5791 = vmatprep.subr.bf16.mxu0 0
    %5792 = vmatpush2.bf16.msra.mxu0 %v4274
    %5793 = vmatprep.subr.bf16.mxu0 0
    %5794 = vmatpush2.bf16.msra.mxu0 %v4273
    %5795 = vmatprep.subr.bf16.mxu0 0
    %5796 = vmatpush2.bf16.msra.mxu0 %v4272
    %5797 = vmatprep.subr.bf16.mxu0 0
    %5798 = vmatpush2.bf16.msra.mxu0 %v4271
    %5799 = vmatprep.mubr.bf16.mxu0 %v846
    %5800 = vmatmul.mubr.bf16.gmra.mxu0 %v845
    %v5801 = vpop.f32.mrf.mxu0
    %v5802 = vadd.f32 %v5762, %v5801
    %v5803 = vpop.f32.mrf.mxu0
    %v5804 = vpop.f32.mrf.mxu0
    %v5805 = vpop.f32.mrf.mxu0
    %5806 = vdwg.mxu0
    %5807 = vmatprep.subr.bf16.mxu0 0
    %5808 = vmatpush1.bf16.msra.mxu0 %v4286
    %5809 = vmatprep.subr.bf16.mxu0 0
    %5810 = vmatpush1.bf16.msra.mxu0 %v4285
    %5811 = vmatprep.subr.bf16.mxu0 0
    %5812 = vmatpush1.bf16.msra.mxu0 %v4284
    %5813 = vmatprep.subr.bf16.mxu0 0
    %5814 = vmatpush1.bf16.msra.mxu0 %v4283
    %5815 = vmatprep.subr.bf16.mxu0 0
    %5816 = vmatpush1.bf16.msra.mxu0 %v4282
    %5817 = vmatprep.subr.bf16.mxu0 0
    %5818 = vmatpush1.bf16.msra.mxu0 %v4281
    %5819 = vmatprep.subr.bf16.mxu0 0
    %5820 = vmatpush1.bf16.msra.mxu0 %v4280
    %5821 = vmatprep.subr.bf16.mxu0 0
    %5822 = vmatpush1.bf16.msra.mxu0 %v4279
    %5823 = vmatprep.subr.bf16.mxu0 0
    %5824 = vmatpush2.bf16.msra.mxu0 %v4294
    %5825 = vmatprep.subr.bf16.mxu0 0
    %5826 = vmatpush2.bf16.msra.mxu0 %v4293
    %5827 = vmatprep.subr.bf16.mxu0 0
    %5828 = vmatpush2.bf16.msra.mxu0 %v4292
    %5829 = vmatprep.subr.bf16.mxu0 0
    %5830 = vmatpush2.bf16.msra.mxu0 %v4291
    %5831 = vmatprep.subr.bf16.mxu0 0
    %5832 = vmatpush2.bf16.msra.mxu0 %v4290
    %5833 = vmatprep.subr.bf16.mxu0 0
    %5834 = vmatpush2.bf16.msra.mxu0 %v4289
    %5835 = vmatprep.subr.bf16.mxu0 0
    %5836 = vmatpush2.bf16.msra.mxu0 %v4288
    %5837 = vmatprep.subr.bf16.mxu0 0
    %5838 = vmatpush2.bf16.msra.mxu0 %v4287
    %5839 = vmatprep.mubr.bf16.mxu0 %v848
    %5840 = vmatmul.mubr.bf16.gmra.mxu0 %v847
    %v5841 = vpop.f32.mrf.mxu0
    %v5842 = vadd.f32 %v5802, %v5841
    %v5843 = vpop.f32.mrf.mxu0
    %v5844 = vpop.f32.mrf.mxu0
    %v5845 = vpop.f32.mrf.mxu0
    %5846 = vdwg.mxu0
    %5847 = vmatprep.subr.bf16.mxu0 0
    %5848 = vmatpush1.bf16.msra.mxu0 %v4302
    %5849 = vmatprep.subr.bf16.mxu0 0
    %5850 = vmatpush1.bf16.msra.mxu0 %v4301
    %5851 = vmatprep.subr.bf16.mxu0 0
    %5852 = vmatpush1.bf16.msra.mxu0 %v4300
    %5853 = vmatprep.subr.bf16.mxu0 0
    %5854 = vmatpush1.bf16.msra.mxu0 %v4299
    %5855 = vmatprep.subr.bf16.mxu0 0
    %5856 = vmatpush1.bf16.msra.mxu0 %v4298
    %5857 = vmatprep.subr.bf16.mxu0 0
    %5858 = vmatpush1.bf16.msra.mxu0 %v4297
    %5859 = vmatprep.subr.bf16.mxu0 0
    %5860 = vmatpush1.bf16.msra.mxu0 %v4296
    %5861 = vmatprep.subr.bf16.mxu0 0
    %5862 = vmatpush1.bf16.msra.mxu0 %v4295
    %5863 = vmatprep.subr.bf16.mxu0 0
    %5864 = vmatpush2.bf16.msra.mxu0 %v4310
    %5865 = vmatprep.subr.bf16.mxu0 0
    %5866 = vmatpush2.bf16.msra.mxu0 %v4309
    %5867 = vmatprep.subr.bf16.mxu0 0
    %5868 = vmatpush2.bf16.msra.mxu0 %v4308
    %5869 = vmatprep.subr.bf16.mxu0 0
    %5870 = vmatpush2.bf16.msra.mxu0 %v4307
    %5871 = vmatprep.subr.bf16.mxu0 0
    %5872 = vmatpush2.bf16.msra.mxu0 %v4306
    %5873 = vmatprep.subr.bf16.mxu0 0
    %5874 = vmatpush2.bf16.msra.mxu0 %v4305
    %5875 = vmatprep.subr.bf16.mxu0 0
    %5876 = vmatpush2.bf16.msra.mxu0 %v4304
    %5877 = vmatprep.subr.bf16.mxu0 0
    %5878 = vmatpush2.bf16.msra.mxu0 %v4303
    %5879 = vmatprep.mubr.bf16.mxu0 %v850
    %5880 = vmatmul.mubr.bf16.gmra.mxu0 %v849
    %v5881 = vpop.f32.mrf.mxu0
    %v5882 = vadd.f32 %v5842, %v5881
    %v5883 = vpop.f32.mrf.mxu0
    %v5884 = vpop.f32.mrf.mxu0
    %v5885 = vpop.f32.mrf.mxu0
    %5886 = vdwg.mxu0
    %5887 = vmatprep.subr.bf16.mxu0 0
    %5888 = vmatpush1.bf16.msra.mxu0 %v4318
    %5889 = vmatprep.subr.bf16.mxu0 0
    %5890 = vmatpush1.bf16.msra.mxu0 %v4317
    %5891 = vmatprep.subr.bf16.mxu0 0
    %5892 = vmatpush1.bf16.msra.mxu0 %v4316
    %5893 = vmatprep.subr.bf16.mxu0 0
    %5894 = vmatpush1.bf16.msra.mxu0 %v4315
    %5895 = vmatprep.subr.bf16.mxu0 0
    %5896 = vmatpush1.bf16.msra.mxu0 %v4314
    %5897 = vmatprep.subr.bf16.mxu0 0
    %5898 = vmatpush1.bf16.msra.mxu0 %v4313
    %5899 = vmatprep.subr.bf16.mxu0 0
    %5900 = vmatpush1.bf16.msra.mxu0 %v4312
    %5901 = vmatprep.subr.bf16.mxu0 0
    %5902 = vmatpush1.bf16.msra.mxu0 %v4311
    %5903 = vmatprep.subr.bf16.mxu0 0
    %5904 = vmatpush2.bf16.msra.mxu0 %v4326
    %5905 = vmatprep.subr.bf16.mxu0 0
    %5906 = vmatpush2.bf16.msra.mxu0 %v4325
    %5907 = vmatprep.subr.bf16.mxu0 0
    %5908 = vmatpush2.bf16.msra.mxu0 %v4324
    %5909 = vmatprep.subr.bf16.mxu0 0
    %5910 = vmatpush2.bf16.msra.mxu0 %v4323
    %5911 = vmatprep.subr.bf16.mxu0 0
    %5912 = vmatpush2.bf16.msra.mxu0 %v4322
    %5913 = vmatprep.subr.bf16.mxu0 0
    %5914 = vmatpush2.bf16.msra.mxu0 %v4321
    %5915 = vmatprep.subr.bf16.mxu0 0
    %5916 = vmatpush2.bf16.msra.mxu0 %v4320
    %5917 = vmatprep.subr.bf16.mxu0 0
    %5918 = vmatpush2.bf16.msra.mxu0 %v4319
    %5919 = vmatprep.mubr.bf16.mxu0 %v852
    %5920 = vmatmul.mubr.bf16.gmra.mxu0 %v851
    %v5921 = vpop.f32.mrf.mxu0
    %v5922 = vadd.f32 %v5882, %v5921
    %v5923 = vpop.f32.mrf.mxu0
    %v5924 = vpop.f32.mrf.mxu0
    %v5925 = vpop.f32.mrf.mxu0
    %5926 = vdwg.mxu0
    %5927 = vmatprep.subr.bf16.mxu0 0
    %5928 = vmatpush1.bf16.msra.mxu0 %v4334
    %5929 = vmatprep.subr.bf16.mxu0 0
    %5930 = vmatpush1.bf16.msra.mxu0 %v4333
    %5931 = vmatprep.subr.bf16.mxu0 0
    %5932 = vmatpush1.bf16.msra.mxu0 %v4332
    %5933 = vmatprep.subr.bf16.mxu0 0
    %5934 = vmatpush1.bf16.msra.mxu0 %v4331
    %5935 = vmatprep.subr.bf16.mxu0 0
    %5936 = vmatpush1.bf16.msra.mxu0 %v4330
    %5937 = vmatprep.subr.bf16.mxu0 0
    %5938 = vmatpush1.bf16.msra.mxu0 %v4329
    %5939 = vmatprep.subr.bf16.mxu0 0
    %5940 = vmatpush1.bf16.msra.mxu0 %v4328
    %5941 = vmatprep.subr.bf16.mxu0 0
    %5942 = vmatpush1.bf16.msra.mxu0 %v4327
    %5943 = vmatprep.subr.bf16.mxu0 0
    %5944 = vmatpush2.bf16.msra.mxu0 %v4342
    %5945 = vmatprep.subr.bf16.mxu0 0
    %5946 = vmatpush2.bf16.msra.mxu0 %v4341
    %5947 = vmatprep.subr.bf16.mxu0 0
    %5948 = vmatpush2.bf16.msra.mxu0 %v4340
    %5949 = vmatprep.subr.bf16.mxu0 0
    %5950 = vmatpush2.bf16.msra.mxu0 %v4339
    %5951 = vmatprep.subr.bf16.mxu0 0
    %5952 = vmatpush2.bf16.msra.mxu0 %v4338
    %5953 = vmatprep.subr.bf16.mxu0 0
    %5954 = vmatpush2.bf16.msra.mxu0 %v4337
    %5955 = vmatprep.subr.bf16.mxu0 0
    %5956 = vmatpush2.bf16.msra.mxu0 %v4336
    %5957 = vmatprep.subr.bf16.mxu0 0
    %5958 = vmatpush2.bf16.msra.mxu0 %v4335
    %5959 = vmatprep.mubr.bf16.mxu0 %v854
    %5960 = vmatmul.mubr.bf16.gmra.mxu0 %v853
    %v5961 = vpop.f32.mrf.mxu0
    %v5962 = vadd.f32 %v5922, %v5961
    %v5963 = vpop.f32.mrf.mxu0
    %v5964 = vpop.f32.mrf.mxu0
    %v5965 = vpop.f32.mrf.mxu0
    %5966 = vdwg.mxu0
    %5967 = vmatprep.subr.bf16.mxu0 0
    %5968 = vmatpush1.bf16.msra.mxu0 %v4350
    %5969 = vmatprep.subr.bf16.mxu0 0
    %5970 = vmatpush1.bf16.msra.mxu0 %v4349
    %5971 = vmatprep.subr.bf16.mxu0 0
    %5972 = vmatpush1.bf16.msra.mxu0 %v4348
    %5973 = vmatprep.subr.bf16.mxu0 0
    %5974 = vmatpush1.bf16.msra.mxu0 %v4347
    %5975 = vmatprep.subr.bf16.mxu0 0
    %5976 = vmatpush1.bf16.msra.mxu0 %v4346
    %5977 = vmatprep.subr.bf16.mxu0 0
    %5978 = vmatpush1.bf16.msra.mxu0 %v4345
    %5979 = vmatprep.subr.bf16.mxu0 0
    %5980 = vmatpush1.bf16.msra.mxu0 %v4344
    %5981 = vmatprep.subr.bf16.mxu0 0
    %5982 = vmatpush1.bf16.msra.mxu0 %v4343
    %5983 = vmatprep.subr.bf16.mxu0 0
    %5984 = vmatpush2.bf16.msra.mxu0 %v4358
    %5985 = vmatprep.subr.bf16.mxu0 0
    %5986 = vmatpush2.bf16.msra.mxu0 %v4357
    %5987 = vmatprep.subr.bf16.mxu0 0
    %5988 = vmatpush2.bf16.msra.mxu0 %v4356
    %5989 = vmatprep.subr.bf16.mxu0 0
    %5990 = vmatpush2.bf16.msra.mxu0 %v4355
    %5991 = vmatprep.subr.bf16.mxu0 0
    %5992 = vmatpush2.bf16.msra.mxu0 %v4354
    %5993 = vmatprep.subr.bf16.mxu0 0
    %5994 = vmatpush2.bf16.msra.mxu0 %v4353
    %5995 = vmatprep.subr.bf16.mxu0 0
    %5996 = vmatpush2.bf16.msra.mxu0 %v4352
    %5997 = vmatprep.subr.bf16.mxu0 0
    %5998 = vmatpush2.bf16.msra.mxu0 %v4351
    %5999 = vmatprep.mubr.bf16.mxu0 %v856
    %6000 = vmatmul.mubr.bf16.gmra.mxu0 %v855
    %v6001 = vpop.f32.mrf.mxu0
    %v6002 = vadd.f32 %v5962, %v6001
    %v6003 = vpop.f32.mrf.mxu0
    %v6004 = vpop.f32.mrf.mxu0
    %v6005 = vpop.f32.mrf.mxu0
    %6006 = vdwg.mxu0
    %6007 = vmatprep.subr.bf16.mxu0 0
    %6008 = vmatpush1.bf16.msra.mxu0 %v4366
    %6009 = vmatprep.subr.bf16.mxu0 0
    %6010 = vmatpush1.bf16.msra.mxu0 %v4365
    %6011 = vmatprep.subr.bf16.mxu0 0
    %6012 = vmatpush1.bf16.msra.mxu0 %v4364
    %6013 = vmatprep.subr.bf16.mxu0 0
    %6014 = vmatpush1.bf16.msra.mxu0 %v4363
    %6015 = vmatprep.subr.bf16.mxu0 0
    %6016 = vmatpush1.bf16.msra.mxu0 %v4362
    %6017 = vmatprep.subr.bf16.mxu0 0
    %6018 = vmatpush1.bf16.msra.mxu0 %v4361
    %6019 = vmatprep.subr.bf16.mxu0 0
    %6020 = vmatpush1.bf16.msra.mxu0 %v4360
    %6021 = vmatprep.subr.bf16.mxu0 0
    %6022 = vmatpush1.bf16.msra.mxu0 %v4359
    %6023 = vmatprep.subr.bf16.mxu0 0
    %6024 = vmatpush2.bf16.msra.mxu0 %v4374
    %6025 = vmatprep.subr.bf16.mxu0 0
    %6026 = vmatpush2.bf16.msra.mxu0 %v4373
    %6027 = vmatprep.subr.bf16.mxu0 0
    %6028 = vmatpush2.bf16.msra.mxu0 %v4372
    %6029 = vmatprep.subr.bf16.mxu0 0
    %6030 = vmatpush2.bf16.msra.mxu0 %v4371
    %6031 = vmatprep.subr.bf16.mxu0 0
    %6032 = vmatpush2.bf16.msra.mxu0 %v4370
    %6033 = vmatprep.subr.bf16.mxu0 0
    %6034 = vmatpush2.bf16.msra.mxu0 %v4369
    %6035 = vmatprep.subr.bf16.mxu0 0
    %6036 = vmatpush2.bf16.msra.mxu0 %v4368
    %6037 = vmatprep.subr.bf16.mxu0 0
    %6038 = vmatpush2.bf16.msra.mxu0 %v4367
    %6039 = vmatprep.mubr.bf16.mxu0 %v858
    %6040 = vmatmul.mubr.bf16.gmra.mxu0 %v857
    %v6041 = vpop.f32.mrf.mxu0
    %v6042 = vadd.f32 %v6002, %v6041
    %v6043 = vpop.f32.mrf.mxu0
    %v6044 = vpop.f32.mrf.mxu0
    %v6045 = vpop.f32.mrf.mxu0
    %6046 = vdwg.mxu0
    %6047 = vmatprep.subr.bf16.mxu0 0
    %6048 = vmatpush1.bf16.msra.mxu0 %v4382
    %6049 = vmatprep.subr.bf16.mxu0 0
    %6050 = vmatpush1.bf16.msra.mxu0 %v4381
    %6051 = vmatprep.subr.bf16.mxu0 0
    %6052 = vmatpush1.bf16.msra.mxu0 %v4380
    %6053 = vmatprep.subr.bf16.mxu0 0
    %6054 = vmatpush1.bf16.msra.mxu0 %v4379
    %6055 = vmatprep.subr.bf16.mxu0 0
    %6056 = vmatpush1.bf16.msra.mxu0 %v4378
    %6057 = vmatprep.subr.bf16.mxu0 0
    %6058 = vmatpush1.bf16.msra.mxu0 %v4377
    %6059 = vmatprep.subr.bf16.mxu0 0
    %6060 = vmatpush1.bf16.msra.mxu0 %v4376
    %6061 = vmatprep.subr.bf16.mxu0 0
    %6062 = vmatpush1.bf16.msra.mxu0 %v4375
    %6063 = vmatprep.subr.bf16.mxu0 0
    %6064 = vmatpush2.bf16.msra.mxu0 %v4390
    %6065 = vmatprep.subr.bf16.mxu0 0
    %6066 = vmatpush2.bf16.msra.mxu0 %v4389
    %6067 = vmatprep.subr.bf16.mxu0 0
    %6068 = vmatpush2.bf16.msra.mxu0 %v4388
    %6069 = vmatprep.subr.bf16.mxu0 0
    %6070 = vmatpush2.bf16.msra.mxu0 %v4387
    %6071 = vmatprep.subr.bf16.mxu0 0
    %6072 = vmatpush2.bf16.msra.mxu0 %v4386
    %6073 = vmatprep.subr.bf16.mxu0 0
    %6074 = vmatpush2.bf16.msra.mxu0 %v4385
    %6075 = vmatprep.subr.bf16.mxu0 0
    %6076 = vmatpush2.bf16.msra.mxu0 %v4384
    %6077 = vmatprep.subr.bf16.mxu0 0
    %6078 = vmatpush2.bf16.msra.mxu0 %v4383
    %6079 = vmatprep.mubr.bf16.mxu0 %v860
    %6080 = vmatmul.mubr.bf16.gmra.mxu0 %v859
    %v6081 = vpop.f32.mrf.mxu0
    %v6082 = vadd.f32 %v6042, %v6081
    %v6083 = vpop.f32.mrf.mxu0
    %v6084 = vpop.f32.mrf.mxu0
    %v6085 = vpop.f32.mrf.mxu0
    %6086 = vdwg.mxu0
    %6087 = vmatprep.subr.bf16.mxu0 0
    %6088 = vmatpush1.bf16.msra.mxu0 %v4398
    %6089 = vmatprep.subr.bf16.mxu0 0
    %6090 = vmatpush1.bf16.msra.mxu0 %v4397
    %6091 = vmatprep.subr.bf16.mxu0 0
    %6092 = vmatpush1.bf16.msra.mxu0 %v4396
    %6093 = vmatprep.subr.bf16.mxu0 0
    %6094 = vmatpush1.bf16.msra.mxu0 %v4395
    %6095 = vmatprep.subr.bf16.mxu0 0
    %6096 = vmatpush1.bf16.msra.mxu0 %v4394
    %6097 = vmatprep.subr.bf16.mxu0 0
    %6098 = vmatpush1.bf16.msra.mxu0 %v4393
    %6099 = vmatprep.subr.bf16.mxu0 0
    %6100 = vmatpush1.bf16.msra.mxu0 %v4392
    %6101 = vmatprep.subr.bf16.mxu0 0
    %6102 = vmatpush1.bf16.msra.mxu0 %v4391
    %6103 = vmatprep.subr.bf16.mxu0 0
    %6104 = vmatpush2.bf16.msra.mxu0 %v4406
    %6105 = vmatprep.subr.bf16.mxu0 0
    %6106 = vmatpush2.bf16.msra.mxu0 %v4405
    %6107 = vmatprep.subr.bf16.mxu0 0
    %6108 = vmatpush2.bf16.msra.mxu0 %v4404
    %6109 = vmatprep.subr.bf16.mxu0 0
    %6110 = vmatpush2.bf16.msra.mxu0 %v4403
    %6111 = vmatprep.subr.bf16.mxu0 0
    %6112 = vmatpush2.bf16.msra.mxu0 %v4402
    %6113 = vmatprep.subr.bf16.mxu0 0
    %6114 = vmatpush2.bf16.msra.mxu0 %v4401
    %6115 = vmatprep.subr.bf16.mxu0 0
    %6116 = vmatpush2.bf16.msra.mxu0 %v4400
    %6117 = vmatprep.subr.bf16.mxu0 0
    %6118 = vmatpush2.bf16.msra.mxu0 %v4399
    %6119 = vmatprep.mubr.bf16.mxu0 %v862
    %6120 = vmatmul.mubr.bf16.gmra.mxu0 %v861
    %v6121 = vpop.f32.mrf.mxu0
    %v6122 = vadd.f32 %v6082, %v6121
    %v6123 = vpop.f32.mrf.mxu0
    %v6124 = vpop.f32.mrf.mxu0
    %v6125 = vpop.f32.mrf.mxu0
    %6126 = vdwg.mxu0
    %6127 = vmatprep.subr.bf16.mxu0 0
    %6128 = vmatpush1.bf16.msra.mxu0 %v4414
    %6129 = vmatprep.subr.bf16.mxu0 0
    %6130 = vmatpush1.bf16.msra.mxu0 %v4413
    %6131 = vmatprep.subr.bf16.mxu0 0
    %6132 = vmatpush1.bf16.msra.mxu0 %v4412
    %6133 = vmatprep.subr.bf16.mxu0 0
    %6134 = vmatpush1.bf16.msra.mxu0 %v4411
    %6135 = vmatprep.subr.bf16.mxu0 0
    %6136 = vmatpush1.bf16.msra.mxu0 %v4410
    %6137 = vmatprep.subr.bf16.mxu0 0
    %6138 = vmatpush1.bf16.msra.mxu0 %v4409
    %6139 = vmatprep.subr.bf16.mxu0 0
    %6140 = vmatpush1.bf16.msra.mxu0 %v4408
    %6141 = vmatprep.subr.bf16.mxu0 0
    %6142 = vmatpush1.bf16.msra.mxu0 %v4407
    %6143 = vmatprep.subr.bf16.mxu0 0
    %6144 = vmatpush2.bf16.msra.mxu0 %v4422
    %6145 = vmatprep.subr.bf16.mxu0 0
    %6146 = vmatpush2.bf16.msra.mxu0 %v4421
    %6147 = vmatprep.subr.bf16.mxu0 0
    %6148 = vmatpush2.bf16.msra.mxu0 %v4420
    %6149 = vmatprep.subr.bf16.mxu0 0
    %6150 = vmatpush2.bf16.msra.mxu0 %v4419
    %6151 = vmatprep.subr.bf16.mxu0 0
    %6152 = vmatpush2.bf16.msra.mxu0 %v4418
    %6153 = vmatprep.subr.bf16.mxu0 0
    %6154 = vmatpush2.bf16.msra.mxu0 %v4417
    %6155 = vmatprep.subr.bf16.mxu0 0
    %6156 = vmatpush2.bf16.msra.mxu0 %v4416
    %6157 = vmatprep.subr.bf16.mxu0 0
    %6158 = vmatpush2.bf16.msra.mxu0 %v4415
    %6159 = vmatprep.mubr.bf16.mxu0 %v864
    %6160 = vmatmul.mubr.bf16.gmra.mxu0 %v863
    %v6161 = vpop.f32.mrf.mxu0
    %v6162 = vadd.f32 %v6122, %v6161
    %v6163 = vpop.f32.mrf.mxu0
    %v6164 = vpop.f32.mrf.mxu0
    %v6165 = vpop.f32.mrf.mxu0
    %6166 = vdwg.mxu0
    %6167 = vmatprep.subr.bf16.mxu0 0
    %6168 = vmatpush1.bf16.msra.mxu0 %v4430
    %6169 = vmatprep.subr.bf16.mxu0 0
    %6170 = vmatpush1.bf16.msra.mxu0 %v4429
    %6171 = vmatprep.subr.bf16.mxu0 0
    %6172 = vmatpush1.bf16.msra.mxu0 %v4428
    %6173 = vmatprep.subr.bf16.mxu0 0
    %6174 = vmatpush1.bf16.msra.mxu0 %v4427
    %6175 = vmatprep.subr.bf16.mxu0 0
    %6176 = vmatpush1.bf16.msra.mxu0 %v4426
    %6177 = vmatprep.subr.bf16.mxu0 0
    %6178 = vmatpush1.bf16.msra.mxu0 %v4425
    %6179 = vmatprep.subr.bf16.mxu0 0
    %6180 = vmatpush1.bf16.msra.mxu0 %v4424
    %6181 = vmatprep.subr.bf16.mxu0 0
    %6182 = vmatpush1.bf16.msra.mxu0 %v4423
    %6183 = vmatprep.subr.bf16.mxu0 0
    %6184 = vmatpush2.bf16.msra.mxu0 %v4438
    %6185 = vmatprep.subr.bf16.mxu0 0
    %6186 = vmatpush2.bf16.msra.mxu0 %v4437
    %6187 = vmatprep.subr.bf16.mxu0 0
    %6188 = vmatpush2.bf16.msra.mxu0 %v4436
    %6189 = vmatprep.subr.bf16.mxu0 0
    %6190 = vmatpush2.bf16.msra.mxu0 %v4435
    %6191 = vmatprep.subr.bf16.mxu0 0
    %6192 = vmatpush2.bf16.msra.mxu0 %v4434
    %6193 = vmatprep.subr.bf16.mxu0 0
    %6194 = vmatpush2.bf16.msra.mxu0 %v4433
    %6195 = vmatprep.subr.bf16.mxu0 0
    %6196 = vmatpush2.bf16.msra.mxu0 %v4432
    %6197 = vmatprep.subr.bf16.mxu0 0
    %6198 = vmatpush2.bf16.msra.mxu0 %v4431
    %6199 = vmatprep.mubr.bf16.mxu0 %v866
    %6200 = vmatmul.mubr.bf16.gmra.mxu0 %v865
    %v6201 = vpop.f32.mrf.mxu0
    %v6202 = vadd.f32 %v6162, %v6201
    %v6203 = vpop.f32.mrf.mxu0
    %v6204 = vpop.f32.mrf.mxu0
    %v6205 = vpop.f32.mrf.mxu0
    %6206 = vdwg.mxu0
    %6207 = vmatprep.subr.bf16.mxu0 0
    %6208 = vmatpush1.bf16.msra.mxu0 %v4446
    %6209 = vmatprep.subr.bf16.mxu0 0
    %6210 = vmatpush1.bf16.msra.mxu0 %v4445
    %6211 = vmatprep.subr.bf16.mxu0 0
    %6212 = vmatpush1.bf16.msra.mxu0 %v4444
    %6213 = vmatprep.subr.bf16.mxu0 0
    %6214 = vmatpush1.bf16.msra.mxu0 %v4443
    %6215 = vmatprep.subr.bf16.mxu0 0
    %6216 = vmatpush1.bf16.msra.mxu0 %v4442
    %6217 = vmatprep.subr.bf16.mxu0 0
    %6218 = vmatpush1.bf16.msra.mxu0 %v4441
    %6219 = vmatprep.subr.bf16.mxu0 0
    %6220 = vmatpush1.bf16.msra.mxu0 %v4440
    %6221 = vmatprep.subr.bf16.mxu0 0
    %6222 = vmatpush1.bf16.msra.mxu0 %v4439
    %6223 = vmatprep.subr.bf16.mxu0 0
    %6224 = vmatpush2.bf16.msra.mxu0 %v4454
    %6225 = vmatprep.subr.bf16.mxu0 0
    %6226 = vmatpush2.bf16.msra.mxu0 %v4453
    %6227 = vmatprep.subr.bf16.mxu0 0
    %6228 = vmatpush2.bf16.msra.mxu0 %v4452
    %6229 = vmatprep.subr.bf16.mxu0 0
    %6230 = vmatpush2.bf16.msra.mxu0 %v4451
    %6231 = vmatprep.subr.bf16.mxu0 0
    %6232 = vmatpush2.bf16.msra.mxu0 %v4450
    %6233 = vmatprep.subr.bf16.mxu0 0
    %6234 = vmatpush2.bf16.msra.mxu0 %v4449
    %6235 = vmatprep.subr.bf16.mxu0 0
    %6236 = vmatpush2.bf16.msra.mxu0 %v4448
    %6237 = vmatprep.subr.bf16.mxu0 0
    %6238 = vmatpush2.bf16.msra.mxu0 %v4447
    %6239 = vmatprep.mubr.bf16.mxu0 %v868
    %6240 = vmatmul.mubr.bf16.gmra.mxu0 %v867
    %v6241 = vpop.f32.mrf.mxu0
    %v6242 = vadd.f32 %v6202, %v6241
    %v6243 = vpop.f32.mrf.mxu0
    %v6244 = vpop.f32.mrf.mxu0
    %v6245 = vpop.f32.mrf.mxu0
    %6246 = vdwg.mxu0
    %v6247 = vmax.f32 %v6242, 0.0
    %v6248 = vld [vmem:[%s2] sm:$0xff]
    %v6249 = vld [vmem:[%s2 + $0x8] sm:$0xff]
    %v6250 = vld [vmem:[%s2 + $0x10] sm:$0xff]
    %v6251 = vld [vmem:[%s2 + $0x18] sm:$0xff]
    %v6252 = vld [vmem:[%s2 + $0x20] sm:$0xff]
    %v6253 = vld [vmem:[%s2 + $0x28] sm:$0xff]
    %v6254 = vld [vmem:[%s2 + $0x30] sm:$0xff]
    %v6255 = vld [vmem:[%s2 + $0x38] sm:$0xff]
    %v6256 = vld [vmem:[%s3] sm:$0x1]
    %v6258 = vlaneseq
    %v6259 = vshrl.u32 %v6258, 7
    %v6260 = vsub.s32 0, %v6259
    %v6261 = vrot.slane %v6256, %v6260
    %vm6263 = vcmask 523264
    %v6265 = vsel %vm6263, %v6247, 0
    %6267 = vmatprep.subr.mxu0 0.0
    %6268 = vmatpush1.msra.mxu0 0.0
    %6269 = vmatprep.subr.mxu0 0.0
    %6270 = vmatpush1.msra.mxu0 0.0
    %6271 = vmatprep.subr.mxu0 0.0
    %6272 = vmatpush1.msra.mxu0 0.0
    %6273 = vmatprep.subr.mxu0 0.0
    %6274 = vmatpush1.msra.mxu0 0.0
    %6275 = vmatprep.subr.mxu0 0.0
    %6276 = vmatpush1.msra.mxu0 0.0
    %6277 = vmatprep.subr.mxu0 0.0
    %6278 = vmatpush1.msra.mxu0 0.0
    %6279 = vmatprep.subr.mxu0 0.0
    %6280 = vmatpush1.msra.mxu0 0.0
    %6281 = vmatprep.subr.mxu0 0.0
    %6282 = vmatpush1.msra.mxu0 0.0
    %6283 = vmatprep.subr.mxu0 0.0
    %6284 = vmatpush1.msra.mxu0 %v6255
    %6285 = vmatprep.subr.mxu0 0.0
    %6286 = vmatpush1.msra.mxu0 %v6254
    %6287 = vmatprep.subr.mxu0 0.0
    %6288 = vmatpush1.msra.mxu0 %v6253
    %6289 = vmatprep.subr.mxu0 0.0
    %6290 = vmatpush1.msra.mxu0 %v6252
    %6291 = vmatprep.subr.mxu0 0.0
    %6292 = vmatpush1.msra.mxu0 %v6251
    %6293 = vmatprep.subr.mxu0 0.0
    %6294 = vmatpush1.msra.mxu0 %v6250
    %6295 = vmatprep.subr.mxu0 0.0
    %6296 = vmatpush1.msra.mxu0 %v6249
    %6297 = vmatprep.subr.mxu0 0.0
    %6298 = vmatpush1.msra.mxu0 %v6248
    %6299 = vmatprep.subr.mxu0 0.0
    %6300 = vmatpush2.msra.mxu0 0.0
    %6301 = vmatprep.subr.mxu0 0.0
    %6302 = vmatpush2.msra.mxu0 0.0
    %6303 = vmatprep.subr.mxu0 0.0
    %6304 = vmatpush2.msra.mxu0 0.0
    %6305 = vmatprep.subr.mxu0 0.0
    %6306 = vmatpush2.msra.mxu0 0.0
    %6307 = vmatprep.subr.mxu0 0.0
    %6308 = vmatpush2.msra.mxu0 0.0
    %6309 = vmatprep.subr.mxu0 0.0
    %6310 = vmatpush2.msra.mxu0 0.0
    %6311 = vmatprep.subr.mxu0 0.0
    %6312 = vmatpush2.msra.mxu0 0.0
    %6313 = vmatprep.subr.mxu0 0.0
    %6314 = vmatpush2.msra.mxu0 0.0
    %6315 = vmatprep.subr.mxu0 0.0
    %6316 = vmatpush2.msra.mxu0 0.0
    %6317 = vmatprep.subr.mxu0 0.0
    %6318 = vmatpush2.msra.mxu0 0.0
    %6319 = vmatprep.subr.mxu0 0.0
    %6320 = vmatpush2.msra.mxu0 0.0
    %6321 = vmatprep.subr.mxu0 0.0
    %6322 = vmatpush2.msra.mxu0 0.0
    %6323 = vmatprep.subr.mxu0 0.0
    %6324 = vmatpush2.msra.mxu0 0.0
    %6325 = vmatprep.subr.mxu0 0.0
    %6326 = vmatpush2.msra.mxu0 0.0
    %6327 = vmatprep.subr.mxu0 0.0
    %6328 = vmatpush2.msra.mxu0 0.0
    %6329 = vmatprep.subr.mxu0 0.0
    %6330 = vmatpush2.msra.mxu0 0.0
    %6331 = vmatprep.mubr.f32.mxu0 0.0
    %6332 = vmatmul.mubr.f32.gmra.mxu0 %v6265
    %v6333 = vpop.f32.mrf.mxu0
    %v6334 = vadd.f32 %v6261, %v6333
    %v6335 = vpop.f32.mrf.mxu0
    %6336 = vdwg.mxu0
    %v6337 = vmax.f32 %v6334, 0.0
    %v6338 = vld [vmem:[%s4] sm:$0x1]
    %v6340 = vlaneseq
    %v6341 = vshrl.u32 %v6340, 7
    %v6342 = vsub.s32 0, %v6341
    %v6343 = vrot.slane %v6338, %v6342
    %v6345 = vmul.f32 %v6337, %v6343
    %vm6346 = vcmask 261120
    %v6347 = vsel %vm6346, %v6345, 0.0
    %6348 = vadd.xlane.f32.xlu0 %v6347
    %v6349 = vpop.xlane.xlu0 %6348
    %s6350 = sld [smem:[#allocation2 + $0x1]]
    %v6351 = vstv %s6350
    %v6352 = vadd.f32 %v6349, %v6351
    %v6353 = vtanh.pop %v6352
    %vm6354 = vcmask 7168
    %6355 = vst.msk [vmem:[#allocation4] sm:$0xff] %vm6354, %v6353
    // Predicated region
    $region30: #{tpu_custom_call.1} parent=1 // pred_check
      _
    $region31: #{tpu_custom_call.1} parent=1 // pred_check_branch
      %6357 = sbr.rel (0) target = $region33
    $region32: #{tpu_custom_call.1} parent=1 // pred_region
      // Predicated region
      $region34: #{tpu_custom_call.1} parent=32 // pred_check
        _
      $region35: #{tpu_custom_call.1} parent=32 // pred_check_branch
        %6359 = sbr.rel (0) target = $region37
      $region36: #{tpu_custom_call.1} parent=32 // pred_region
        // Predicated region
        $region38: #{tpu_custom_call.1} parent=36 // pred_check
          _
        $region39: #{tpu_custom_call.1} parent=36 // pred_check_branch
          %6361 = sbr.rel target = $region41
        $region40: #{tpu_custom_call.1} parent=36 // pred_region
          // Predicated region
          $region53: #{tpu_custom_call.1} parent=40 // pred_check
            _
          $region54: #{tpu_custom_call.1} parent=40 // pred_check_branch
            %6377 = sbr.rel (0) target = $region56
          $region55: #{tpu_custom_call.1} parent=40 // pred_region
            %s6379 = ssub.s32 4, 1
            loop: start=0, step=1, limit=1
            $region57: #{tpu_custom_call.1} parent=55 // loop_pre_header
              _
            $region58: #{tpu_custom_call.1} parent=55 // loop_header
              %s6381 = sphi 0, %s6385
              %p6382 = scmp.ge.s32.totalorder %s6381, 1
              %s6386 = sphi [#allocation4], [#allocation4]
              %s6387 = sphi %s6, %s6
            $region59: #{tpu_custom_call.1} parent=55 // loop_header_branch
              %6384 = sbr.rel (%p6382) target = $region63
            $region60: #{tpu_custom_call.1} parent=55 // loop_body
              %v6388 = vld [vmem:[%s6386] sm:%s6379]
              %6389 = vst [vmem:[%s6387] sm:%s6379] %v6388
            $region61: #{tpu_custom_call.1} parent=55 // loop_footer
              %s6385 = sadd.s32 1, %s6381
            $region62: #{tpu_custom_call.1} parent=55 // loop_footer_branch
              %6380 = sbr.rel target = $region58
            $region63: #{tpu_custom_call.1} parent=55 // loop_exit
              _
          $region56: #{tpu_custom_call.1} parent=40 // pred_fallthru
            _
        $region41: #{tpu_custom_call.1} parent=36 // pred_fallthru
          _
        // Predicated region
        $region42: #{tpu_custom_call.1} parent=36 // pred_check
          _
        $region43: #{tpu_custom_call.1} parent=36 // pred_check_branch
          %6363 = sbr.rel (0) target = $region45
        $region44: #{tpu_custom_call.1} parent=36 // pred_region
          %s6365 = ssub.s32 4, 1
          loop: start=0, step=1, limit=1
          $region46: #{tpu_custom_call.1} parent=44 // loop_pre_header
            _
          $region47: #{tpu_custom_call.1} parent=44 // loop_header
            %s6367 = sphi 0, %s6371
            %p6368 = scmp.ge.s32.totalorder %s6367, 1
            %s6372 = sphi [#allocation4], [#allocation4]
            %s6373 = sphi %s6, %s6
          $region48: #{tpu_custom_call.1} parent=44 // loop_header_branch
            %6370 = sbr.rel (%p6368) target = $region52
          $region49: #{tpu_custom_call.1} parent=44 // loop_body
            %v6374 = vld [vmem:[%s6372] sm:%s6365]
            %6375 = vst [vmem:[%s6373] sm:%s6365] %v6374
          $region50: #{tpu_custom_call.1} parent=44 // loop_footer
            %s6371 = sadd.s32 1, %s6367
          $region51: #{tpu_custom_call.1} parent=44 // loop_footer_branch
            %6366 = sbr.rel target = $region47
          $region52: #{tpu_custom_call.1} parent=44 // loop_exit
            _
        $region45: #{tpu_custom_call.1} parent=36 // pred_fallthru
          _
      $region37: #{tpu_custom_call.1} parent=32 // pred_fallthru
        _
      %6390 = vnop
    $region33: #{tpu_custom_call.1} parent=1 // pred_fallthru
      _
    // Predicated region
    $region64: #{tpu_custom_call.1} parent=1 // pred_check
      _
    $region65: #{tpu_custom_call.1} parent=1 // pred_check_branch
      %6392 = sbr.rel (0) target = $region67
    $region66: #{tpu_custom_call.1} parent=1 // pred_region
      _
    $region67: #{tpu_custom_call.1} parent=1 // pred_fallthru
      _
    %6393 = vsyncpa [#allocation3], 1

</llo_original>
